<compile_context>
chip_gen: v5e
topology: v5e:2x2
jax: 0.10.0
libtpu: 0.0.40
codegen_flags: <defaults>
</compile_context>

<pallas_src>
import functools

import numpy as np

import jax
import jax.numpy as jnp
from jax.experimental import pallas as pl
from jax.experimental.pallas import tpu as pltpu


# ---------------------------------------------------------------------------
# Static (numpy) conv geometry helpers — become compile-time constants
# ---------------------------------------------------------------------------
def _conv_out(size, k, stride, pad_lo, pad_hi):
    return (size + pad_lo + pad_hi - k) // stride + 1


def _row_select(k, stride, pad_lo, h_in, h_out, batch):
    """(k, batch*h_out, batch*h_in) block-diagonal 0/1 row-gather matrices.

    sel[di] @ act picks input row  stride*ho + di - pad_lo  for every output
    row ho (a zero row when the tap falls into the padding region)."""
    sel = np.zeros((k, batch * h_out, batch * h_in), np.float32)
    for di in range(k):
        for b in range(batch):
            for ho in range(h_out):
                h = stride * ho + di - pad_lo
                if 0 <= h < h_in:
                    sel[di, b * h_out + ho, b * h_in + h] = 1.0
    return sel


def _col_select(k, stride, pad_lo, w_in, w_out):
    """(k, w_out, w_in) 0/1 column-gather matrices (one per kernel column)."""
    sel = np.zeros((k, w_out, w_in), np.float32)
    for dj in range(k):
        for wo in range(w_out):
            w = stride * wo + dj - pad_lo
            if 0 <= w < w_in:
                sel[dj, wo, w] = 1.0
    return sel


# ---------------------------------------------------------------------------
# The single fused kernel
# ---------------------------------------------------------------------------
def _disc_kernel(*refs, cfgs, batch, negative_slope, eps):
    """Whole-network forward.

    Activations are 2-D f32 values shaped (batch*H, W*C).  Convs are per-tap
    selection matmuls on the MXU (bf16 operands, f32 accumulation); BatchNorm
    and activations run in f32."""
    out_ref = refs[-1]
    in_refs = refs[:-1]
    idx = 0

    a = in_refs[idx][...].astype(jnp.float32)            # (batch*H0, W0*C0)
    idx += 1

    # ------------------------------ conv stack ------------------------------
    for cfg in cfgs:
        rs_ref = in_refs[idx]; idx += 1                  # (kh, bHo, bHi)  bf16
        m_ref = in_refs[idx]; idx += 1                   # (kh, WiCi, WoCo) bf16
        bias_ref = gamma_ref = beta_ref = None
        if cfg["has_bias"]:
            bias_ref = in_refs[idx]; idx += 1            # (1, Wo*Co) f32
        if cfg["has_bn"]:
            gamma_ref = in_refs[idx]; idx += 1           # (1, Co) f32
            beta_ref = in_refs[idx]; idx += 1            # (1, Co) f32

        a_bf = a.astype(jnp.bfloat16)
        acc = None
        for di in range(cfg["kh"]):
            # gather the input rows hit by kernel-row tap `di` (stride+padding)
            p = jnp.dot(rs_ref[di], a_bf,
                        preferred_element_type=jnp.float32)      # (bHo, WiCi)
            # apply column taps + conv weights for this row tap
            t = jnp.dot(p.astype(jnp.bfloat16), m_ref[di],
                        preferred_element_type=jnp.float32)      # (bHo, WoCo)
            acc = t if acc is None else acc + t

        if bias_ref is not None:
            acc = acc + bias_ref[...]

        if cfg["has_bn"]:
            # training-mode BatchNorm2d: batch stats over (N, H, W), biased var
            co, wo, ho = cfg["co"], cfg["wo"], cfg["ho"]
            wc = wo * co
            # per-channel gather / scatter matrices built from 2-D iota
            # (Co is a power of two, so "col % Co" is "col & (Co-1)")
            r = jax.lax.broadcasted_iota(jnp.int32, (wc, co), 0)
            c = jax.lax.broadcasted_iota(jnp.int32, (wc, co), 1)
            gather = jnp.where((r & (co - 1)) == c, 1.0, 0.0).astype(jnp.float32)
            rt = jax.lax.broadcasted_iota(jnp.int32, (co, wc), 0)
            ct = jax.lax.broadcasted_iota(jnp.int32, (co, wc), 1)
            scatter = jnp.where((ct & (co - 1)) == rt, 1.0, 0.0).astype(jnp.float32)

            cnt = float(batch * ho * wo)
            tot = jnp.sum(acc, axis=0, keepdims=True)            # (1, wc)
            totsq = jnp.sum(acc * acc, axis=0, keepdims=True)    # (1, wc)
            mean = jnp.dot(tot, gather, preferred_element_type=jnp.float32) / cnt
            ex2 = jnp.dot(totsq, gather, preferred_element_type=jnp.float32) / cnt
            var = jnp.maximum(ex2 - mean * mean, 0.0)            # biased
            scale = gamma_ref[...] * jax.lax.rsqrt(var + eps)    # (1, co)
            shift = beta_ref[...] - mean * scale                 # (1, co)
            acc = (acc * jnp.dot(scale, scatter, preferred_element_type=jnp.float32)
                   + jnp.dot(shift, scatter, preferred_element_type=jnp.float32))

        if cfg["act"] == "leaky":
            acc = jnp.where(acc >= 0, acc, negative_slope * acc)
        elif cfg["act"] == "sigmoid":
            acc = jax.nn.sigmoid(acc)
        a = acc

    # --------------- linear head: Linear(flat->1024)+Tanh, Linear(1024->1)+Sigmoid
    w0_ref = in_refs[idx]
    b0_ref = in_refs[idx + 1]
    w1_ref = in_refs[idx + 2]
    b1_ref = in_refs[idx + 3]
    last = cfgs[-1]
    h_l = last["ho"]
    wc_l = last["wo"] * last["co"]
    w0 = w0_ref[...]                                             # (h_l*wc_l, 1024)
    for b in range(batch):
        h0 = None
        for rrow in range(h_l):      # flatten(1) == (h, w) order since Co == 1
            row = a[b * h_l + rrow: b * h_l + rrow + 1, :]       # (1, wc_l)
            blk = w0[rrow * wc_l:(rrow + 1) * wc_l, :]           # (wc_l, 1024)
            t = jnp.dot(row, blk, preferred_element_type=jnp.float32)
            h0 = t if h0 is None else h0 + t
        h0 = jnp.tanh(h0 + b0_ref[...])                          # (1, 1024)
        h1 = jnp.dot(h0, w1_ref[...],
                     preferred_element_type=jnp.float32) + b1_ref[...]
        out_ref[b:b + 1, :] = jax.nn.sigmoid(h1).astype(out_ref.dtype)


# ---------------------------------------------------------------------------
# JAX wrapper: weight preprocessing + one pallas_call
# ---------------------------------------------------------------------------
def discriminator_forward(params, x_nchw, n_layers=3, negative_slope=0.2,
                          eps=1e-5):
    n, cin, h, w = x_nchw.shape

    # NCHW -> NHWC -> (batch*H, W*C): the 2-D layout every conv layer keeps.
    x2d = jnp.transpose(x_nchw, (0, 2, 3, 1)).reshape(n * h, w * cin)
    x2d = x2d.astype(jnp.float32)

    # (weight key, bias key, bn prefix, stride, (pad_lo, pad_hi), activation)
    conv_defs = [("conv0_w", "conv0_b", None, 2, (1, 1), "leaky")]
    for i in range(n_layers):
        conv_defs.append((f"conv{i + 1}_w", None, f"bn{i + 1}", 2, (1, 1),
                          "leaky"))
    # PyTorch padding='same' with k=4 pads (1, 2) per spatial dim.
    conv_defs.append(("conv4_w", None, "bn4", 1, (1, 2), "leaky"))
    conv_defs.append(("conv5_w", "conv5_b", None, 1, (1, 2), "sigmoid"))

    inputs = [x2d]
    cfgs = []
    hi, wi, ci = h, w, cin
    for wk, bk, bnk, stride, (plo, phi), act in conv_defs:
        w_oihw = params[wk]
        co, ci_w, kh, kw = w_oihw.shape
        assert ci_w == ci
        ho = _conv_out(hi, kh, stride, plo, phi)
        wo = _conv_out(wi, kw, stride, plo, phi)

        rowsel = _row_select(kh, stride, plo, hi, ho, n)
        colsel = _col_select(kw, stride, plo, wi, wo)
        # Fold the column taps + weights into one matmul operand per row tap:
        #   m[di, w*Ci+ci, wo*Co+co] = sum_dj colsel[dj, wo, w] * W[di, dj, ci, co]
        wt = jnp.transpose(w_oihw, (2, 3, 1, 0)).astype(jnp.float32)
        m = jnp.einsum("jow,ijcd->iwcod", jnp.asarray(colsel), wt)
        m = m.reshape(kh, wi * ci, wo * co).astype(jnp.bfloat16)

        inputs.append(jnp.asarray(rowsel, jnp.bfloat16))
        inputs.append(m)
        has_bias = bk is not None
        has_bn = bnk is not None
        if has_bias:     # bias pre-tiled to the (wo, co) column layout
            inputs.append(jnp.tile(params[bk].astype(jnp.float32),
                                   wo).reshape(1, wo * co))
        if has_bn:
            assert co & (co - 1) == 0   # in-kernel channel gather uses & (Co-1)
            inputs.append(params[f"{bnk}_g"].reshape(1, co).astype(jnp.float32))
            inputs.append(params[f"{bnk}_b"].reshape(1, co).astype(jnp.float32))
        cfgs.append(dict(kh=kh, ho=ho, wo=wo, co=co, has_bias=has_bias,
                         has_bn=has_bn, act=act))
        hi, wi, ci = ho, wo, co

    # Linear head (kept f32: ~8 KFLOPs, and K=1024 dot precision matters).
    inputs.append(params["lin0_w"].astype(jnp.float32))          # (flat, 1024)
    inputs.append(params["lin0_b"].reshape(1, -1).astype(jnp.float32))
    inputs.append(params["lin1_w"].astype(jnp.float32))          # (1024, 1)
    inputs.append(params["lin1_b"].reshape(1, -1).astype(jnp.float32))

    kernel = functools.partial(_disc_kernel, cfgs=tuple(cfgs), batch=n,
                               negative_slope=negative_slope, eps=eps)

    in_specs = [pl.BlockSpec(arr.shape, (lambda i, nd=arr.ndim: (0,) * nd))
                for arr in inputs]
    out_specs = pl.BlockSpec((n, 1), lambda i: (0, 0))

    # The whole network (weights + activations < 2 MiB) runs as ONE
    # pallas_call: every intermediate stays in VMEM, only the final (N, 1)
    # result is stored to HBM.  Training-mode BatchNorm couples the (tiny)
    # batch, so there is no useful parallel grid axis to shard across a
    # second TensorCore on v7x here.
    return pl.pallas_call(
        kernel,
        out_shape=jax.ShapeDtypeStruct((n, 1), jnp.float32),
        grid=(1,),
        in_specs=in_specs,
        out_specs=out_specs,
        compiler_params=pltpu.CompilerParams(
            dimension_semantics=("arbitrary",)),
    )(*inputs)


# ---------------------------------------------------------------------------
# Parameters (PyTorch-equivalent shapes) and a pure-JAX reference
# ---------------------------------------------------------------------------
def make_params(key, ndf=8, n_layers=3, in_spatial=32):
    ks = jax.random.split(key, 16)
    p = {}

    def nrm(k, shape, scale=0.1):
        return scale * jax.random.normal(k, shape, jnp.float32)

    p["conv0_w"] = nrm(ks[0], (ndf, 3, 4, 4))
    p["conv0_b"] = nrm(ks[1], (ndf,))
    cin = ndf
    for i in range(n_layers):
        mult = min(2 ** (i + 1), 8)
        cout = ndf * mult
        p[f"conv{i+1}_w"] = nrm(ks[2 + i], (cout, cin, 4, 4))
        p[f"bn{i+1}_g"] = jnp.ones((cout,), jnp.float32)
        p[f"bn{i+1}_b"] = jnp.zeros((cout,), jnp.float32)
        cin = cout
    mult = min(2 ** n_layers, 8)
    c8 = ndf * mult
    p["conv4_w"] = nrm(ks[6], (c8, c8, 4, 4))
    p["bn4_g"] = jnp.ones((c8,), jnp.float32)
    p["bn4_b"] = jnp.zeros((c8,), jnp.float32)
    p["conv5_w"] = nrm(ks[7], (1, c8, 4, 4))
    p["conv5_b"] = nrm(ks[8], (1,))
    flat = 1 * (in_spatial // (2 ** (n_layers + 1))) ** 2
    p["lin0_w"] = nrm(ks[9], (flat, 1024))
    p["lin0_b"] = nrm(ks[10], (1024,))
    p["lin1_w"] = nrm(ks[11], (1024, 1))
    p["lin1_b"] = nrm(ks[12], (1,))
    return p


def _reference_forward(params, x_nchw, n_layers=3, negative_slope=0.2,
                       eps=1e-5):
    """Pure-JAX (XLA) reference used only to validate the fused kernel."""
    x = jnp.transpose(x_nchw, (0, 2, 3, 1)).astype(jnp.float32)   # NHWC

    def conv(x, w_oihw, stride, pad):
        w = jnp.transpose(w_oihw, (2, 3, 1, 0))                   # HWIO
        return jax.lax.conv_general_dilated(
            x, w, (stride, stride), [pad, pad],
            dimension_numbers=("NHWC", "HWIO", "NHWC"))

    def bn(x, g, b):
        mean = jnp.mean(x, axis=(0, 1, 2), keepdims=True)
        var = jnp.mean(jnp.square(x - mean), axis=(0, 1, 2), keepdims=True)
        return (x - mean) * jax.lax.rsqrt(var + eps) * g + b

    def lrelu(x):
        return jnp.where(x >= 0, x, negative_slope * x)

    x = lrelu(conv(x, params["conv0_w"], 2, (1, 1)) + params["conv0_b"])
    for i in range(n_layers):
        x = lrelu(bn(conv(x, params[f"conv{i+1}_w"], 2, (1, 1)),
                     params[f"bn{i+1}_g"], params[f"bn{i+1}_b"]))
    x = lrelu(bn(conv(x, params["conv4_w"], 1, (1, 2)),
                 params["bn4_g"], params["bn4_b"]))
    x = jax.nn.sigmoid(conv(x, params["conv5_w"], 1, (1, 2))
                       + params["conv5_b"])
    n = x.shape[0]
    x = x.reshape(n, -1)            # C==1 -> NHWC flatten matches NCHW flatten
    x = jnp.tanh(x @ params["lin0_w"] + params["lin0_b"])
    x = jax.nn.sigmoid(x @ params["lin1_w"] + params["lin1_b"])
    return x


if __name__ == "__main__":
    key = jax.random.PRNGKey(0)
    k_in, k_par = jax.random.split(key)

    N, C, S = 2, 3, 32          # batch=2, RGB input, 32x32 (module implies C=3)
    ndf = 8
    x = jax.random.normal(k_in, (N, C, S, S), jnp.float32)        # NCHW
    params = make_params(k_par, ndf=ndf, n_layers=3, in_spatial=S)

    fwd = jax.jit(functools.partial(discriminator_forward, n_layers=3,
                                    negative_slope=0.2))
    out = jax.block_until_ready(fwd(params, x))

    ref_fn = jax.jit(functools.partial(_reference_forward, n_layers=3,
                                       negative_slope=0.2))
    ref = jax.block_until_ready(ref_fn(params, x))

    assert out.shape == (N, 1), out.shape
    assert bool(jnp.all(jnp.isfinite(out)))
    assert bool(jnp.all((out >= 0.0) & (out <= 1.0)))       # final Sigmoid range
    max_err = float(jnp.max(jnp.abs(out - ref)))            # bf16 conv operands
    assert max_err < 8e-2, f"mismatch vs reference: {max_err}"
    print("KERNEL_OK")
</pallas_src>

<mosaic_0001>
module attributes {stable_mosaic.version = 11 : i64} {
  func.func @_disc_kernel(%arg0: i32, %arg1: memref<64x96xf32, #tpu.memory_space<vmem>>, %arg2: memref<4x32x64xbf16, #tpu.memory_space<vmem>>, %arg3: memref<4x96x128xbf16, #tpu.memory_space<vmem>>, %arg4: memref<1x128xf32, #tpu.memory_space<vmem>>, %arg5: memref<4x16x32xbf16, #tpu.memory_space<vmem>>, %arg6: memref<4x128x128xbf16, #tpu.memory_space<vmem>>, %arg7: memref<1x16xf32, #tpu.memory_space<vmem>>, %arg8: memref<1x16xf32, #tpu.memory_space<vmem>>, %arg9: memref<4x8x16xbf16, #tpu.memory_space<vmem>>, %arg10: memref<4x128x128xbf16, #tpu.memory_space<vmem>>, %arg11: memref<1x32xf32, #tpu.memory_space<vmem>>, %arg12: memref<1x32xf32, #tpu.memory_space<vmem>>, %arg13: memref<4x4x8xbf16, #tpu.memory_space<vmem>>, %arg14: memref<4x128x128xbf16, #tpu.memory_space<vmem>>, %arg15: memref<1x64xf32, #tpu.memory_space<vmem>>, %arg16: memref<1x64xf32, #tpu.memory_space<vmem>>, %arg17: memref<4x4x4xbf16, #tpu.memory_space<vmem>>, %arg18: memref<4x128x128xbf16, #tpu.memory_space<vmem>>, %arg19: memref<1x64xf32, #tpu.memory_space<vmem>>, %arg20: memref<1x64xf32, #tpu.memory_space<vmem>>, %arg21: memref<4x4x4xbf16, #tpu.memory_space<vmem>>, %arg22: memref<4x128x2xbf16, #tpu.memory_space<vmem>>, %arg23: memref<1x2xf32, #tpu.memory_space<vmem>>, %arg24: memref<4x1024xf32, #tpu.memory_space<vmem>>, %arg25: memref<1x1024xf32, #tpu.memory_space<vmem>>, %arg26: memref<1024x1xf32, #tpu.memory_space<vmem>>, %arg27: memref<1x1xf32, #tpu.memory_space<vmem>>, %arg28: memref<2x1xf32, #tpu.memory_space<vmem>>) attributes {dimension_semantics = [#tpu.dimension_semantics<arbitrary>], iteration_bounds = array<i64: 1>, scalar_prefetch = 0 : i64, scratch_operands = 0 : i64, tpu.core_type = #tpu.core_type<tc>, window_params = [{pipeline_mode = #tpu.pipeline_mode<synchronous>, transform_indices = @transform_0, window_bounds = array<i64: 64, 96>}, {pipeline_mode = #tpu.pipeline_mode<synchronous>, transform_indices = @transform_1, window_bounds = array<i64: 4, 32, 64>}, {pipeline_mode = #tpu.pipeline_mode<synchronous>, transform_indices = @transform_2, window_bounds = array<i64: 4, 96, 128>}, {pipeline_mode = #tpu.pipeline_mode<synchronous>, transform_indices = @transform_3, window_bounds = array<i64: 1, 128>}, {pipeline_mode = #tpu.pipeline_mode<synchronous>, transform_indices = @transform_4, window_bounds = array<i64: 4, 16, 32>}, {pipeline_mode = #tpu.pipeline_mode<synchronous>, transform_indices = @transform_5, window_bounds = array<i64: 4, 128, 128>}, {pipeline_mode = #tpu.pipeline_mode<synchronous>, transform_indices = @transform_6, window_bounds = array<i64: 1, 16>}, {pipeline_mode = #tpu.pipeline_mode<synchronous>, transform_indices = @transform_7, window_bounds = array<i64: 1, 16>}, {pipeline_mode = #tpu.pipeline_mode<synchronous>, transform_indices = @transform_8, window_bounds = array<i64: 4, 8, 16>}, {pipeline_mode = #tpu.pipeline_mode<synchronous>, transform_indices = @transform_9, window_bounds = array<i64: 4, 128, 128>}, {pipeline_mode = #tpu.pipeline_mode<synchronous>, transform_indices = @transform_10, window_bounds = array<i64: 1, 32>}, {pipeline_mode = #tpu.pipeline_mode<synchronous>, transform_indices = @transform_11, window_bounds = array<i64: 1, 32>}, {pipeline_mode = #tpu.pipeline_mode<synchronous>, transform_indices = @transform_12, window_bounds = array<i64: 4, 4, 8>}, {pipeline_mode = #tpu.pipeline_mode<synchronous>, transform_indices = @transform_13, window_bounds = array<i64: 4, 128, 128>}, {pipeline_mode = #tpu.pipeline_mode<synchronous>, transform_indices = @transform_14, window_bounds = array<i64: 1, 64>}, {pipeline_mode = #tpu.pipeline_mode<synchronous>, transform_indices = @transform_15, window_bounds = array<i64: 1, 64>}, {pipeline_mode = #tpu.pipeline_mode<synchronous>, transform_indices = @transform_16, window_bounds = array<i64: 4, 4, 4>}, {pipeline_mode = #tpu.pipeline_mode<synchronous>, transform_indices = @transform_17, window_bounds = array<i64: 4, 128, 128>}, {pipeline_mode = #tpu.pipeline_mode<synchronous>, transform_indices = @transform_18, window_bounds = array<i64: 1, 64>}, {pipeline_mode = #tpu.pipeline_mode<synchronous>, transform_indices = @transform_19, window_bounds = array<i64: 1, 64>}, {pipeline_mode = #tpu.pipeline_mode<synchronous>, transform_indices = @transform_20, window_bounds = array<i64: 4, 4, 4>}, {pipeline_mode = #tpu.pipeline_mode<synchronous>, transform_indices = @transform_21, window_bounds = array<i64: 4, 128, 2>}, {pipeline_mode = #tpu.pipeline_mode<synchronous>, transform_indices = @transform_22, window_bounds = array<i64: 1, 2>}, {pipeline_mode = #tpu.pipeline_mode<synchronous>, transform_indices = @transform_23, window_bounds = array<i64: 4, 1024>}, {pipeline_mode = #tpu.pipeline_mode<synchronous>, transform_indices = @transform_24, window_bounds = array<i64: 1, 1024>}, {pipeline_mode = #tpu.pipeline_mode<synchronous>, transform_indices = @transform_25, window_bounds = array<i64: 1024, 1>}, {pipeline_mode = #tpu.pipeline_mode<synchronous>, transform_indices = @transform_26, window_bounds = array<i64: 1, 1>}, {pipeline_mode = #tpu.pipeline_mode<synchronous>, transform_indices = @transform_27, window_bounds = array<i64: 2, 1>}]} {
    %c0 = arith.constant 0 : index
    %c0_0 = arith.constant 0 : index
    %0 = vector.load %arg1[%c0, %c0_0] : memref<64x96xf32, #tpu.memory_space<vmem>>, vector<64x96xf32>
    %1 = arith.truncf %0 : vector<64x96xf32> to vector<64x96xbf16>
    %c0_1 = arith.constant 0 : index
    %c0_2 = arith.constant 0 : index
    %c0_3 = arith.constant 0 : index
    %2 = vector.load %arg2[%c0_1, %c0_2, %c0_3] : memref<4x32x64xbf16, #tpu.memory_space<vmem>>, vector<1x32x64xbf16>
    %3 = vector.shape_cast %2 : vector<1x32x64xbf16> to vector<32x64xbf16>
    %cst = arith.constant dense<0.000000e+00> : vector<32x96xf32>
    %4 = tpu.matmul %3, %1, %cst {dimension_numbers = #tpu.dot_dimension_numbers<[1], [0], [0], [1], [0, 0, 1, 1], [], []>} : vector<32x64xbf16>, vector<64x96xbf16>, vector<32x96xf32> -> vector<32x96xf32>
    %5 = arith.truncf %4 : vector<32x96xf32> to vector<32x96xbf16>
    %c0_4 = arith.constant 0 : index
    %c0_5 = arith.constant 0 : index
    %c0_6 = arith.constant 0 : index
    %6 = vector.load %arg3[%c0_4, %c0_5, %c0_6] : memref<4x96x128xbf16, #tpu.memory_space<vmem>>, vector<1x96x128xbf16>
    %7 = vector.shape_cast %6 : vector<1x96x128xbf16> to vector<96x128xbf16>
    %cst_7 = arith.constant dense<0.000000e+00> : vector<32x128xf32>
    %8 = tpu.matmul %5, %7, %cst_7 {dimension_numbers = #tpu.dot_dimension_numbers<[1], [0], [0], [1], [0, 0, 1, 1], [], []>} : vector<32x96xbf16>, vector<96x128xbf16>, vector<32x128xf32> -> vector<32x128xf32>
    %c1 = arith.constant 1 : index
    %c0_8 = arith.constant 0 : index
    %c0_9 = arith.constant 0 : index
    %9 = vector.load %arg2[%c1, %c0_8, %c0_9] : memref<4x32x64xbf16, #tpu.memory_space<vmem>>, vector<1x32x64xbf16>
    %10 = vector.shape_cast %9 : vector<1x32x64xbf16> to vector<32x64xbf16>
    %cst_10 = arith.constant dense<0.000000e+00> : vector<32x96xf32>
    %11 = tpu.matmul %10, %1, %cst_10 {dimension_numbers = #tpu.dot_dimension_numbers<[1], [0], [0], [1], [0, 0, 1, 1], [], []>} : vector<32x64xbf16>, vector<64x96xbf16>, vector<32x96xf32> -> vector<32x96xf32>
    %12 = arith.truncf %11 : vector<32x96xf32> to vector<32x96xbf16>
    %c1_11 = arith.constant 1 : index
    %c0_12 = arith.constant 0 : index
    %c0_13 = arith.constant 0 : index
    %13 = vector.load %arg3[%c1_11, %c0_12, %c0_13] : memref<4x96x128xbf16, #tpu.memory_space<vmem>>, vector<1x96x128xbf16>
    %14 = vector.shape_cast %13 : vector<1x96x128xbf16> to vector<96x128xbf16>
    %cst_14 = arith.constant dense<0.000000e+00> : vector<32x128xf32>
    %15 = tpu.matmul %12, %14, %cst_14 {dimension_numbers = #tpu.dot_dimension_numbers<[1], [0], [0], [1], [0, 0, 1, 1], [], []>} : vector<32x96xbf16>, vector<96x128xbf16>, vector<32x128xf32> -> vector<32x128xf32>
    %16 = arith.addf %8, %15 : vector<32x128xf32>
    %c2 = arith.constant 2 : index
    %c0_15 = arith.constant 0 : index
    %c0_16 = arith.constant 0 : index
    %17 = vector.load %arg2[%c2, %c0_15, %c0_16] : memref<4x32x64xbf16, #tpu.memory_space<vmem>>, vector<1x32x64xbf16>
    %18 = vector.shape_cast %17 : vector<1x32x64xbf16> to vector<32x64xbf16>
    %cst_17 = arith.constant dense<0.000000e+00> : vector<32x96xf32>
    %19 = tpu.matmul %18, %1, %cst_17 {dimension_numbers = #tpu.dot_dimension_numbers<[1], [0], [0], [1], [0, 0, 1, 1], [], []>} : vector<32x64xbf16>, vector<64x96xbf16>, vector<32x96xf32> -> vector<32x96xf32>
    %20 = arith.truncf %19 : vector<32x96xf32> to vector<32x96xbf16>
    %c2_18 = arith.constant 2 : index
    %c0_19 = arith.constant 0 : index
    %c0_20 = arith.constant 0 : index
    %21 = vector.load %arg3[%c2_18, %c0_19, %c0_20] : memref<4x96x128xbf16, #tpu.memory_space<vmem>>, vector<1x96x128xbf16>
    %22 = vector.shape_cast %21 : vector<1x96x128xbf16> to vector<96x128xbf16>
    %cst_21 = arith.constant dense<0.000000e+00> : vector<32x128xf32>
    %23 = tpu.matmul %20, %22, %cst_21 {dimension_numbers = #tpu.dot_dimension_numbers<[1], [0], [0], [1], [0, 0, 1, 1], [], []>} : vector<32x96xbf16>, vector<96x128xbf16>, vector<32x128xf32> -> vector<32x128xf32>
    %24 = arith.addf %16, %23 : vector<32x128xf32>
    %c3 = arith.constant 3 : index
    %c0_22 = arith.constant 0 : index
    %c0_23 = arith.constant 0 : index
    %25 = vector.load %arg2[%c3, %c0_22, %c0_23] : memref<4x32x64xbf16, #tpu.memory_space<vmem>>, vector<1x32x64xbf16>
    %26 = vector.shape_cast %25 : vector<1x32x64xbf16> to vector<32x64xbf16>
    %cst_24 = arith.constant dense<0.000000e+00> : vector<32x96xf32>
    %27 = tpu.matmul %26, %1, %cst_24 {dimension_numbers = #tpu.dot_dimension_numbers<[1], [0], [0], [1], [0, 0, 1, 1], [], []>} : vector<32x64xbf16>, vector<64x96xbf16>, vector<32x96xf32> -> vector<32x96xf32>
    %28 = arith.truncf %27 : vector<32x96xf32> to vector<32x96xbf16>
    %c3_25 = arith.constant 3 : index
    %c0_26 = arith.constant 0 : index
    %c0_27 = arith.constant 0 : index
    %29 = vector.load %arg3[%c3_25, %c0_26, %c0_27] : memref<4x96x128xbf16, #tpu.memory_space<vmem>>, vector<1x96x128xbf16>
    %30 = vector.shape_cast %29 : vector<1x96x128xbf16> to vector<96x128xbf16>
    %cst_28 = arith.constant dense<0.000000e+00> : vector<32x128xf32>
    %31 = tpu.matmul %28, %30, %cst_28 {dimension_numbers = #tpu.dot_dimension_numbers<[1], [0], [0], [1], [0, 0, 1, 1], [], []>} : vector<32x96xbf16>, vector<96x128xbf16>, vector<32x128xf32> -> vector<32x128xf32>
    %32 = arith.addf %24, %31 : vector<32x128xf32>
    %c0_29 = arith.constant 0 : index
    %c0_30 = arith.constant 0 : index
    %33 = vector.load %arg4[%c0_29, %c0_30] : memref<1x128xf32, #tpu.memory_space<vmem>>, vector<1x128xf32>
    %34 = vector.broadcast %33 : vector<1x128xf32> to vector<32x128xf32>
    %35 = arith.addf %32, %34 : vector<32x128xf32>
    %cst_31 = arith.constant 0.000000e+00 : f32
    %36 = vector.broadcast %cst_31 : f32 to vector<32x128xf32>
    %37 = arith.cmpf oge, %35, %36 : vector<32x128xf32>
    %cst_32 = arith.constant 2.000000e-01 : f32
    %38 = vector.broadcast %cst_32 : f32 to vector<32x128xf32>
    %39 = arith.mulf %38, %35 : vector<32x128xf32>
    %40 = arith.select %37, %35, %39 : vector<32x128xi1>, vector<32x128xf32>
    %41 = arith.truncf %40 : vector<32x128xf32> to vector<32x128xbf16>
    %c0_33 = arith.constant 0 : index
    %c0_34 = arith.constant 0 : index
    %c0_35 = arith.constant 0 : index
    %42 = vector.load %arg5[%c0_33, %c0_34, %c0_35] : memref<4x16x32xbf16, #tpu.memory_space<vmem>>, vector<1x16x32xbf16>
    %43 = vector.shape_cast %42 : vector<1x16x32xbf16> to vector<16x32xbf16>
    %cst_36 = arith.constant dense<0.000000e+00> : vector<16x128xf32>
    %44 = tpu.matmul %43, %41, %cst_36 {dimension_numbers = #tpu.dot_dimension_numbers<[1], [0], [0], [1], [0, 0, 1, 1], [], []>} : vector<16x32xbf16>, vector<32x128xbf16>, vector<16x128xf32> -> vector<16x128xf32>
    %45 = arith.truncf %44 : vector<16x128xf32> to vector<16x128xbf16>
    %c0_37 = arith.constant 0 : index
    %c0_38 = arith.constant 0 : index
    %c0_39 = arith.constant 0 : index
    %46 = vector.load %arg6[%c0_37, %c0_38, %c0_39] : memref<4x128x128xbf16, #tpu.memory_space<vmem>>, vector<1x128x128xbf16>
    %47 = vector.shape_cast %46 : vector<1x128x128xbf16> to vector<128x128xbf16>
    %cst_40 = arith.constant dense<0.000000e+00> : vector<16x128xf32>
    %48 = tpu.matmul %45, %47, %cst_40 {dimension_numbers = #tpu.dot_dimension_numbers<[1], [0], [0], [1], [0, 0, 1, 1], [], []>} : vector<16x128xbf16>, vector<128x128xbf16>, vector<16x128xf32> -> vector<16x128xf32>
    %c1_41 = arith.constant 1 : index
    %c0_42 = arith.constant 0 : index
    %c0_43 = arith.constant 0 : index
    %49 = vector.load %arg5[%c1_41, %c0_42, %c0_43] : memref<4x16x32xbf16, #tpu.memory_space<vmem>>, vector<1x16x32xbf16>
    %50 = vector.shape_cast %49 : vector<1x16x32xbf16> to vector<16x32xbf16>
    %cst_44 = arith.constant dense<0.000000e+00> : vector<16x128xf32>
    %51 = tpu.matmul %50, %41, %cst_44 {dimension_numbers = #tpu.dot_dimension_numbers<[1], [0], [0], [1], [0, 0, 1, 1], [], []>} : vector<16x32xbf16>, vector<32x128xbf16>, vector<16x128xf32> -> vector<16x128xf32>
    %52 = arith.truncf %51 : vector<16x128xf32> to vector<16x128xbf16>
    %c1_45 = arith.constant 1 : index
    %c0_46 = arith.constant 0 : index
    %c0_47 = arith.constant 0 : index
    %53 = vector.load %arg6[%c1_45, %c0_46, %c0_47] : memref<4x128x128xbf16, #tpu.memory_space<vmem>>, vector<1x128x128xbf16>
    %54 = vector.shape_cast %53 : vector<1x128x128xbf16> to vector<128x128xbf16>
    %cst_48 = arith.constant dense<0.000000e+00> : vector<16x128xf32>
    %55 = tpu.matmul %52, %54, %cst_48 {dimension_numbers = #tpu.dot_dimension_numbers<[1], [0], [0], [1], [0, 0, 1, 1], [], []>} : vector<16x128xbf16>, vector<128x128xbf16>, vector<16x128xf32> -> vector<16x128xf32>
    %56 = arith.addf %48, %55 : vector<16x128xf32>
    %c2_49 = arith.constant 2 : index
    %c0_50 = arith.constant 0 : index
    %c0_51 = arith.constant 0 : index
    %57 = vector.load %arg5[%c2_49, %c0_50, %c0_51] : memref<4x16x32xbf16, #tpu.memory_space<vmem>>, vector<1x16x32xbf16>
    %58 = vector.shape_cast %57 : vector<1x16x32xbf16> to vector<16x32xbf16>
    %cst_52 = arith.constant dense<0.000000e+00> : vector<16x128xf32>
    %59 = tpu.matmul %58, %41, %cst_52 {dimension_numbers = #tpu.dot_dimension_numbers<[1], [0], [0], [1], [0, 0, 1, 1], [], []>} : vector<16x32xbf16>, vector<32x128xbf16>, vector<16x128xf32> -> vector<16x128xf32>
    %60 = arith.truncf %59 : vector<16x128xf32> to vector<16x128xbf16>
    %c2_53 = arith.constant 2 : index
    %c0_54 = arith.constant 0 : index
    %c0_55 = arith.constant 0 : index
    %61 = vector.load %arg6[%c2_53, %c0_54, %c0_55] : memref<4x128x128xbf16, #tpu.memory_space<vmem>>, vector<1x128x128xbf16>
    %62 = vector.shape_cast %61 : vector<1x128x128xbf16> to vector<128x128xbf16>
    %cst_56 = arith.constant dense<0.000000e+00> : vector<16x128xf32>
    %63 = tpu.matmul %60, %62, %cst_56 {dimension_numbers = #tpu.dot_dimension_numbers<[1], [0], [0], [1], [0, 0, 1, 1], [], []>} : vector<16x128xbf16>, vector<128x128xbf16>, vector<16x128xf32> -> vector<16x128xf32>
    %64 = arith.addf %56, %63 : vector<16x128xf32>
    %c3_57 = arith.constant 3 : index
    %c0_58 = arith.constant 0 : index
    %c0_59 = arith.constant 0 : index
    %65 = vector.load %arg5[%c3_57, %c0_58, %c0_59] : memref<4x16x32xbf16, #tpu.memory_space<vmem>>, vector<1x16x32xbf16>
    %66 = vector.shape_cast %65 : vector<1x16x32xbf16> to vector<16x32xbf16>
    %cst_60 = arith.constant dense<0.000000e+00> : vector<16x128xf32>
    %67 = tpu.matmul %66, %41, %cst_60 {dimension_numbers = #tpu.dot_dimension_numbers<[1], [0], [0], [1], [0, 0, 1, 1], [], []>} : vector<16x32xbf16>, vector<32x128xbf16>, vector<16x128xf32> -> vector<16x128xf32>
    %68 = arith.truncf %67 : vector<16x128xf32> to vector<16x128xbf16>
    %c3_61 = arith.constant 3 : index
    %c0_62 = arith.constant 0 : index
    %c0_63 = arith.constant 0 : index
    %69 = vector.load %arg6[%c3_61, %c0_62, %c0_63] : memref<4x128x128xbf16, #tpu.memory_space<vmem>>, vector<1x128x128xbf16>
    %70 = vector.shape_cast %69 : vector<1x128x128xbf16> to vector<128x128xbf16>
    %cst_64 = arith.constant dense<0.000000e+00> : vector<16x128xf32>
    %71 = tpu.matmul %68, %70, %cst_64 {dimension_numbers = #tpu.dot_dimension_numbers<[1], [0], [0], [1], [0, 0, 1, 1], [], []>} : vector<16x128xbf16>, vector<128x128xbf16>, vector<16x128xf32> -> vector<16x128xf32>
    %72 = arith.addf %64, %71 : vector<16x128xf32>
    %73 = tpu.iota {dimensions = array<i32: 0>} : vector<128x16xi32>
    %74 = tpu.iota {dimensions = array<i32: 1>} : vector<128x16xi32>
    %c15_i32 = arith.constant 15 : i32
    %75 = vector.broadcast %c15_i32 : i32 to vector<128x16xi32>
    %76 = arith.andi %73, %75 : vector<128x16xi32>
    %77 = arith.cmpi eq, %76, %74 : vector<128x16xi32>
    %cst_65 = arith.constant 1.000000e+00 : f32
    %cst_66 = arith.constant 0.000000e+00 : f32
    %78 = vector.broadcast %cst_65 : f32 to vector<128x16xf32>
    %79 = vector.broadcast %cst_66 : f32 to vector<128x16xf32>
    %80 = arith.select %77, %78, %79 : vector<128x16xi1>, vector<128x16xf32>
    %81 = tpu.iota {dimensions = array<i32: 0>} : vector<16x128xi32>
    %82 = tpu.iota {dimensions = array<i32: 1>} : vector<16x128xi32>
    %c15_i32_67 = arith.constant 15 : i32
    %83 = vector.broadcast %c15_i32_67 : i32 to vector<16x128xi32>
    %84 = arith.andi %82, %83 : vector<16x128xi32>
    %85 = arith.cmpi eq, %84, %81 : vector<16x128xi32>
    %cst_68 = arith.constant 1.000000e+00 : f32
    %cst_69 = arith.constant 0.000000e+00 : f32
    %86 = vector.broadcast %cst_68 : f32 to vector<16x128xf32>
    %87 = vector.broadcast %cst_69 : f32 to vector<16x128xf32>
    %88 = arith.select %85, %86, %87 : vector<16x128xi1>, vector<16x128xf32>
    %cst_70 = arith.constant dense<0.000000e+00> : vector<128xf32>
    %89 = vector.multi_reduction <add>, %72, %cst_70 [0] : vector<16x128xf32> to vector<128xf32>
    %90 = vector.shape_cast %89 : vector<128xf32> to vector<1x128xf32>
    %91 = arith.mulf %72, %72 : vector<16x128xf32>
    %cst_71 = arith.constant dense<0.000000e+00> : vector<128xf32>
    %92 = vector.multi_reduction <add>, %91, %cst_71 [0] : vector<16x128xf32> to vector<128xf32>
    %93 = vector.shape_cast %92 : vector<128xf32> to vector<1x128xf32>
    %cst_72 = arith.constant dense<0.000000e+00> : vector<1x16xf32>
    %94 = tpu.matmul %90, %80, %cst_72 {dimension_numbers = #tpu.dot_dimension_numbers<[1], [0], [0], [1], [0, 0, 1, 1], [], []>} : vector<1x128xf32>, vector<128x16xf32>, vector<1x16xf32> -> vector<1x16xf32>
    %cst_73 = arith.constant 1.280000e+02 : f32
    %95 = vector.broadcast %cst_73 : f32 to vector<1x16xf32>
    %96 = arith.divf %94, %95 : vector<1x16xf32>
    %cst_74 = arith.constant dense<0.000000e+00> : vector<1x16xf32>
    %97 = tpu.matmul %93, %80, %cst_74 {dimension_numbers = #tpu.dot_dimension_numbers<[1], [0], [0], [1], [0, 0, 1, 1], [], []>} : vector<1x128xf32>, vector<128x16xf32>, vector<1x16xf32> -> vector<1x16xf32>
    %cst_75 = arith.constant 1.280000e+02 : f32
    %98 = vector.broadcast %cst_75 : f32 to vector<1x16xf32>
    %99 = arith.divf %97, %98 : vector<1x16xf32>
    %100 = arith.mulf %96, %96 : vector<1x16xf32>
    %101 = arith.subf %99, %100 : vector<1x16xf32>
    %cst_76 = arith.constant 0.000000e+00 : f32
    %102 = vector.broadcast %cst_76 : f32 to vector<1x16xf32>
    %103 = arith.maximumf %101, %102 : vector<1x16xf32>
    %c0_77 = arith.constant 0 : index
    %c0_78 = arith.constant 0 : index
    %104 = vector.load %arg7[%c0_77, %c0_78] : memref<1x16xf32, #tpu.memory_space<vmem>>, vector<1x16xf32>
    %cst_79 = arith.constant 9.99999974E-6 : f32
    %105 = vector.broadcast %cst_79 : f32 to vector<1x16xf32>
    %106 = arith.addf %103, %105 : vector<1x16xf32>
    %107 = math.rsqrt %106 : vector<1x16xf32>
    %108 = arith.mulf %104, %107 : vector<1x16xf32>
    %c0_80 = arith.constant 0 : index
    %c0_81 = arith.constant 0 : index
    %109 = vector.load %arg8[%c0_80, %c0_81] : memref<1x16xf32, #tpu.memory_space<vmem>>, vector<1x16xf32>
    %110 = arith.mulf %96, %108 : vector<1x16xf32>
    %111 = arith.subf %109, %110 : vector<1x16xf32>
    %cst_82 = arith.constant dense<0.000000e+00> : vector<1x128xf32>
    %112 = tpu.matmul %108, %88, %cst_82 {dimension_numbers = #tpu.dot_dimension_numbers<[1], [0], [0], [1], [0, 0, 1, 1], [], []>} : vector<1x16xf32>, vector<16x128xf32>, vector<1x128xf32> -> vector<1x128xf32>
    %113 = vector.broadcast %112 : vector<1x128xf32> to vector<16x128xf32>
    %114 = arith.mulf %72, %113 : vector<16x128xf32>
    %cst_83 = arith.constant dense<0.000000e+00> : vector<1x128xf32>
    %115 = tpu.matmul %111, %88, %cst_83 {dimension_numbers = #tpu.dot_dimension_numbers<[1], [0], [0], [1], [0, 0, 1, 1], [], []>} : vector<1x16xf32>, vector<16x128xf32>, vector<1x128xf32> -> vector<1x128xf32>
    %116 = vector.broadcast %115 : vector<1x128xf32> to vector<16x128xf32>
    %117 = arith.addf %114, %116 : vector<16x128xf32>
    %cst_84 = arith.constant 0.000000e+00 : f32
    %118 = vector.broadcast %cst_84 : f32 to vector<16x128xf32>
    %119 = arith.cmpf oge, %117, %118 : vector<16x128xf32>
    %cst_85 = arith.constant 2.000000e-01 : f32
    %120 = vector.broadcast %cst_85 : f32 to vector<16x128xf32>
    %121 = arith.mulf %120, %117 : vector<16x128xf32>
    %122 = arith.select %119, %117, %121 : vector<16x128xi1>, vector<16x128xf32>
    %123 = arith.truncf %122 : vector<16x128xf32> to vector<16x128xbf16>
    %c0_86 = arith.constant 0 : index
    %c0_87 = arith.constant 0 : index
    %c0_88 = arith.constant 0 : index
    %124 = vector.load %arg9[%c0_86, %c0_87, %c0_88] : memref<4x8x16xbf16, #tpu.memory_space<vmem>>, vector<1x8x16xbf16>
    %125 = vector.shape_cast %124 : vector<1x8x16xbf16> to vector<8x16xbf16>
    %cst_89 = arith.constant dense<0.000000e+00> : vector<8x128xf32>
    %126 = tpu.matmul %125, %123, %cst_89 {dimension_numbers = #tpu.dot_dimension_numbers<[1], [0], [0], [1], [0, 0, 1, 1], [], []>} : vector<8x16xbf16>, vector<16x128xbf16>, vector<8x128xf32> -> vector<8x128xf32>
    %127 = arith.truncf %126 : vector<8x128xf32> to vector<8x128xbf16>
    %c0_90 = arith.constant 0 : index
    %c0_91 = arith.constant 0 : index
    %c0_92 = arith.constant 0 : index
    %128 = vector.load %arg10[%c0_90, %c0_91, %c0_92] : memref<4x128x128xbf16, #tpu.memory_space<vmem>>, vector<1x128x128xbf16>
    %129 = vector.shape_cast %128 : vector<1x128x128xbf16> to vector<128x128xbf16>
    %cst_93 = arith.constant dense<0.000000e+00> : vector<8x128xf32>
    %130 = tpu.matmul %127, %129, %cst_93 {dimension_numbers = #tpu.dot_dimension_numbers<[1], [0], [0], [1], [0, 0, 1, 1], [], []>} : vector<8x128xbf16>, vector<128x128xbf16>, vector<8x128xf32> -> vector<8x128xf32>
    %c1_94 = arith.constant 1 : index
    %c0_95 = arith.constant 0 : index
    %c0_96 = arith.constant 0 : index
    %131 = vector.load %arg9[%c1_94, %c0_95, %c0_96] : memref<4x8x16xbf16, #tpu.memory_space<vmem>>, vector<1x8x16xbf16>
    %132 = vector.shape_cast %131 : vector<1x8x16xbf16> to vector<8x16xbf16>
    %cst_97 = arith.constant dense<0.000000e+00> : vector<8x128xf32>
    %133 = tpu.matmul %132, %123, %cst_97 {dimension_numbers = #tpu.dot_dimension_numbers<[1], [0], [0], [1], [0, 0, 1, 1], [], []>} : vector<8x16xbf16>, vector<16x128xbf16>, vector<8x128xf32> -> vector<8x128xf32>
    %134 = arith.truncf %133 : vector<8x128xf32> to vector<8x128xbf16>
    %c1_98 = arith.constant 1 : index
    %c0_99 = arith.constant 0 : index
    %c0_100 = arith.constant 0 : index
    %135 = vector.load %arg10[%c1_98, %c0_99, %c0_100] : memref<4x128x128xbf16, #tpu.memory_space<vmem>>, vector<1x128x128xbf16>
    %136 = vector.shape_cast %135 : vector<1x128x128xbf16> to vector<128x128xbf16>
    %cst_101 = arith.constant dense<0.000000e+00> : vector<8x128xf32>
    %137 = tpu.matmul %134, %136, %cst_101 {dimension_numbers = #tpu.dot_dimension_numbers<[1], [0], [0], [1], [0, 0, 1, 1], [], []>} : vector<8x128xbf16>, vector<128x128xbf16>, vector<8x128xf32> -> vector<8x128xf32>
    %138 = arith.addf %130, %137 : vector<8x128xf32>
    %c2_102 = arith.constant 2 : index
    %c0_103 = arith.constant 0 : index
    %c0_104 = arith.constant 0 : index
    %139 = vector.load %arg9[%c2_102, %c0_103, %c0_104] : memref<4x8x16xbf16, #tpu.memory_space<vmem>>, vector<1x8x16xbf16>
    %140 = vector.shape_cast %139 : vector<1x8x16xbf16> to vector<8x16xbf16>
    %cst_105 = arith.constant dense<0.000000e+00> : vector<8x128xf32>
    %141 = tpu.matmul %140, %123, %cst_105 {dimension_numbers = #tpu.dot_dimension_numbers<[1], [0], [0], [1], [0, 0, 1, 1], [], []>} : vector<8x16xbf16>, vector<16x128xbf16>, vector<8x128xf32> -> vector<8x128xf32>
    %142 = arith.truncf %141 : vector<8x128xf32> to vector<8x128xbf16>
    %c2_106 = arith.constant 2 : index
    %c0_107 = arith.constant 0 : index
    %c0_108 = arith.constant 0 : index
    %143 = vector.load %arg10[%c2_106, %c0_107, %c0_108] : memref<4x128x128xbf16, #tpu.memory_space<vmem>>, vector<1x128x128xbf16>
    %144 = vector.shape_cast %143 : vector<1x128x128xbf16> to vector<128x128xbf16>
    %cst_109 = arith.constant dense<0.000000e+00> : vector<8x128xf32>
    %145 = tpu.matmul %142, %144, %cst_109 {dimension_numbers = #tpu.dot_dimension_numbers<[1], [0], [0], [1], [0, 0, 1, 1], [], []>} : vector<8x128xbf16>, vector<128x128xbf16>, vector<8x128xf32> -> vector<8x128xf32>
    %146 = arith.addf %138, %145 : vector<8x128xf32>
    %c3_110 = arith.constant 3 : index
    %c0_111 = arith.constant 0 : index
    %c0_112 = arith.constant 0 : index
    %147 = vector.load %arg9[%c3_110, %c0_111, %c0_112] : memref<4x8x16xbf16, #tpu.memory_space<vmem>>, vector<1x8x16xbf16>
    %148 = vector.shape_cast %147 : vector<1x8x16xbf16> to vector<8x16xbf16>
    %cst_113 = arith.constant dense<0.000000e+00> : vector<8x128xf32>
    %149 = tpu.matmul %148, %123, %cst_113 {dimension_numbers = #tpu.dot_dimension_numbers<[1], [0], [0], [1], [0, 0, 1, 1], [], []>} : vector<8x16xbf16>, vector<16x128xbf16>, vector<8x128xf32> -> vector<8x128xf32>
    %150 = arith.truncf %149 : vector<8x128xf32> to vector<8x128xbf16>
    %c3_114 = arith.constant 3 : index
    %c0_115 = arith.constant 0 : index
    %c0_116 = arith.constant 0 : index
    %151 = vector.load %arg10[%c3_114, %c0_115, %c0_116] : memref<4x128x128xbf16, #tpu.memory_space<vmem>>, vector<1x128x128xbf16>
    %152 = vector.shape_cast %151 : vector<1x128x128xbf16> to vector<128x128xbf16>
    %cst_117 = arith.constant dense<0.000000e+00> : vector<8x128xf32>
    %153 = tpu.matmul %150, %152, %cst_117 {dimension_numbers = #tpu.dot_dimension_numbers<[1], [0], [0], [1], [0, 0, 1, 1], [], []>} : vector<8x128xbf16>, vector<128x128xbf16>, vector<8x128xf32> -> vector<8x128xf32>
    %154 = arith.addf %146, %153 : vector<8x128xf32>
    %155 = tpu.iota {dimensions = array<i32: 0>} : vector<128x32xi32>
    %156 = tpu.iota {dimensions = array<i32: 1>} : vector<128x32xi32>
    %c31_i32 = arith.constant 31 : i32
    %157 = vector.broadcast %c31_i32 : i32 to vector<128x32xi32>
    %158 = arith.andi %155, %157 : vector<128x32xi32>
    %159 = arith.cmpi eq, %158, %156 : vector<128x32xi32>
    %cst_118 = arith.constant 1.000000e+00 : f32
    %cst_119 = arith.constant 0.000000e+00 : f32
    %160 = vector.broadcast %cst_118 : f32 to vector<128x32xf32>
    %161 = vector.broadcast %cst_119 : f32 to vector<128x32xf32>
    %162 = arith.select %159, %160, %161 : vector<128x32xi1>, vector<128x32xf32>
    %163 = tpu.iota {dimensions = array<i32: 0>} : vector<32x128xi32>
    %164 = tpu.iota {dimensions = array<i32: 1>} : vector<32x128xi32>
    %c31_i32_120 = arith.constant 31 : i32
    %165 = vector.broadcast %c31_i32_120 : i32 to vector<32x128xi32>
    %166 = arith.andi %164, %165 : vector<32x128xi32>
    %167 = arith.cmpi eq, %166, %163 : vector<32x128xi32>
    %cst_121 = arith.constant 1.000000e+00 : f32
    %cst_122 = arith.constant 0.000000e+00 : f32
    %168 = vector.broadcast %cst_121 : f32 to vector<32x128xf32>
    %169 = vector.broadcast %cst_122 : f32 to vector<32x128xf32>
    %170 = arith.select %167, %168, %169 : vector<32x128xi1>, vector<32x128xf32>
    %cst_123 = arith.constant dense<0.000000e+00> : vector<128xf32>
    %171 = vector.multi_reduction <add>, %154, %cst_123 [0] : vector<8x128xf32> to vector<128xf32>
    %172 = vector.shape_cast %171 : vector<128xf32> to vector<1x128xf32>
    %173 = arith.mulf %154, %154 : vector<8x128xf32>
    %cst_124 = arith.constant dense<0.000000e+00> : vector<128xf32>
    %174 = vector.multi_reduction <add>, %173, %cst_124 [0] : vector<8x128xf32> to vector<128xf32>
    %175 = vector.shape_cast %174 : vector<128xf32> to vector<1x128xf32>
    %cst_125 = arith.constant dense<0.000000e+00> : vector<1x32xf32>
    %176 = tpu.matmul %172, %162, %cst_125 {dimension_numbers = #tpu.dot_dimension_numbers<[1], [0], [0], [1], [0, 0, 1, 1], [], []>} : vector<1x128xf32>, vector<128x32xf32>, vector<1x32xf32> -> vector<1x32xf32>
    %cst_126 = arith.constant 3.200000e+01 : f32
    %177 = vector.broadcast %cst_126 : f32 to vector<1x32xf32>
    %178 = arith.divf %176, %177 : vector<1x32xf32>
    %cst_127 = arith.constant dense<0.000000e+00> : vector<1x32xf32>
    %179 = tpu.matmul %175, %162, %cst_127 {dimension_numbers = #tpu.dot_dimension_numbers<[1], [0], [0], [1], [0, 0, 1, 1], [], []>} : vector<1x128xf32>, vector<128x32xf32>, vector<1x32xf32> -> vector<1x32xf32>
    %cst_128 = arith.constant 3.200000e+01 : f32
    %180 = vector.broadcast %cst_128 : f32 to vector<1x32xf32>
    %181 = arith.divf %179, %180 : vector<1x32xf32>
    %182 = arith.mulf %178, %178 : vector<1x32xf32>
    %183 = arith.subf %181, %182 : vector<1x32xf32>
    %cst_129 = arith.constant 0.000000e+00 : f32
    %184 = vector.broadcast %cst_129 : f32 to vector<1x32xf32>
    %185 = arith.maximumf %183, %184 : vector<1x32xf32>
    %c0_130 = arith.constant 0 : index
    %c0_131 = arith.constant 0 : index
    %186 = vector.load %arg11[%c0_130, %c0_131] : memref<1x32xf32, #tpu.memory_space<vmem>>, vector<1x32xf32>
    %cst_132 = arith.constant 9.99999974E-6 : f32
    %187 = vector.broadcast %cst_132 : f32 to vector<1x32xf32>
    %188 = arith.addf %185, %187 : vector<1x32xf32>
    %189 = math.rsqrt %188 : vector<1x32xf32>
    %190 = arith.mulf %186, %189 : vector<1x32xf32>
    %c0_133 = arith.constant 0 : index
    %c0_134 = arith.constant 0 : index
    %191 = vector.load %arg12[%c0_133, %c0_134] : memref<1x32xf32, #tpu.memory_space<vmem>>, vector<1x32xf32>
    %192 = arith.mulf %178, %190 : vector<1x32xf32>
    %193 = arith.subf %191, %192 : vector<1x32xf32>
    %cst_135 = arith.constant dense<0.000000e+00> : vector<1x128xf32>
    %194 = tpu.matmul %190, %170, %cst_135 {dimension_numbers = #tpu.dot_dimension_numbers<[1], [0], [0], [1], [0, 0, 1, 1], [], []>} : vector<1x32xf32>, vector<32x128xf32>, vector<1x128xf32> -> vector<1x128xf32>
    %195 = vector.broadcast %194 : vector<1x128xf32> to vector<8x128xf32>
    %196 = arith.mulf %154, %195 : vector<8x128xf32>
    %cst_136 = arith.constant dense<0.000000e+00> : vector<1x128xf32>
    %197 = tpu.matmul %193, %170, %cst_136 {dimension_numbers = #tpu.dot_dimension_numbers<[1], [0], [0], [1], [0, 0, 1, 1], [], []>} : vector<1x32xf32>, vector<32x128xf32>, vector<1x128xf32> -> vector<1x128xf32>
    %198 = vector.broadcast %197 : vector<1x128xf32> to vector<8x128xf32>
    %199 = arith.addf %196, %198 : vector<8x128xf32>
    %cst_137 = arith.constant 0.000000e+00 : f32
    %200 = vector.broadcast %cst_137 : f32 to vector<8x128xf32>
    %201 = arith.cmpf oge, %199, %200 : vector<8x128xf32>
    %cst_138 = arith.constant 2.000000e-01 : f32
    %202 = vector.broadcast %cst_138 : f32 to vector<8x128xf32>
    %203 = arith.mulf %202, %199 : vector<8x128xf32>
    %204 = arith.select %201, %199, %203 : vector<8x128xi1>, vector<8x128xf32>
    %205 = arith.truncf %204 : vector<8x128xf32> to vector<8x128xbf16>
    %c0_139 = arith.constant 0 : index
    %c0_140 = arith.constant 0 : index
    %c0_141 = arith.constant 0 : index
    %206 = vector.load %arg13[%c0_139, %c0_140, %c0_141] : memref<4x4x8xbf16, #tpu.memory_space<vmem>>, vector<1x4x8xbf16>
    %207 = vector.shape_cast %206 : vector<1x4x8xbf16> to vector<4x8xbf16>
    %cst_142 = arith.constant dense<0.000000e+00> : vector<4x128xf32>
    %208 = tpu.matmul %207, %205, %cst_142 {dimension_numbers = #tpu.dot_dimension_numbers<[1], [0], [0], [1], [0, 0, 1, 1], [], []>} : vector<4x8xbf16>, vector<8x128xbf16>, vector<4x128xf32> -> vector<4x128xf32>
    %209 = arith.truncf %208 : vector<4x128xf32> to vector<4x128xbf16>
    %c0_143 = arith.constant 0 : index
    %c0_144 = arith.constant 0 : index
    %c0_145 = arith.constant 0 : index
    %210 = vector.load %arg14[%c0_143, %c0_144, %c0_145] : memref<4x128x128xbf16, #tpu.memory_space<vmem>>, vector<1x128x128xbf16>
    %211 = vector.shape_cast %210 : vector<1x128x128xbf16> to vector<128x128xbf16>
    %cst_146 = arith.constant dense<0.000000e+00> : vector<4x128xf32>
    %212 = tpu.matmul %209, %211, %cst_146 {dimension_numbers = #tpu.dot_dimension_numbers<[1], [0], [0], [1], [0, 0, 1, 1], [], []>} : vector<4x128xbf16>, vector<128x128xbf16>, vector<4x128xf32> -> vector<4x128xf32>
    %c1_147 = arith.constant 1 : index
    %c0_148 = arith.constant 0 : index
    %c0_149 = arith.constant 0 : index
    %213 = vector.load %arg13[%c1_147, %c0_148, %c0_149] : memref<4x4x8xbf16, #tpu.memory_space<vmem>>, vector<1x4x8xbf16>
    %214 = vector.shape_cast %213 : vector<1x4x8xbf16> to vector<4x8xbf16>
    %cst_150 = arith.constant dense<0.000000e+00> : vector<4x128xf32>
    %215 = tpu.matmul %214, %205, %cst_150 {dimension_numbers = #tpu.dot_dimension_numbers<[1], [0], [0], [1], [0, 0, 1, 1], [], []>} : vector<4x8xbf16>, vector<8x128xbf16>, vector<4x128xf32> -> vector<4x128xf32>
    %216 = arith.truncf %215 : vector<4x128xf32> to vector<4x128xbf16>
    %c1_151 = arith.constant 1 : index
    %c0_152 = arith.constant 0 : index
    %c0_153 = arith.constant 0 : index
    %217 = vector.load %arg14[%c1_151, %c0_152, %c0_153] : memref<4x128x128xbf16, #tpu.memory_space<vmem>>, vector<1x128x128xbf16>
    %218 = vector.shape_cast %217 : vector<1x128x128xbf16> to vector<128x128xbf16>
    %cst_154 = arith.constant dense<0.000000e+00> : vector<4x128xf32>
    %219 = tpu.matmul %216, %218, %cst_154 {dimension_numbers = #tpu.dot_dimension_numbers<[1], [0], [0], [1], [0, 0, 1, 1], [], []>} : vector<4x128xbf16>, vector<128x128xbf16>, vector<4x128xf32> -> vector<4x128xf32>
    %220 = arith.addf %212, %219 : vector<4x128xf32>
    %c2_155 = arith.constant 2 : index
    %c0_156 = arith.constant 0 : index
    %c0_157 = arith.constant 0 : index
    %221 = vector.load %arg13[%c2_155, %c0_156, %c0_157] : memref<4x4x8xbf16, #tpu.memory_space<vmem>>, vector<1x4x8xbf16>
    %222 = vector.shape_cast %221 : vector<1x4x8xbf16> to vector<4x8xbf16>
    %cst_158 = arith.constant dense<0.000000e+00> : vector<4x128xf32>
    %223 = tpu.matmul %222, %205, %cst_158 {dimension_numbers = #tpu.dot_dimension_numbers<[1], [0], [0], [1], [0, 0, 1, 1], [], []>} : vector<4x8xbf16>, vector<8x128xbf16>, vector<4x128xf32> -> vector<4x128xf32>
    %224 = arith.truncf %223 : vector<4x128xf32> to vector<4x128xbf16>
    %c2_159 = arith.constant 2 : index
    %c0_160 = arith.constant 0 : index
    %c0_161 = arith.constant 0 : index
    %225 = vector.load %arg14[%c2_159, %c0_160, %c0_161] : memref<4x128x128xbf16, #tpu.memory_space<vmem>>, vector<1x128x128xbf16>
    %226 = vector.shape_cast %225 : vector<1x128x128xbf16> to vector<128x128xbf16>
    %cst_162 = arith.constant dense<0.000000e+00> : vector<4x128xf32>
    %227 = tpu.matmul %224, %226, %cst_162 {dimension_numbers = #tpu.dot_dimension_numbers<[1], [0], [0], [1], [0, 0, 1, 1], [], []>} : vector<4x128xbf16>, vector<128x128xbf16>, vector<4x128xf32> -> vector<4x128xf32>
    %228 = arith.addf %220, %227 : vector<4x128xf32>
    %c3_163 = arith.constant 3 : index
    %c0_164 = arith.constant 0 : index
    %c0_165 = arith.constant 0 : index
    %229 = vector.load %arg13[%c3_163, %c0_164, %c0_165] : memref<4x4x8xbf16, #tpu.memory_space<vmem>>, vector<1x4x8xbf16>
    %230 = vector.shape_cast %229 : vector<1x4x8xbf16> to vector<4x8xbf16>
    %cst_166 = arith.constant dense<0.000000e+00> : vector<4x128xf32>
    %231 = tpu.matmul %230, %205, %cst_166 {dimension_numbers = #tpu.dot_dimension_numbers<[1], [0], [0], [1], [0, 0, 1, 1], [], []>} : vector<4x8xbf16>, vector<8x128xbf16>, vector<4x128xf32> -> vector<4x128xf32>
    %232 = arith.truncf %231 : vector<4x128xf32> to vector<4x128xbf16>
    %c3_167 = arith.constant 3 : index
    %c0_168 = arith.constant 0 : index
    %c0_169 = arith.constant 0 : index
    %233 = vector.load %arg14[%c3_167, %c0_168, %c0_169] : memref<4x128x128xbf16, #tpu.memory_space<vmem>>, vector<1x128x128xbf16>
    %234 = vector.shape_cast %233 : vector<1x128x128xbf16> to vector<128x128xbf16>
    %cst_170 = arith.constant dense<0.000000e+00> : vector<4x128xf32>
    %235 = tpu.matmul %232, %234, %cst_170 {dimension_numbers = #tpu.dot_dimension_numbers<[1], [0], [0], [1], [0, 0, 1, 1], [], []>} : vector<4x128xbf16>, vector<128x128xbf16>, vector<4x128xf32> -> vector<4x128xf32>
    %236 = arith.addf %228, %235 : vector<4x128xf32>
    %237 = tpu.iota {dimensions = array<i32: 0>} : vector<128x64xi32>
    %238 = tpu.iota {dimensions = array<i32: 1>} : vector<128x64xi32>
    %c63_i32 = arith.constant 63 : i32
    %239 = vector.broadcast %c63_i32 : i32 to vector<128x64xi32>
    %240 = arith.andi %237, %239 : vector<128x64xi32>
    %241 = arith.cmpi eq, %240, %238 : vector<128x64xi32>
    %cst_171 = arith.constant 1.000000e+00 : f32
    %cst_172 = arith.constant 0.000000e+00 : f32
    %242 = vector.broadcast %cst_171 : f32 to vector<128x64xf32>
    %243 = vector.broadcast %cst_172 : f32 to vector<128x64xf32>
    %244 = arith.select %241, %242, %243 : vector<128x64xi1>, vector<128x64xf32>
    %245 = tpu.iota {dimensions = array<i32: 0>} : vector<64x128xi32>
    %246 = tpu.iota {dimensions = array<i32: 1>} : vector<64x128xi32>
    %c63_i32_173 = arith.constant 63 : i32
    %247 = vector.broadcast %c63_i32_173 : i32 to vector<64x128xi32>
    %248 = arith.andi %246, %247 : vector<64x128xi32>
    %249 = arith.cmpi eq, %248, %245 : vector<64x128xi32>
    %cst_174 = arith.constant 1.000000e+00 : f32
    %cst_175 = arith.constant 0.000000e+00 : f32
    %250 = vector.broadcast %cst_174 : f32 to vector<64x128xf32>
    %251 = vector.broadcast %cst_175 : f32 to vector<64x128xf32>
    %252 = arith.select %249, %250, %251 : vector<64x128xi1>, vector<64x128xf32>
    %cst_176 = arith.constant dense<0.000000e+00> : vector<128xf32>
    %253 = vector.multi_reduction <add>, %236, %cst_176 [0] : vector<4x128xf32> to vector<128xf32>
    %254 = vector.shape_cast %253 : vector<128xf32> to vector<1x128xf32>
    %255 = arith.mulf %236, %236 : vector<4x128xf32>
    %cst_177 = arith.constant dense<0.000000e+00> : vector<128xf32>
    %256 = vector.multi_reduction <add>, %255, %cst_177 [0] : vector<4x128xf32> to vector<128xf32>
    %257 = vector.shape_cast %256 : vector<128xf32> to vector<1x128xf32>
    %cst_178 = arith.constant dense<0.000000e+00> : vector<1x64xf32>
    %258 = tpu.matmul %254, %244, %cst_178 {dimension_numbers = #tpu.dot_dimension_numbers<[1], [0], [0], [1], [0, 0, 1, 1], [], []>} : vector<1x128xf32>, vector<128x64xf32>, vector<1x64xf32> -> vector<1x64xf32>
    %cst_179 = arith.constant 8.000000e+00 : f32
    %259 = vector.broadcast %cst_179 : f32 to vector<1x64xf32>
    %260 = arith.divf %258, %259 : vector<1x64xf32>
    %cst_180 = arith.constant dense<0.000000e+00> : vector<1x64xf32>
    %261 = tpu.matmul %257, %244, %cst_180 {dimension_numbers = #tpu.dot_dimension_numbers<[1], [0], [0], [1], [0, 0, 1, 1], [], []>} : vector<1x128xf32>, vector<128x64xf32>, vector<1x64xf32> -> vector<1x64xf32>
    %cst_181 = arith.constant 8.000000e+00 : f32
    %262 = vector.broadcast %cst_181 : f32 to vector<1x64xf32>
    %263 = arith.divf %261, %262 : vector<1x64xf32>
    %264 = arith.mulf %260, %260 : vector<1x64xf32>
    %265 = arith.subf %263, %264 : vector<1x64xf32>
    %cst_182 = arith.constant 0.000000e+00 : f32
    %266 = vector.broadcast %cst_182 : f32 to vector<1x64xf32>
    %267 = arith.maximumf %265, %266 : vector<1x64xf32>
    %c0_183 = arith.constant 0 : index
    %c0_184 = arith.constant 0 : index
    %268 = vector.load %arg15[%c0_183, %c0_184] : memref<1x64xf32, #tpu.memory_space<vmem>>, vector<1x64xf32>
    %cst_185 = arith.constant 9.99999974E-6 : f32
    %269 = vector.broadcast %cst_185 : f32 to vector<1x64xf32>
    %270 = arith.addf %267, %269 : vector<1x64xf32>
    %271 = math.rsqrt %270 : vector<1x64xf32>
    %272 = arith.mulf %268, %271 : vector<1x64xf32>
    %c0_186 = arith.constant 0 : index
    %c0_187 = arith.constant 0 : index
    %273 = vector.load %arg16[%c0_186, %c0_187] : memref<1x64xf32, #tpu.memory_space<vmem>>, vector<1x64xf32>
    %274 = arith.mulf %260, %272 : vector<1x64xf32>
    %275 = arith.subf %273, %274 : vector<1x64xf32>
    %cst_188 = arith.constant dense<0.000000e+00> : vector<1x128xf32>
    %276 = tpu.matmul %272, %252, %cst_188 {dimension_numbers = #tpu.dot_dimension_numbers<[1], [0], [0], [1], [0, 0, 1, 1], [], []>} : vector<1x64xf32>, vector<64x128xf32>, vector<1x128xf32> -> vector<1x128xf32>
    %277 = vector.broadcast %276 : vector<1x128xf32> to vector<4x128xf32>
    %278 = arith.mulf %236, %277 : vector<4x128xf32>
    %cst_189 = arith.constant dense<0.000000e+00> : vector<1x128xf32>
    %279 = tpu.matmul %275, %252, %cst_189 {dimension_numbers = #tpu.dot_dimension_numbers<[1], [0], [0], [1], [0, 0, 1, 1], [], []>} : vector<1x64xf32>, vector<64x128xf32>, vector<1x128xf32> -> vector<1x128xf32>
    %280 = vector.broadcast %279 : vector<1x128xf32> to vector<4x128xf32>
    %281 = arith.addf %278, %280 : vector<4x128xf32>
    %cst_190 = arith.constant 0.000000e+00 : f32
    %282 = vector.broadcast %cst_190 : f32 to vector<4x128xf32>
    %283 = arith.cmpf oge, %281, %282 : vector<4x128xf32>
    %cst_191 = arith.constant 2.000000e-01 : f32
    %284 = vector.broadcast %cst_191 : f32 to vector<4x128xf32>
    %285 = arith.mulf %284, %281 : vector<4x128xf32>
    %286 = arith.select %283, %281, %285 : vector<4x128xi1>, vector<4x128xf32>
    %287 = arith.truncf %286 : vector<4x128xf32> to vector<4x128xbf16>
    %c0_192 = arith.constant 0 : index
    %c0_193 = arith.constant 0 : index
    %c0_194 = arith.constant 0 : index
    %288 = vector.load %arg17[%c0_192, %c0_193, %c0_194] : memref<4x4x4xbf16, #tpu.memory_space<vmem>>, vector<1x4x4xbf16>
    %289 = vector.shape_cast %288 : vector<1x4x4xbf16> to vector<4x4xbf16>
    %cst_195 = arith.constant dense<0.000000e+00> : vector<4x128xf32>
    %290 = tpu.matmul %289, %287, %cst_195 {dimension_numbers = #tpu.dot_dimension_numbers<[1], [0], [0], [1], [0, 0, 1, 1], [], []>} : vector<4x4xbf16>, vector<4x128xbf16>, vector<4x128xf32> -> vector<4x128xf32>
    %291 = arith.truncf %290 : vector<4x128xf32> to vector<4x128xbf16>
    %c0_196 = arith.constant 0 : index
    %c0_197 = arith.constant 0 : index
    %c0_198 = arith.constant 0 : index
    %292 = vector.load %arg18[%c0_196, %c0_197, %c0_198] : memref<4x128x128xbf16, #tpu.memory_space<vmem>>, vector<1x128x128xbf16>
    %293 = vector.shape_cast %292 : vector<1x128x128xbf16> to vector<128x128xbf16>
    %cst_199 = arith.constant dense<0.000000e+00> : vector<4x128xf32>
    %294 = tpu.matmul %291, %293, %cst_199 {dimension_numbers = #tpu.dot_dimension_numbers<[1], [0], [0], [1], [0, 0, 1, 1], [], []>} : vector<4x128xbf16>, vector<128x128xbf16>, vector<4x128xf32> -> vector<4x128xf32>
    %c1_200 = arith.constant 1 : index
    %c0_201 = arith.constant 0 : index
    %c0_202 = arith.constant 0 : index
    %295 = vector.load %arg17[%c1_200, %c0_201, %c0_202] : memref<4x4x4xbf16, #tpu.memory_space<vmem>>, vector<1x4x4xbf16>
    %296 = vector.shape_cast %295 : vector<1x4x4xbf16> to vector<4x4xbf16>
    %cst_203 = arith.constant dense<0.000000e+00> : vector<4x128xf32>
    %297 = tpu.matmul %296, %287, %cst_203 {dimension_numbers = #tpu.dot_dimension_numbers<[1], [0], [0], [1], [0, 0, 1, 1], [], []>} : vector<4x4xbf16>, vector<4x128xbf16>, vector<4x128xf32> -> vector<4x128xf32>
    %298 = arith.truncf %297 : vector<4x128xf32> to vector<4x128xbf16>
    %c1_204 = arith.constant 1 : index
    %c0_205 = arith.constant 0 : index
    %c0_206 = arith.constant 0 : index
    %299 = vector.load %arg18[%c1_204, %c0_205, %c0_206] : memref<4x128x128xbf16, #tpu.memory_space<vmem>>, vector<1x128x128xbf16>
    %300 = vector.shape_cast %299 : vector<1x128x128xbf16> to vector<128x128xbf16>
    %cst_207 = arith.constant dense<0.000000e+00> : vector<4x128xf32>
    %301 = tpu.matmul %298, %300, %cst_207 {dimension_numbers = #tpu.dot_dimension_numbers<[1], [0], [0], [1], [0, 0, 1, 1], [], []>} : vector<4x128xbf16>, vector<128x128xbf16>, vector<4x128xf32> -> vector<4x128xf32>
    %302 = arith.addf %294, %301 : vector<4x128xf32>
    %c2_208 = arith.constant 2 : index
    %c0_209 = arith.constant 0 : index
    %c0_210 = arith.constant 0 : index
    %303 = vector.load %arg17[%c2_208, %c0_209, %c0_210] : memref<4x4x4xbf16, #tpu.memory_space<vmem>>, vector<1x4x4xbf16>
    %304 = vector.shape_cast %303 : vector<1x4x4xbf16> to vector<4x4xbf16>
    %cst_211 = arith.constant dense<0.000000e+00> : vector<4x128xf32>
    %305 = tpu.matmul %304, %287, %cst_211 {dimension_numbers = #tpu.dot_dimension_numbers<[1], [0], [0], [1], [0, 0, 1, 1], [], []>} : vector<4x4xbf16>, vector<4x128xbf16>, vector<4x128xf32> -> vector<4x128xf32>
    %306 = arith.truncf %305 : vector<4x128xf32> to vector<4x128xbf16>
    %c2_212 = arith.constant 2 : index
    %c0_213 = arith.constant 0 : index
    %c0_214 = arith.constant 0 : index
    %307 = vector.load %arg18[%c2_212, %c0_213, %c0_214] : memref<4x128x128xbf16, #tpu.memory_space<vmem>>, vector<1x128x128xbf16>
    %308 = vector.shape_cast %307 : vector<1x128x128xbf16> to vector<128x128xbf16>
    %cst_215 = arith.constant dense<0.000000e+00> : vector<4x128xf32>
    %309 = tpu.matmul %306, %308, %cst_215 {dimension_numbers = #tpu.dot_dimension_numbers<[1], [0], [0], [1], [0, 0, 1, 1], [], []>} : vector<4x128xbf16>, vector<128x128xbf16>, vector<4x128xf32> -> vector<4x128xf32>
    %310 = arith.addf %302, %309 : vector<4x128xf32>
    %c3_216 = arith.constant 3 : index
    %c0_217 = arith.constant 0 : index
    %c0_218 = arith.constant 0 : index
    %311 = vector.load %arg17[%c3_216, %c0_217, %c0_218] : memref<4x4x4xbf16, #tpu.memory_space<vmem>>, vector<1x4x4xbf16>
    %312 = vector.shape_cast %311 : vector<1x4x4xbf16> to vector<4x4xbf16>
    %cst_219 = arith.constant dense<0.000000e+00> : vector<4x128xf32>
    %313 = tpu.matmul %312, %287, %cst_219 {dimension_numbers = #tpu.dot_dimension_numbers<[1], [0], [0], [1], [0, 0, 1, 1], [], []>} : vector<4x4xbf16>, vector<4x128xbf16>, vector<4x128xf32> -> vector<4x128xf32>
    %314 = arith.truncf %313 : vector<4x128xf32> to vector<4x128xbf16>
    %c3_220 = arith.constant 3 : index
    %c0_221 = arith.constant 0 : index
    %c0_222 = arith.constant 0 : index
    %315 = vector.load %arg18[%c3_220, %c0_221, %c0_222] : memref<4x128x128xbf16, #tpu.memory_space<vmem>>, vector<1x128x128xbf16>
    %316 = vector.shape_cast %315 : vector<1x128x128xbf16> to vector<128x128xbf16>
    %cst_223 = arith.constant dense<0.000000e+00> : vector<4x128xf32>
    %317 = tpu.matmul %314, %316, %cst_223 {dimension_numbers = #tpu.dot_dimension_numbers<[1], [0], [0], [1], [0, 0, 1, 1], [], []>} : vector<4x128xbf16>, vector<128x128xbf16>, vector<4x128xf32> -> vector<4x128xf32>
    %318 = arith.addf %310, %317 : vector<4x128xf32>
    %319 = tpu.iota {dimensions = array<i32: 0>} : vector<128x64xi32>
    %320 = tpu.iota {dimensions = array<i32: 1>} : vector<128x64xi32>
    %c63_i32_224 = arith.constant 63 : i32
    %321 = vector.broadcast %c63_i32_224 : i32 to vector<128x64xi32>
    %322 = arith.andi %319, %321 : vector<128x64xi32>
    %323 = arith.cmpi eq, %322, %320 : vector<128x64xi32>
    %cst_225 = arith.constant 1.000000e+00 : f32
    %cst_226 = arith.constant 0.000000e+00 : f32
    %324 = vector.broadcast %cst_225 : f32 to vector<128x64xf32>
    %325 = vector.broadcast %cst_226 : f32 to vector<128x64xf32>
    %326 = arith.select %323, %324, %325 : vector<128x64xi1>, vector<128x64xf32>
    %327 = tpu.iota {dimensions = array<i32: 0>} : vector<64x128xi32>
    %328 = tpu.iota {dimensions = array<i32: 1>} : vector<64x128xi32>
    %c63_i32_227 = arith.constant 63 : i32
    %329 = vector.broadcast %c63_i32_227 : i32 to vector<64x128xi32>
    %330 = arith.andi %328, %329 : vector<64x128xi32>
    %331 = arith.cmpi eq, %330, %327 : vector<64x128xi32>
    %cst_228 = arith.constant 1.000000e+00 : f32
    %cst_229 = arith.constant 0.000000e+00 : f32
    %332 = vector.broadcast %cst_228 : f32 to vector<64x128xf32>
    %333 = vector.broadcast %cst_229 : f32 to vector<64x128xf32>
    %334 = arith.select %331, %332, %333 : vector<64x128xi1>, vector<64x128xf32>
    %cst_230 = arith.constant dense<0.000000e+00> : vector<128xf32>
    %335 = vector.multi_reduction <add>, %318, %cst_230 [0] : vector<4x128xf32> to vector<128xf32>
    %336 = vector.shape_cast %335 : vector<128xf32> to vector<1x128xf32>
    %337 = arith.mulf %318, %318 : vector<4x128xf32>
    %cst_231 = arith.constant dense<0.000000e+00> : vector<128xf32>
    %338 = vector.multi_reduction <add>, %337, %cst_231 [0] : vector<4x128xf32> to vector<128xf32>
    %339 = vector.shape_cast %338 : vector<128xf32> to vector<1x128xf32>
    %cst_232 = arith.constant dense<0.000000e+00> : vector<1x64xf32>
    %340 = tpu.matmul %336, %326, %cst_232 {dimension_numbers = #tpu.dot_dimension_numbers<[1], [0], [0], [1], [0, 0, 1, 1], [], []>} : vector<1x128xf32>, vector<128x64xf32>, vector<1x64xf32> -> vector<1x64xf32>
    %cst_233 = arith.constant 8.000000e+00 : f32
    %341 = vector.broadcast %cst_233 : f32 to vector<1x64xf32>
    %342 = arith.divf %340, %341 : vector<1x64xf32>
    %cst_234 = arith.constant dense<0.000000e+00> : vector<1x64xf32>
    %343 = tpu.matmul %339, %326, %cst_234 {dimension_numbers = #tpu.dot_dimension_numbers<[1], [0], [0], [1], [0, 0, 1, 1], [], []>} : vector<1x128xf32>, vector<128x64xf32>, vector<1x64xf32> -> vector<1x64xf32>
    %cst_235 = arith.constant 8.000000e+00 : f32
    %344 = vector.broadcast %cst_235 : f32 to vector<1x64xf32>
    %345 = arith.divf %343, %344 : vector<1x64xf32>
    %346 = arith.mulf %342, %342 : vector<1x64xf32>
    %347 = arith.subf %345, %346 : vector<1x64xf32>
    %cst_236 = arith.constant 0.000000e+00 : f32
    %348 = vector.broadcast %cst_236 : f32 to vector<1x64xf32>
    %349 = arith.maximumf %347, %348 : vector<1x64xf32>
    %c0_237 = arith.constant 0 : index
    %c0_238 = arith.constant 0 : index
    %350 = vector.load %arg19[%c0_237, %c0_238] : memref<1x64xf32, #tpu.memory_space<vmem>>, vector<1x64xf32>
    %cst_239 = arith.constant 9.99999974E-6 : f32
    %351 = vector.broadcast %cst_239 : f32 to vector<1x64xf32>
    %352 = arith.addf %349, %351 : vector<1x64xf32>
    %353 = math.rsqrt %352 : vector<1x64xf32>
    %354 = arith.mulf %350, %353 : vector<1x64xf32>
    %c0_240 = arith.constant 0 : index
    %c0_241 = arith.constant 0 : index
    %355 = vector.load %arg20[%c0_240, %c0_241] : memref<1x64xf32, #tpu.memory_space<vmem>>, vector<1x64xf32>
    %356 = arith.mulf %342, %354 : vector<1x64xf32>
    %357 = arith.subf %355, %356 : vector<1x64xf32>
    %cst_242 = arith.constant dense<0.000000e+00> : vector<1x128xf32>
    %358 = tpu.matmul %354, %334, %cst_242 {dimension_numbers = #tpu.dot_dimension_numbers<[1], [0], [0], [1], [0, 0, 1, 1], [], []>} : vector<1x64xf32>, vector<64x128xf32>, vector<1x128xf32> -> vector<1x128xf32>
    %359 = vector.broadcast %358 : vector<1x128xf32> to vector<4x128xf32>
    %360 = arith.mulf %318, %359 : vector<4x128xf32>
    %cst_243 = arith.constant dense<0.000000e+00> : vector<1x128xf32>
    %361 = tpu.matmul %357, %334, %cst_243 {dimension_numbers = #tpu.dot_dimension_numbers<[1], [0], [0], [1], [0, 0, 1, 1], [], []>} : vector<1x64xf32>, vector<64x128xf32>, vector<1x128xf32> -> vector<1x128xf32>
    %362 = vector.broadcast %361 : vector<1x128xf32> to vector<4x128xf32>
    %363 = arith.addf %360, %362 : vector<4x128xf32>
    %cst_244 = arith.constant 0.000000e+00 : f32
    %364 = vector.broadcast %cst_244 : f32 to vector<4x128xf32>
    %365 = arith.cmpf oge, %363, %364 : vector<4x128xf32>
    %cst_245 = arith.constant 2.000000e-01 : f32
    %366 = vector.broadcast %cst_245 : f32 to vector<4x128xf32>
    %367 = arith.mulf %366, %363 : vector<4x128xf32>
    %368 = arith.select %365, %363, %367 : vector<4x128xi1>, vector<4x128xf32>
    %369 = arith.truncf %368 : vector<4x128xf32> to vector<4x128xbf16>
    %c0_246 = arith.constant 0 : index
    %c0_247 = arith.constant 0 : index
    %c0_248 = arith.constant 0 : index
    %370 = vector.load %arg21[%c0_246, %c0_247, %c0_248] : memref<4x4x4xbf16, #tpu.memory_space<vmem>>, vector<1x4x4xbf16>
    %371 = vector.shape_cast %370 : vector<1x4x4xbf16> to vector<4x4xbf16>
    %cst_249 = arith.constant dense<0.000000e+00> : vector<4x128xf32>
    %372 = tpu.matmul %371, %369, %cst_249 {dimension_numbers = #tpu.dot_dimension_numbers<[1], [0], [0], [1], [0, 0, 1, 1], [], []>} : vector<4x4xbf16>, vector<4x128xbf16>, vector<4x128xf32> -> vector<4x128xf32>
    %373 = arith.truncf %372 : vector<4x128xf32> to vector<4x128xbf16>
    %c0_250 = arith.constant 0 : index
    %c0_251 = arith.constant 0 : index
    %c0_252 = arith.constant 0 : index
    %374 = vector.load %arg22[%c0_250, %c0_251, %c0_252] : memref<4x128x2xbf16, #tpu.memory_space<vmem>>, vector<1x128x2xbf16>
    %375 = vector.shape_cast %374 : vector<1x128x2xbf16> to vector<128x2xbf16>
    %cst_253 = arith.constant dense<0.000000e+00> : vector<4x2xf32>
    %376 = tpu.matmul %373, %375, %cst_253 {dimension_numbers = #tpu.dot_dimension_numbers<[1], [0], [0], [1], [0, 0, 1, 1], [], []>} : vector<4x128xbf16>, vector<128x2xbf16>, vector<4x2xf32> -> vector<4x2xf32>
    %c1_254 = arith.constant 1 : index
    %c0_255 = arith.constant 0 : index
    %c0_256 = arith.constant 0 : index
    %377 = vector.load %arg21[%c1_254, %c0_255, %c0_256] : memref<4x4x4xbf16, #tpu.memory_space<vmem>>, vector<1x4x4xbf16>
    %378 = vector.shape_cast %377 : vector<1x4x4xbf16> to vector<4x4xbf16>
    %cst_257 = arith.constant dense<0.000000e+00> : vector<4x128xf32>
    %379 = tpu.matmul %378, %369, %cst_257 {dimension_numbers = #tpu.dot_dimension_numbers<[1], [0], [0], [1], [0, 0, 1, 1], [], []>} : vector<4x4xbf16>, vector<4x128xbf16>, vector<4x128xf32> -> vector<4x128xf32>
    %380 = arith.truncf %379 : vector<4x128xf32> to vector<4x128xbf16>
    %c1_258 = arith.constant 1 : index
    %c0_259 = arith.constant 0 : index
    %c0_260 = arith.constant 0 : index
    %381 = vector.load %arg22[%c1_258, %c0_259, %c0_260] : memref<4x128x2xbf16, #tpu.memory_space<vmem>>, vector<1x128x2xbf16>
    %382 = vector.shape_cast %381 : vector<1x128x2xbf16> to vector<128x2xbf16>
    %cst_261 = arith.constant dense<0.000000e+00> : vector<4x2xf32>
    %383 = tpu.matmul %380, %382, %cst_261 {dimension_numbers = #tpu.dot_dimension_numbers<[1], [0], [0], [1], [0, 0, 1, 1], [], []>} : vector<4x128xbf16>, vector<128x2xbf16>, vector<4x2xf32> -> vector<4x2xf32>
    %384 = arith.addf %376, %383 : vector<4x2xf32>
    %c2_262 = arith.constant 2 : index
    %c0_263 = arith.constant 0 : index
    %c0_264 = arith.constant 0 : index
    %385 = vector.load %arg21[%c2_262, %c0_263, %c0_264] : memref<4x4x4xbf16, #tpu.memory_space<vmem>>, vector<1x4x4xbf16>
    %386 = vector.shape_cast %385 : vector<1x4x4xbf16> to vector<4x4xbf16>
    %cst_265 = arith.constant dense<0.000000e+00> : vector<4x128xf32>
    %387 = tpu.matmul %386, %369, %cst_265 {dimension_numbers = #tpu.dot_dimension_numbers<[1], [0], [0], [1], [0, 0, 1, 1], [], []>} : vector<4x4xbf16>, vector<4x128xbf16>, vector<4x128xf32> -> vector<4x128xf32>
    %388 = arith.truncf %387 : vector<4x128xf32> to vector<4x128xbf16>
    %c2_266 = arith.constant 2 : index
    %c0_267 = arith.constant 0 : index
    %c0_268 = arith.constant 0 : index
    %389 = vector.load %arg22[%c2_266, %c0_267, %c0_268] : memref<4x128x2xbf16, #tpu.memory_space<vmem>>, vector<1x128x2xbf16>
    %390 = vector.shape_cast %389 : vector<1x128x2xbf16> to vector<128x2xbf16>
    %cst_269 = arith.constant dense<0.000000e+00> : vector<4x2xf32>
    %391 = tpu.matmul %388, %390, %cst_269 {dimension_numbers = #tpu.dot_dimension_numbers<[1], [0], [0], [1], [0, 0, 1, 1], [], []>} : vector<4x128xbf16>, vector<128x2xbf16>, vector<4x2xf32> -> vector<4x2xf32>
    %392 = arith.addf %384, %391 : vector<4x2xf32>
    %c3_270 = arith.constant 3 : index
    %c0_271 = arith.constant 0 : index
    %c0_272 = arith.constant 0 : index
    %393 = vector.load %arg21[%c3_270, %c0_271, %c0_272] : memref<4x4x4xbf16, #tpu.memory_space<vmem>>, vector<1x4x4xbf16>
    %394 = vector.shape_cast %393 : vector<1x4x4xbf16> to vector<4x4xbf16>
    %cst_273 = arith.constant dense<0.000000e+00> : vector<4x128xf32>
    %395 = tpu.matmul %394, %369, %cst_273 {dimension_numbers = #tpu.dot_dimension_numbers<[1], [0], [0], [1], [0, 0, 1, 1], [], []>} : vector<4x4xbf16>, vector<4x128xbf16>, vector<4x128xf32> -> vector<4x128xf32>
    %396 = arith.truncf %395 : vector<4x128xf32> to vector<4x128xbf16>
    %c3_274 = arith.constant 3 : index
    %c0_275 = arith.constant 0 : index
    %c0_276 = arith.constant 0 : index
    %397 = vector.load %arg22[%c3_274, %c0_275, %c0_276] : memref<4x128x2xbf16, #tpu.memory_space<vmem>>, vector<1x128x2xbf16>
    %398 = vector.shape_cast %397 : vector<1x128x2xbf16> to vector<128x2xbf16>
    %cst_277 = arith.constant dense<0.000000e+00> : vector<4x2xf32>
    %399 = tpu.matmul %396, %398, %cst_277 {dimension_numbers = #tpu.dot_dimension_numbers<[1], [0], [0], [1], [0, 0, 1, 1], [], []>} : vector<4x128xbf16>, vector<128x2xbf16>, vector<4x2xf32> -> vector<4x2xf32>
    %400 = arith.addf %392, %399 : vector<4x2xf32>
    %c0_278 = arith.constant 0 : index
    %c0_279 = arith.constant 0 : index
    %401 = vector.load %arg23[%c0_278, %c0_279] : memref<1x2xf32, #tpu.memory_space<vmem>>, vector<1x2xf32>
    %402 = vector.broadcast %401 : vector<1x2xf32> to vector<4x2xf32>
    %403 = arith.addf %400, %402 : vector<4x2xf32>
    %404 = arith.negf %403 : vector<4x2xf32>
    %405 = math.exp %404 : vector<4x2xf32>
    %cst_280 = arith.constant 1.000000e+00 : f32
    %406 = vector.broadcast %cst_280 : f32 to vector<4x2xf32>
    %407 = arith.addf %406, %405 : vector<4x2xf32>
    %408 = arith.divf %406, %407 : vector<4x2xf32>
    %c0_281 = arith.constant 0 : index
    %c0_282 = arith.constant 0 : index
    %409 = vector.load %arg24[%c0_281, %c0_282] : memref<4x1024xf32, #tpu.memory_space<vmem>>, vector<4x1024xf32>
    %410 = vector.extract_strided_slice %408 {offsets = [0, 0], sizes = [1, 2], strides = [1, 1]} : vector<4x2xf32> to vector<1x2xf32>
    %411 = vector.extract_strided_slice %409 {offsets = [0, 0], sizes = [2, 1024], strides = [1, 1]} : vector<4x1024xf32> to vector<2x1024xf32>
    %cst_283 = arith.constant dense<0.000000e+00> : vector<1x1024xf32>
    %412 = tpu.matmul %410, %411, %cst_283 {dimension_numbers = #tpu.dot_dimension_numbers<[1], [0], [0], [1], [0, 0, 1, 1], [], []>} : vector<1x2xf32>, vector<2x1024xf32>, vector<1x1024xf32> -> vector<1x1024xf32>
    %413 = vector.extract_strided_slice %408 {offsets = [1, 0], sizes = [1, 2], strides = [1, 1]} : vector<4x2xf32> to vector<1x2xf32>
    %414 = vector.extract_strided_slice %409 {offsets = [2, 0], sizes = [2, 1024], strides = [1, 1]} : vector<4x1024xf32> to vector<2x1024xf32>
    %cst_284 = arith.constant dense<0.000000e+00> : vector<1x1024xf32>
    %415 = tpu.matmul %413, %414, %cst_284 {dimension_numbers = #tpu.dot_dimension_numbers<[1], [0], [0], [1], [0, 0, 1, 1], [], []>} : vector<1x2xf32>, vector<2x1024xf32>, vector<1x1024xf32> -> vector<1x1024xf32>
    %416 = arith.addf %412, %415 : vector<1x1024xf32>
    %c0_285 = arith.constant 0 : index
    %c0_286 = arith.constant 0 : index
    %417 = vector.load %arg25[%c0_285, %c0_286] : memref<1x1024xf32, #tpu.memory_space<vmem>>, vector<1x1024xf32>
    %418 = arith.addf %416, %417 : vector<1x1024xf32>
    %419 = math.tanh %418 : vector<1x1024xf32>
    %c0_287 = arith.constant 0 : index
    %c0_288 = arith.constant 0 : index
    %420 = vector.load %arg26[%c0_287, %c0_288] : memref<1024x1xf32, #tpu.memory_space<vmem>>, vector<1024x1xf32>
    %cst_289 = arith.constant dense<0.000000e+00> : vector<1x1xf32>
    %421 = tpu.matmul %419, %420, %cst_289 {dimension_numbers = #tpu.dot_dimension_numbers<[1], [0], [0], [1], [0, 0, 1, 1], [], []>} : vector<1x1024xf32>, vector<1024x1xf32>, vector<1x1xf32> -> vector<1x1xf32>
    %c0_290 = arith.constant 0 : index
    %c0_291 = arith.constant 0 : index
    %422 = vector.load %arg27[%c0_290, %c0_291] : memref<1x1xf32, #tpu.memory_space<vmem>>, vector<1x1xf32>
    %423 = arith.addf %421, %422 : vector<1x1xf32>
    %424 = arith.negf %423 : vector<1x1xf32>
    %425 = math.exp %424 : vector<1x1xf32>
    %cst_292 = arith.constant 1.000000e+00 : f32
    %426 = vector.broadcast %cst_292 : f32 to vector<1x1xf32>
    %427 = arith.addf %426, %425 : vector<1x1xf32>
    %428 = arith.divf %426, %427 : vector<1x1xf32>
    %c0_293 = arith.constant 0 : index
    %c0_294 = arith.constant 0 : index
    %429 = vector.load %arg28[%c0_293, %c0_294] : memref<2x1xf32, #tpu.memory_space<vmem>>, vector<1x1xf32>
    tpu.vector_store %arg28[%c0_293, %c0_294], %428 {strides = array<i32>} : memref<2x1xf32, #tpu.memory_space<vmem>>, vector<1x1xf32>,
    %430 = vector.extract_strided_slice %408 {offsets = [2, 0], sizes = [1, 2], strides = [1, 1]} : vector<4x2xf32> to vector<1x2xf32>
    %431 = vector.extract_strided_slice %409 {offsets = [0, 0], sizes = [2, 1024], strides = [1, 1]} : vector<4x1024xf32> to vector<2x1024xf32>
    %cst_295 = arith.constant dense<0.000000e+00> : vector<1x1024xf32>
    %432 = tpu.matmul %430, %431, %cst_295 {dimension_numbers = #tpu.dot_dimension_numbers<[1], [0], [0], [1], [0, 0, 1, 1], [], []>} : vector<1x2xf32>, vector<2x1024xf32>, vector<1x1024xf32> -> vector<1x1024xf32>
    %433 = vector.extract_strided_slice %408 {offsets = [3, 0], sizes = [1, 2], strides = [1, 1]} : vector<4x2xf32> to vector<1x2xf32>
    %434 = vector.extract_strided_slice %409 {offsets = [2, 0], sizes = [2, 1024], strides = [1, 1]} : vector<4x1024xf32> to vector<2x1024xf32>
    %cst_296 = arith.constant dense<0.000000e+00> : vector<1x1024xf32>
    %435 = tpu.matmul %433, %434, %cst_296 {dimension_numbers = #tpu.dot_dimension_numbers<[1], [0], [0], [1], [0, 0, 1, 1], [], []>} : vector<1x2xf32>, vector<2x1024xf32>, vector<1x1024xf32> -> vector<1x1024xf32>
    %436 = arith.addf %432, %435 : vector<1x1024xf32>
    %c0_297 = arith.constant 0 : index
    %c0_298 = arith.constant 0 : index
    %437 = vector.load %arg25[%c0_297, %c0_298] : memref<1x1024xf32, #tpu.memory_space<vmem>>, vector<1x1024xf32>
    %438 = arith.addf %436, %437 : vector<1x1024xf32>
    %439 = math.tanh %438 : vector<1x1024xf32>
    %c0_299 = arith.constant 0 : index
    %c0_300 = arith.constant 0 : index
    %440 = vector.load %arg26[%c0_299, %c0_300] : memref<1024x1xf32, #tpu.memory_space<vmem>>, vector<1024x1xf32>
    %cst_301 = arith.constant dense<0.000000e+00> : vector<1x1xf32>
    %441 = tpu.matmul %439, %440, %cst_301 {dimension_numbers = #tpu.dot_dimension_numbers<[1], [0], [0], [1], [0, 0, 1, 1], [], []>} : vector<1x1024xf32>, vector<1024x1xf32>, vector<1x1xf32> -> vector<1x1xf32>
    %c0_302 = arith.constant 0 : index
    %c0_303 = arith.constant 0 : index
    %442 = vector.load %arg27[%c0_302, %c0_303] : memref<1x1xf32, #tpu.memory_space<vmem>>, vector<1x1xf32>
    %443 = arith.addf %441, %442 : vector<1x1xf32>
    %444 = arith.negf %443 : vector<1x1xf32>
    %445 = math.exp %444 : vector<1x1xf32>
    %cst_304 = arith.constant 1.000000e+00 : f32
    %446 = vector.broadcast %cst_304 : f32 to vector<1x1xf32>
    %447 = arith.addf %446, %445 : vector<1x1xf32>
    %448 = arith.divf %446, %447 : vector<1x1xf32>
    %c1_305 = arith.constant 1 : index
    %c0_306 = arith.constant 0 : index
    %449 = vector.load %arg28[%c1_305, %c0_306] : memref<2x1xf32, #tpu.memory_space<vmem>>, vector<1x1xf32>
    tpu.vector_store %arg28[%c1_305, %c0_306], %448 {strides = array<i32>} : memref<2x1xf32, #tpu.memory_space<vmem>>, vector<1x1xf32>,
    return
  }
  func.func @transform_0(%arg0: i32) -> (i32, i32) {
    %c0_i32 = arith.constant 0 : i32
    %c0_i32_0 = arith.constant 0 : i32
    %c0_i32_1 = arith.constant 0 : i32
    return %c0_i32, %c0_i32_0 : i32, i32
  }
  func.func @transform_1(%arg0: i32) -> (i32, i32, i32) {
    %c0_i32 = arith.constant 0 : i32
    %c0_i32_0 = arith.constant 0 : i32
    %c0_i32_1 = arith.constant 0 : i32
    %c0_i32_2 = arith.constant 0 : i32
    return %c0_i32, %c0_i32_0, %c0_i32_1 : i32, i32, i32
  }
  func.func @transform_2(%arg0: i32) -> (i32, i32, i32) {
    %c0_i32 = arith.constant 0 : i32
    %c0_i32_0 = arith.constant 0 : i32
    %c0_i32_1 = arith.constant 0 : i32
    %c0_i32_2 = arith.constant 0 : i32
    return %c0_i32, %c0_i32_0, %c0_i32_1 : i32, i32, i32
  }
  func.func @transform_3(%arg0: i32) -> (i32, i32) {
    %c0_i32 = arith.constant 0 : i32
    %c0_i32_0 = arith.constant 0 : i32
    %c0_i32_1 = arith.constant 0 : i32
    return %c0_i32, %c0_i32_0 : i32, i32
  }
  func.func @transform_4(%arg0: i32) -> (i32, i32, i32) {
    %c0_i32 = arith.constant 0 : i32
    %c0_i32_0 = arith.constant 0 : i32
    %c0_i32_1 = arith.constant 0 : i32
    %c0_i32_2 = arith.constant 0 : i32
    return %c0_i32, %c0_i32_0, %c0_i32_1 : i32, i32, i32
  }
  func.func @transform_5(%arg0: i32) -> (i32, i32, i32) {
    %c0_i32 = arith.constant 0 : i32
    %c0_i32_0 = arith.constant 0 : i32
    %c0_i32_1 = arith.constant 0 : i32
    %c0_i32_2 = arith.constant 0 : i32
    return %c0_i32, %c0_i32_0, %c0_i32_1 : i32, i32, i32
  }
  func.func @transform_6(%arg0: i32) -> (i32, i32) {
    %c0_i32 = arith.constant 0 : i32
    %c0_i32_0 = arith.constant 0 : i32
    %c0_i32_1 = arith.constant 0 : i32
    return %c0_i32, %c0_i32_0 : i32, i32
  }
  func.func @transform_7(%arg0: i32) -> (i32, i32) {
    %c0_i32 = arith.constant 0 : i32
    %c0_i32_0 = arith.constant 0 : i32
    %c0_i32_1 = arith.constant 0 : i32
    return %c0_i32, %c0_i32_0 : i32, i32
  }
  func.func @transform_8(%arg0: i32) -> (i32, i32, i32) {
    %c0_i32 = arith.constant 0 : i32
    %c0_i32_0 = arith.constant 0 : i32
    %c0_i32_1 = arith.constant 0 : i32
    %c0_i32_2 = arith.constant 0 : i32
    return %c0_i32, %c0_i32_0, %c0_i32_1 : i32, i32, i32
  }
  func.func @transform_9(%arg0: i32) -> (i32, i32, i32) {
    %c0_i32 = arith.constant 0 : i32
    %c0_i32_0 = arith.constant 0 : i32
    %c0_i32_1 = arith.constant 0 : i32
    %c0_i32_2 = arith.constant 0 : i32
    return %c0_i32, %c0_i32_0, %c0_i32_1 : i32, i32, i32
  }
  func.func @transform_10(%arg0: i32) -> (i32, i32) {
    %c0_i32 = arith.constant 0 : i32
    %c0_i32_0 = arith.constant 0 : i32
    %c0_i32_1 = arith.constant 0 : i32
    return %c0_i32, %c0_i32_0 : i32, i32
  }
  func.func @transform_11(%arg0: i32) -> (i32, i32) {
    %c0_i32 = arith.constant 0 : i32
    %c0_i32_0 = arith.constant 0 : i32
    %c0_i32_1 = arith.constant 0 : i32
    return %c0_i32, %c0_i32_0 : i32, i32
  }
  func.func @transform_12(%arg0: i32) -> (i32, i32, i32) {
    %c0_i32 = arith.constant 0 : i32
    %c0_i32_0 = arith.constant 0 : i32
    %c0_i32_1 = arith.constant 0 : i32
    %c0_i32_2 = arith.constant 0 : i32
    return %c0_i32, %c0_i32_0, %c0_i32_1 : i32, i32, i32
  }
  func.func @transform_13(%arg0: i32) -> (i32, i32, i32) {
    %c0_i32 = arith.constant 0 : i32
    %c0_i32_0 = arith.constant 0 : i32
    %c0_i32_1 = arith.constant 0 : i32
    %c0_i32_2 = arith.constant 0 : i32
    return %c0_i32, %c0_i32_0, %c0_i32_1 : i32, i32, i32
  }
  func.func @transform_14(%arg0: i32) -> (i32, i32) {
    %c0_i32 = arith.constant 0 : i32
    %c0_i32_0 = arith.constant 0 : i32
    %c0_i32_1 = arith.constant 0 : i32
    return %c0_i32, %c0_i32_0 : i32, i32
  }
  func.func @transform_15(%arg0: i32) -> (i32, i32) {
    %c0_i32 = arith.constant 0 : i32
    %c0_i32_0 = arith.constant 0 : i32
    %c0_i32_1 = arith.constant 0 : i32
    return %c0_i32, %c0_i32_0 : i32, i32
  }
  func.func @transform_16(%arg0: i32) -> (i32, i32, i32) {
    %c0_i32 = arith.constant 0 : i32
    %c0_i32_0 = arith.constant 0 : i32
    %c0_i32_1 = arith.constant 0 : i32
    %c0_i32_2 = arith.constant 0 : i32
    return %c0_i32, %c0_i32_0, %c0_i32_1 : i32, i32, i32
  }
  func.func @transform_17(%arg0: i32) -> (i32, i32, i32) {
    %c0_i32 = arith.constant 0 : i32
    %c0_i32_0 = arith.constant 0 : i32
    %c0_i32_1 = arith.constant 0 : i32
    %c0_i32_2 = arith.constant 0 : i32
    return %c0_i32, %c0_i32_0, %c0_i32_1 : i32, i32, i32
  }
  func.func @transform_18(%arg0: i32) -> (i32, i32) {
    %c0_i32 = arith.constant 0 : i32
    %c0_i32_0 = arith.constant 0 : i32
    %c0_i32_1 = arith.constant 0 : i32
    return %c0_i32, %c0_i32_0 : i32, i32
  }
  func.func @transform_19(%arg0: i32) -> (i32, i32) {
    %c0_i32 = arith.constant 0 : i32
    %c0_i32_0 = arith.constant 0 : i32
    %c0_i32_1 = arith.constant 0 : i32
    return %c0_i32, %c0_i32_0 : i32, i32
  }
  func.func @transform_20(%arg0: i32) -> (i32, i32, i32) {
    %c0_i32 = arith.constant 0 : i32
    %c0_i32_0 = arith.constant 0 : i32
    %c0_i32_1 = arith.constant 0 : i32
    %c0_i32_2 = arith.constant 0 : i32
    return %c0_i32, %c0_i32_0, %c0_i32_1 : i32, i32, i32
  }
  func.func @transform_21(%arg0: i32) -> (i32, i32, i32) {
    %c0_i32 = arith.constant 0 : i32
    %c0_i32_0 = arith.constant 0 : i32
    %c0_i32_1 = arith.constant 0 : i32
    %c0_i32_2 = arith.constant 0 : i32
    return %c0_i32, %c0_i32_0, %c0_i32_1 : i32, i32, i32
  }
  func.func @transform_22(%arg0: i32) -> (i32, i32) {
    %c0_i32 = arith.constant 0 : i32
    %c0_i32_0 = arith.constant 0 : i32
    %c0_i32_1 = arith.constant 0 : i32
    return %c0_i32, %c0_i32_0 : i32, i32
  }
  func.func @transform_23(%arg0: i32) -> (i32, i32) {
    %c0_i32 = arith.constant 0 : i32
    %c0_i32_0 = arith.constant 0 : i32
    %c0_i32_1 = arith.constant 0 : i32
    return %c0_i32, %c0_i32_0 : i32, i32
  }
  func.func @transform_24(%arg0: i32) -> (i32, i32) {
    %c0_i32 = arith.constant 0 : i32
    %c0_i32_0 = arith.constant 0 : i32
    %c0_i32_1 = arith.constant 0 : i32
    return %c0_i32, %c0_i32_0 : i32, i32
  }
  func.func @transform_25(%arg0: i32) -> (i32, i32) {
    %c0_i32 = arith.constant 0 : i32
    %c0_i32_0 = arith.constant 0 : i32
    %c0_i32_1 = arith.constant 0 : i32
    return %c0_i32, %c0_i32_0 : i32, i32
  }
  func.func @transform_26(%arg0: i32) -> (i32, i32) {
    %c0_i32 = arith.constant 0 : i32
    %c0_i32_0 = arith.constant 0 : i32
    %c0_i32_1 = arith.constant 0 : i32
    return %c0_i32, %c0_i32_0 : i32, i32
  }
  func.func @transform_27(%arg0: i32) -> (i32, i32) {
    %c0_i32 = arith.constant 0 : i32
    %c0_i32_0 = arith.constant 0 : i32
    %c0_i32_1 = arith.constant 0 : i32
    return %c0_i32, %c0_i32_0 : i32, i32
  }
}

</mosaic_0001>

<llo_original>
// kernel: tile.13
$region0: #{tile.13}
  #allocation0 [shape = 's32[1]{0}', space=sflag, size = 0x4, scoped, tag = 'scoped memory for tile.13']
  %s0 = inlined_call_operand.vmem [shape: f32[8], index: 0, kind: input, shape index: {}]
  %s1 = inlined_call_operand.vmem [shape: f32[16,8], index: 1, kind: output, shape index: {}]
  // Predicated region
  $region2: #{tile.13} parent=0 // pred_check
    _
  $region3: #{tile.13} parent=0 // pred_check_branch
    %3 = sbr.rel (0) target = $region5
  $region4: #{tile.13} parent=0 // pred_region
    _
  $region5: #{tile.13} parent=0 // pred_fallthru
    _
  %v4 = vld [vmem:[%s0] ss:$0 sm:$0xff]
  %5 = vst [vmem:[%s1] sm:$0xff] %v4
  %s6 = scalar_lea.vmem %s1, 8
  %7 = vst [vmem:[%s6] sm:$0xff] %v4

// kernel: tile.14
$region0: #{tile.14}
  %s0 = inlined_call_operand.vmem [shape: f32[16,8], index: 0, kind: input, shape index: {}]
  %s1 = inlined_call_operand.vmem [shape: f32[1,128], index: 1, kind: output, shape index: {}]
  $region1: #{tile.14} parent=0
    #allocation0 [shape = 'u8[4096]{0}', space=vmem, size = 0x1000, scoped, tag = 'scoped mem for output reshape']
    %v2 = vld [vmem:[%s0] sm:$0x1]
    %vm3 = vcmask 64512
    %4 = vst.msk [vmem:[#allocation0] sm:$0x1] %vm3, %v2
    %s5 = scalar_lea.vmem %s0, 15
    %v6 = vld [vmem:[%s5] sm:$0x1]
    %7 = vrot.lane.b32.xlu0 %v6, 120
    %v8 = vpop.permute.xlu0 %7
    %vm9 = vcmask 1048512
    %10 = vst.msk [vmem:[#allocation0] sm:$0x1] %vm9, %v8
    %s11 = scalar_lea.vmem %s0, 14
    %v12 = vld [vmem:[%s11] sm:$0x1]
    %13 = vrot.lane.b32.xlu0 %v12, 112
    %v14 = vpop.permute.xlu0 %13
    %vm15 = vcmask 982912
    %16 = vst.msk [vmem:[#allocation0] sm:$0x1] %vm15, %v14
    %s17 = scalar_lea.vmem %s0, 13
    %v18 = vld [vmem:[%s17] sm:$0x1]
    %19 = vrot.lane.b32.xlu0 %v18, 104
    %v20 = vpop.permute.xlu0 %19
    %vm21 = vcmask 917312
    %22 = vst.msk [vmem:[#allocation0] sm:$0x1] %vm21, %v20
    %s23 = scalar_lea.vmem %s0, 12
    %v24 = vld [vmem:[%s23] sm:$0x1]
    %25 = vrot.lane.b32.xlu0 %v24, 96
    %v26 = vpop.permute.xlu0 %25
    %vm27 = vcmask 851712
    %28 = vst.msk [vmem:[#allocation0] sm:$0x1] %vm27, %v26
    %s29 = scalar_lea.vmem %s0, 11
    %v30 = vld [vmem:[%s29] sm:$0x1]
    %31 = vrot.lane.b32.xlu0 %v30, 88
    %v32 = vpop.permute.xlu0 %31
    %vm33 = vcmask 786112
    %34 = vst.msk [vmem:[#allocation0] sm:$0x1] %vm33, %v32
    %s35 = scalar_lea.vmem %s0, 10
    %v36 = vld [vmem:[%s35] sm:$0x1]
    %37 = vrot.lane.b32.xlu0 %v36, 80
    %v38 = vpop.permute.xlu0 %37
    %vm39 = vcmask 720512
    %40 = vst.msk [vmem:[#allocation0] sm:$0x1] %vm39, %v38
    %s41 = scalar_lea.vmem %s0, 9
    %v42 = vld [vmem:[%s41] sm:$0x1]
    %43 = vrot.lane.b32.xlu0 %v42, 72
    %v44 = vpop.permute.xlu0 %43
    %vm45 = vcmask 654912
    %46 = vst.msk [vmem:[#allocation0] sm:$0x1] %vm45, %v44
    %s47 = scalar_lea.vmem %s0, 8
    %v48 = vld [vmem:[%s47] sm:$0x1]
    %49 = vrot.lane.b32.xlu0 %v48, 64
    %v50 = vpop.permute.xlu0 %49
    %vm51 = vcmask 589312
    %52 = vst.msk [vmem:[#allocation0] sm:$0x1] %vm51, %v50
    %s53 = scalar_lea.vmem %s0, 7
    %v54 = vld [vmem:[%s53] sm:$0x1]
    %55 = vrot.lane.b32.xlu0 %v54, 56
    %v56 = vpop.permute.xlu0 %55
    %vm57 = vcmask 523712
    %58 = vst.msk [vmem:[#allocation0] sm:$0x1] %vm57, %v56
    %s59 = scalar_lea.vmem %s0, 6
    %v60 = vld [vmem:[%s59] sm:$0x1]
    %61 = vrot.lane.b32.xlu0 %v60, 48
    %v62 = vpop.permute.xlu0 %61
    %vm63 = vcmask 458112
    %64 = vst.msk [vmem:[#allocation0] sm:$0x1] %vm63, %v62
    %s65 = scalar_lea.vmem %s0, 5
    %v66 = vld [vmem:[%s65] sm:$0x1]
    %67 = vrot.lane.b32.xlu0 %v66, 40
    %v68 = vpop.permute.xlu0 %67
    %vm69 = vcmask 392512
    %70 = vst.msk [vmem:[#allocation0] sm:$0x1] %vm69, %v68
    %s71 = scalar_lea.vmem %s0, 4
    %v72 = vld [vmem:[%s71] sm:$0x1]
    %73 = vrot.lane.b32.xlu0 %v72, 32
    %v74 = vpop.permute.xlu0 %73
    %vm75 = vcmask 326912
    %76 = vst.msk [vmem:[#allocation0] sm:$0x1] %vm75, %v74
    %s77 = scalar_lea.vmem %s0, 3
    %v78 = vld [vmem:[%s77] sm:$0x1]
    %79 = vrot.lane.b32.xlu0 %v78, 24
    %v80 = vpop.permute.xlu0 %79
    %vm81 = vcmask 261312
    %82 = vst.msk [vmem:[#allocation0] sm:$0x1] %vm81, %v80
    %s83 = scalar_lea.vmem %s0, 2
    %v84 = vld [vmem:[%s83] sm:$0x1]
    %85 = vrot.lane.b32.xlu0 %v84, 16
    %v86 = vpop.permute.xlu0 %85
    %vm87 = vcmask 195712
    %88 = vst.msk [vmem:[#allocation0] sm:$0x1] %vm87, %v86
    %s89 = scalar_lea.vmem %s0, 1
    %v90 = vld [vmem:[%s89] sm:$0x1]
    %91 = vrot.lane.b32.xlu0 %v90, 8
    %v92 = vpop.permute.xlu0 %91
    %vm93 = vcmask 130112
    %94 = vst.msk [vmem:[#allocation0] sm:$0x1] %vm93, %v92
    %s96 = ssub.s32 2, 1
    %v97 = vld [vmem:[#allocation0] sm:%s96]
    %s99 = ssub.s32 2, 1
    %100 = vst [vmem:[%s1] sm:%s99] %v97

// kernel: discriminator_forward.1
$region0: #{discriminator_forward.1}
  #allocation0 [shape = 'u32[]', space=smem, size = 0x4, offset = 0x4, fixed_abs, tag = 'smem constant byte address 0x4 - core index']
  #allocation1 [shape = 'u32[72,128]{1,0:T(1,128)}', space=vmem, size = 0x9000, scoped, tag = 'internal scratch']
  #allocation2 [shape = 'f32[1,1]{1,0:T(1,128)S(1)}', space=vmem, size = 0x200, scoped, tag = 'scoped memory for discriminator_forward.1']
  %s0 = inlined_call_operand.vmem [shape: f32[64,96], index: 0, kind: input, shape index: {}]
  %s1 = inlined_call_operand.vmem [shape: bf16[4,32,64], index: 1, kind: input, shape index: {}]
  %s2 = inlined_call_operand.vmem [shape: bf16[4,96,128], index: 2, kind: input, shape index: {}]
  %s3 = inlined_call_operand.vmem [shape: f32[1,128], index: 3, kind: input, shape index: {}]
  %s4 = inlined_call_operand.vmem [shape: bf16[4,16,32], index: 4, kind: input, shape index: {}]
  %s5 = inlined_call_operand.vmem [shape: bf16[4,128,128], index: 5, kind: input, shape index: {}]
  %s6 = inlined_call_operand.vmem [shape: f32[1,16], index: 6, kind: input, shape index: {}]
  %s7 = inlined_call_operand.vmem [shape: f32[1,16], index: 7, kind: input, shape index: {}]
  %s8 = inlined_call_operand.vmem [shape: bf16[4,8,16], index: 8, kind: input, shape index: {}]
  %s9 = inlined_call_operand.vmem [shape: bf16[4,128,128], index: 9, kind: input, shape index: {}]
  %s10 = inlined_call_operand.vmem [shape: f32[1,32], index: 10, kind: input, shape index: {}]
  %s11 = inlined_call_operand.vmem [shape: f32[1,32], index: 11, kind: input, shape index: {}]
  %s12 = inlined_call_operand.vmem [shape: bf16[4,4,8], index: 12, kind: input, shape index: {}]
  %s13 = inlined_call_operand.vmem [shape: bf16[4,128,128], index: 13, kind: input, shape index: {}]
  %s14 = inlined_call_operand.vmem [shape: f32[1,64], index: 14, kind: input, shape index: {}]
  %s15 = inlined_call_operand.vmem [shape: f32[1,64], index: 15, kind: input, shape index: {}]
  %s16 = inlined_call_operand.vmem [shape: bf16[4,4,4], index: 16, kind: input, shape index: {}, may-alias: {16,20}]
  %s17 = inlined_call_operand.vmem [shape: bf16[4,128,128], index: 17, kind: input, shape index: {}]
  %s18 = inlined_call_operand.vmem [shape: f32[1,64], index: 18, kind: input, shape index: {}]
  %s19 = inlined_call_operand.vmem [shape: f32[1,64], index: 19, kind: input, shape index: {}]
  %s20 = inlined_call_operand.vmem [shape: bf16[4,4,4], index: 20, kind: input, shape index: {}, may-alias: {16,20}]
  %s21 = inlined_call_operand.vmem [shape: bf16[4,128,2], index: 21, kind: input, shape index: {}]
  %s22 = inlined_call_operand.vmem [shape: f32[1,2], index: 22, kind: input, shape index: {}]
  %s23 = inlined_call_operand.vmem [shape: f32[4,1024], index: 23, kind: input, shape index: {}]
  %s24 = inlined_call_operand.vmem [shape: f32[1,1024], index: 24, kind: input, shape index: {}]
  %s25 = inlined_call_operand.vmem [shape: f32[1024,1], index: 25, kind: input, shape index: {}]
  %s26 = inlined_call_operand.<no memory space> [shape: f32[1,1], index: 26, kind: input, shape index: {}]
  %s27 = inlined_call_operand.vmem [shape: f32[2,1], index: 27, kind: output, shape index: {}]
  %s28 = sld [smem:[#allocation0]]
  $region118: #{discriminator_forward.1} parent=0
    _
  %s30 = ssub.s32 1, %s28
  %s31 = scalar_select 0, %s30, %s28
  %v32 = vstv %s26
  %33 = vst [vmem:[#allocation2] sm:$0x1] %v32
  // Predicated region
  $region2: #{discriminator_forward.1} parent=0 // pred_check
    _
  $region3: #{discriminator_forward.1} parent=0 // pred_check_branch
    %35 = sbr.rel (0) target = $region5
  $region4: #{discriminator_forward.1} parent=0 // pred_region
    _
  $region5: #{discriminator_forward.1} parent=0 // pred_fallthru
    _
  // Predicated region
  $region6: #{discriminator_forward.1} parent=0 // pred_check
    _
  $region7: #{discriminator_forward.1} parent=0 // pred_check_branch
    %37 = sbr.rel (0) target = $region9
  $region8: #{discriminator_forward.1} parent=0 // pred_region
    _
  $region9: #{discriminator_forward.1} parent=0 // pred_fallthru
    _
  // Predicated region
  $region10: #{discriminator_forward.1} parent=0 // pred_check
    _
  $region11: #{discriminator_forward.1} parent=0 // pred_check_branch
    %39 = sbr.rel (0) target = $region13
  $region12: #{discriminator_forward.1} parent=0 // pred_region
    _
  $region13: #{discriminator_forward.1} parent=0 // pred_fallthru
    _
  // Predicated region
  $region14: #{discriminator_forward.1} parent=0 // pred_check
    _
  $region15: #{discriminator_forward.1} parent=0 // pred_check_branch
    %41 = sbr.rel (0) target = $region17
  $region16: #{discriminator_forward.1} parent=0 // pred_region
    _
  $region17: #{discriminator_forward.1} parent=0 // pred_fallthru
    _
  // Predicated region
  $region18: #{discriminator_forward.1} parent=0 // pred_check
    _
  $region19: #{discriminator_forward.1} parent=0 // pred_check_branch
    %43 = sbr.rel (0) target = $region21
  $region20: #{discriminator_forward.1} parent=0 // pred_region
    _
  $region21: #{discriminator_forward.1} parent=0 // pred_fallthru
    _
  // Predicated region
  $region22: #{discriminator_forward.1} parent=0 // pred_check
    _
  $region23: #{discriminator_forward.1} parent=0 // pred_check_branch
    %45 = sbr.rel (0) target = $region25
  $region24: #{discriminator_forward.1} parent=0 // pred_region
    _
  $region25: #{discriminator_forward.1} parent=0 // pred_fallthru
    _
  // Predicated region
  $region26: #{discriminator_forward.1} parent=0 // pred_check
    _
  $region27: #{discriminator_forward.1} parent=0 // pred_check_branch
    %47 = sbr.rel (0) target = $region29
  $region28: #{discriminator_forward.1} parent=0 // pred_region
    _
  $region29: #{discriminator_forward.1} parent=0 // pred_fallthru
    _
  // Predicated region
  $region30: #{discriminator_forward.1} parent=0 // pred_check
    _
  $region31: #{discriminator_forward.1} parent=0 // pred_check_branch
    %49 = sbr.rel (0) target = $region33
  $region32: #{discriminator_forward.1} parent=0 // pred_region
    _
  $region33: #{discriminator_forward.1} parent=0 // pred_fallthru
    _
  // Predicated region
  $region34: #{discriminator_forward.1} parent=0 // pred_check
    _
  $region35: #{discriminator_forward.1} parent=0 // pred_check_branch
    %51 = sbr.rel (0) target = $region37
  $region36: #{discriminator_forward.1} parent=0 // pred_region
    _
  $region37: #{discriminator_forward.1} parent=0 // pred_fallthru
    _
  // Predicated region
  $region38: #{discriminator_forward.1} parent=0 // pred_check
    _
  $region39: #{discriminator_forward.1} parent=0 // pred_check_branch
    %53 = sbr.rel (0) target = $region41
  $region40: #{discriminator_forward.1} parent=0 // pred_region
    _
  $region41: #{discriminator_forward.1} parent=0 // pred_fallthru
    _
  // Predicated region
  $region42: #{discriminator_forward.1} parent=0 // pred_check
    _
  $region43: #{discriminator_forward.1} parent=0 // pred_check_branch
    %55 = sbr.rel (0) target = $region45
  $region44: #{discriminator_forward.1} parent=0 // pred_region
    _
  $region45: #{discriminator_forward.1} parent=0 // pred_fallthru
    _
  // Predicated region
  $region46: #{discriminator_forward.1} parent=0 // pred_check
    _
  $region47: #{discriminator_forward.1} parent=0 // pred_check_branch
    %57 = sbr.rel (0) target = $region49
  $region48: #{discriminator_forward.1} parent=0 // pred_region
    _
  $region49: #{discriminator_forward.1} parent=0 // pred_fallthru
    _
  // Predicated region
  $region50: #{discriminator_forward.1} parent=0 // pred_check
    _
  $region51: #{discriminator_forward.1} parent=0 // pred_check_branch
    %59 = sbr.rel (0) target = $region53
  $region52: #{discriminator_forward.1} parent=0 // pred_region
    _
  $region53: #{discriminator_forward.1} parent=0 // pred_fallthru
    _
  // Predicated region
  $region54: #{discriminator_forward.1} parent=0 // pred_check
    _
  $region55: #{discriminator_forward.1} parent=0 // pred_check_branch
    %61 = sbr.rel (0) target = $region57
  $region56: #{discriminator_forward.1} parent=0 // pred_region
    _
  $region57: #{discriminator_forward.1} parent=0 // pred_fallthru
    _
  // Predicated region
  $region58: #{discriminator_forward.1} parent=0 // pred_check
    _
  $region59: #{discriminator_forward.1} parent=0 // pred_check_branch
    %63 = sbr.rel (0) target = $region61
  $region60: #{discriminator_forward.1} parent=0 // pred_region
    _
  $region61: #{discriminator_forward.1} parent=0 // pred_fallthru
    _
  // Predicated region
  $region62: #{discriminator_forward.1} parent=0 // pred_check
    _
  $region63: #{discriminator_forward.1} parent=0 // pred_check_branch
    %65 = sbr.rel (0) target = $region65
  $region64: #{discriminator_forward.1} parent=0 // pred_region
    _
  $region65: #{discriminator_forward.1} parent=0 // pred_fallthru
    _
  // Predicated region
  $region66: #{discriminator_forward.1} parent=0 // pred_check
    _
  $region67: #{discriminator_forward.1} parent=0 // pred_check_branch
    %67 = sbr.rel (0) target = $region69
  $region68: #{discriminator_forward.1} parent=0 // pred_region
    _
  $region69: #{discriminator_forward.1} parent=0 // pred_fallthru
    _
  // Predicated region
  $region70: #{discriminator_forward.1} parent=0 // pred_check
    _
  $region71: #{discriminator_forward.1} parent=0 // pred_check_branch
    %69 = sbr.rel (0) target = $region73
  $region72: #{discriminator_forward.1} parent=0 // pred_region
    _
  $region73: #{discriminator_forward.1} parent=0 // pred_fallthru
    _
  // Predicated region
  $region74: #{discriminator_forward.1} parent=0 // pred_check
    _
  $region75: #{discriminator_forward.1} parent=0 // pred_check_branch
    %71 = sbr.rel (0) target = $region77
  $region76: #{discriminator_forward.1} parent=0 // pred_region
    _
  $region77: #{discriminator_forward.1} parent=0 // pred_fallthru
    _
  // Predicated region
  $region78: #{discriminator_forward.1} parent=0 // pred_check
    _
  $region79: #{discriminator_forward.1} parent=0 // pred_check_branch
    %73 = sbr.rel (0) target = $region81
  $region80: #{discriminator_forward.1} parent=0 // pred_region
    _
  $region81: #{discriminator_forward.1} parent=0 // pred_fallthru
    _
  // Predicated region
  $region82: #{discriminator_forward.1} parent=0 // pred_check
    _
  $region83: #{discriminator_forward.1} parent=0 // pred_check_branch
    %75 = sbr.rel (0) target = $region85
  $region84: #{discriminator_forward.1} parent=0 // pred_region
    _
  $region85: #{discriminator_forward.1} parent=0 // pred_fallthru
    _
  // Predicated region
  $region86: #{discriminator_forward.1} parent=0 // pred_check
    _
  $region87: #{discriminator_forward.1} parent=0 // pred_check_branch
    %77 = sbr.rel (0) target = $region89
  $region88: #{discriminator_forward.1} parent=0 // pred_region
    _
  $region89: #{discriminator_forward.1} parent=0 // pred_fallthru
    _
  // Predicated region
  $region90: #{discriminator_forward.1} parent=0 // pred_check
    _
  $region91: #{discriminator_forward.1} parent=0 // pred_check_branch
    %79 = sbr.rel (0) target = $region93
  $region92: #{discriminator_forward.1} parent=0 // pred_region
    _
  $region93: #{discriminator_forward.1} parent=0 // pred_fallthru
    _
  // Predicated region
  $region94: #{discriminator_forward.1} parent=0 // pred_check
    _
  $region95: #{discriminator_forward.1} parent=0 // pred_check_branch
    %81 = sbr.rel (0) target = $region97
  $region96: #{discriminator_forward.1} parent=0 // pred_region
    _
  $region97: #{discriminator_forward.1} parent=0 // pred_fallthru
    _
  // Predicated region
  $region98: #{discriminator_forward.1} parent=0 // pred_check
    _
  $region99: #{discriminator_forward.1} parent=0 // pred_check_branch
    %83 = sbr.rel (0) target = $region101
  $region100: #{discriminator_forward.1} parent=0 // pred_region
    _
  $region101: #{discriminator_forward.1} parent=0 // pred_fallthru
    _
  // Predicated region
  $region102: #{discriminator_forward.1} parent=0 // pred_check
    _
  $region103: #{discriminator_forward.1} parent=0 // pred_check_branch
    %85 = sbr.rel (0) target = $region105
  $region104: #{discriminator_forward.1} parent=0 // pred_region
    _
  $region105: #{discriminator_forward.1} parent=0 // pred_fallthru
    _
  // Predicated region
  $region106: #{discriminator_forward.1} parent=0 // pred_check
    _
  $region107: #{discriminator_forward.1} parent=0 // pred_check_branch
    %87 = sbr.rel (0) target = $region109
  $region108: #{discriminator_forward.1} parent=0 // pred_region
    _
  $region109: #{discriminator_forward.1} parent=0 // pred_fallthru
    _
  %v89 = vld [vmem:[%s0] sm:$0xff]
  %v90 = vld [vmem:[%s0 + $0x8] sm:$0xff]
  %v91 = vld [vmem:[%s0 + $0x10] sm:$0xff]
  %v92 = vld [vmem:[%s0 + $0x18] sm:$0xff]
  %v93 = vld [vmem:[%s0 + $0x20] sm:$0xff]
  %v94 = vld [vmem:[%s0 + $0x28] sm:$0xff]
  %v95 = vld [vmem:[%s0 + $0x30] sm:$0xff]
  %v96 = vld [vmem:[%s0 + $0x38] sm:$0xff]
  %v97 = vpack.c.bf16 %v90, %v89
  %v98 = vpack.c.bf16 %v92, %v91
  %v99 = vpack.c.bf16 %v94, %v93
  %v100 = vpack.c.bf16 %v96, %v95
  %v101 = vld [vmem:[%s1] sm:$0xf]
  %v102 = vld [vmem:[%s1 + $0x4] sm:$0xf]
  %v103 = vld [vmem:[%s1 + $0x8] sm:$0xf]
  %v104 = vld [vmem:[%s1 + $0xc] sm:$0xf]
  %v109 = vunpack.c.l.b16 %v101
  %v110 = vunpack.c.l.b16 %v102
  %v111 = vunpack.c.l.b16 %v103
  %v112 = vunpack.c.l.b16 %v104
  %v113 = vpack.c.b16 %v110, %v109
  %v114 = vpack.c.b16 %v112, %v111
  %vm115 = vcmask 523264
  %v117 = vsel %vm115, %v113, 0
  %v120 = vsel %vm115, %v114, 0
  %122 = vmatpush.bf16.msra.mxu0 0
  %123 = vmatpush.bf16.msra.mxu0 0
  %124 = vmatpush.bf16.msra.mxu0 0
  %125 = vmatpush.bf16.msra.mxu0 0
  %126 = vmatpush.bf16.msra.mxu0 %v100
  %127 = vmatpush.bf16.msra.mxu0 %v99
  %128 = vmatpush.bf16.msra.mxu0 %v98
  %129 = vmatpush.bf16.msra.mxu0 %v97
  %130 = vmatmul.bf16.gmra.mxu0 %v117
  %v131 = vpop.f32.mrf.mxu0
  %v132 = vadd.f32 0.0, %v131
  %v133 = vpop.f32.mrf.mxu0
  %v134 = vadd.f32 0.0, %v133
  %135 = vmatmul.bf16.gmra.mxu0 %v120
  %v136 = vpop.f32.mrf.mxu0
  %v137 = vadd.f32 0.0, %v136
  %v138 = vpop.f32.mrf.mxu0
  %v139 = vadd.f32 0.0, %v138
  %140 = vdwg.mxu0
  %v141 = vpack.c.bf16 %v134, %v132
  %v142 = vpack.c.bf16 %v139, %v137
  %v143 = vld [vmem:[%s2] sm:$0xf]
  %v144 = vld [vmem:[%s2 + $0x4] sm:$0xf]
  %v145 = vld [vmem:[%s2 + $0x8] sm:$0xf]
  %v146 = vld [vmem:[%s2 + $0xc] sm:$0xf]
  %v147 = vld [vmem:[%s2 + $0x10] sm:$0xf]
  %v148 = vld [vmem:[%s2 + $0x14] sm:$0xf]
  %v149 = vld [vmem:[%s2 + $0x18] sm:$0xf]
  %v150 = vld [vmem:[%s2 + $0x1c] sm:$0xf]
  %v151 = vld [vmem:[%s2 + $0x20] sm:$0xf]
  %v152 = vld [vmem:[%s2 + $0x24] sm:$0xf]
  %v153 = vld [vmem:[%s2 + $0x28] sm:$0xf]
  %v154 = vld [vmem:[%s2 + $0x2c] sm:$0xf]
  %s155 = scalar_lea.vmem %s1, 16
  %v156 = vld [vmem:[%s155] sm:$0xf]
  %v157 = vld [vmem:[%s155 + $0x4] sm:$0xf]
  %v158 = vld [vmem:[%s155 + $0x8] sm:$0xf]
  %v159 = vld [vmem:[%s155 + $0xc] sm:$0xf]
  %v164 = vunpack.c.l.b16 %v156
  %v165 = vunpack.c.l.b16 %v157
  %v166 = vunpack.c.l.b16 %v158
  %v167 = vunpack.c.l.b16 %v159
  %v168 = vpack.c.b16 %v165, %v164
  %v169 = vpack.c.b16 %v167, %v166
  %v171 = vsel %vm115, %v168, 0
  %v174 = vsel %vm115, %v169, 0
  %176 = vmatpush.bf16.msra.mxu0 0
  %177 = vmatpush.bf16.msra.mxu0 0
  %178 = vmatpush.bf16.msra.mxu0 0
  %179 = vmatpush.bf16.msra.mxu0 0
  %180 = vmatpush.bf16.msra.mxu0 %v100
  %181 = vmatpush.bf16.msra.mxu0 %v99
  %182 = vmatpush.bf16.msra.mxu0 %v98
  %183 = vmatpush.bf16.msra.mxu0 %v97
  %184 = vmatmul.bf16.gmra.mxu0 %v171
  %v185 = vpop.f32.mrf.mxu0
  %v186 = vadd.f32 0.0, %v185
  %v187 = vpop.f32.mrf.mxu0
  %v188 = vadd.f32 0.0, %v187
  %189 = vmatmul.bf16.gmra.mxu0 %v174
  %v190 = vpop.f32.mrf.mxu0
  %v191 = vadd.f32 0.0, %v190
  %v192 = vpop.f32.mrf.mxu0
  %v193 = vadd.f32 0.0, %v192
  %194 = vdwg.mxu0
  %v195 = vpack.c.bf16 %v188, %v186
  %v196 = vpack.c.bf16 %v193, %v191
  %s197 = scalar_lea.vmem %s2, 48
  %v198 = vld [vmem:[%s197] sm:$0xf]
  %v199 = vld [vmem:[%s197 + $0x4] sm:$0xf]
  %v200 = vld [vmem:[%s197 + $0x8] sm:$0xf]
  %v201 = vld [vmem:[%s197 + $0xc] sm:$0xf]
  %v202 = vld [vmem:[%s197 + $0x10] sm:$0xf]
  %v203 = vld [vmem:[%s197 + $0x14] sm:$0xf]
  %v204 = vld [vmem:[%s197 + $0x18] sm:$0xf]
  %v205 = vld [vmem:[%s197 + $0x1c] sm:$0xf]
  %v206 = vld [vmem:[%s197 + $0x20] sm:$0xf]
  %v207 = vld [vmem:[%s197 + $0x24] sm:$0xf]
  %v208 = vld [vmem:[%s197 + $0x28] sm:$0xf]
  %v209 = vld [vmem:[%s197 + $0x2c] sm:$0xf]
  %v222 = vunpack.c.l.b16 %v198
  %v223 = vunpack.c.l.b16 %v199
  %v224 = vunpack.c.l.b16 %v200
  %v225 = vunpack.c.l.b16 %v201
  %v226 = vunpack.c.l.b16 %v202
  %v227 = vunpack.c.l.b16 %v203
  %v228 = vunpack.c.l.b16 %v204
  %v229 = vunpack.c.l.b16 %v205
  %v230 = vunpack.c.l.b16 %v206
  %v231 = vunpack.c.l.b16 %v207
  %v232 = vunpack.c.l.b16 %v208
  %v233 = vunpack.c.l.b16 %v209
  %v234 = vpack.c.b16 %v223, %v222
  %v235 = vpack.c.b16 %v225, %v224
  %v236 = vpack.c.b16 %v227, %v226
  %v237 = vpack.c.b16 %v229, %v228
  %v238 = vpack.c.b16 %v231, %v230
  %v239 = vpack.c.b16 %v233, %v232
  %vm246 = vcmask 785408
  %v248 = vsel %vm246, %v195, 0
  %v251 = vsel %vm246, %v196, 0
  %253 = vmatpush.bf16.msra.mxu0 0
  %254 = vmatpush.bf16.msra.mxu0 0
  %255 = vmatpush.bf16.msra.mxu0 %v239
  %256 = vmatpush.bf16.msra.mxu0 %v238
  %257 = vmatpush.bf16.msra.mxu0 %v237
  %258 = vmatpush.bf16.msra.mxu0 %v236
  %259 = vmatpush.bf16.msra.mxu0 %v235
  %260 = vmatpush.bf16.msra.mxu0 %v234
  %261 = vmatmul.bf16.gmra.mxu0 %v248
  %v262 = vpop.f32.mrf.mxu0
  %v263 = vadd.f32 0.0, %v262
  %v264 = vpop.f32.mrf.mxu0
  %v265 = vadd.f32 0.0, %v264
  %266 = vmatmul.bf16.gmra.mxu0 %v251
  %v267 = vpop.f32.mrf.mxu0
  %v268 = vadd.f32 0.0, %v267
  %v269 = vpop.f32.mrf.mxu0
  %v270 = vadd.f32 0.0, %v269
  %271 = vdwg.mxu0
  %v284 = vunpack.c.l.b16 %v143
  %v285 = vunpack.c.l.b16 %v144
  %v286 = vunpack.c.l.b16 %v145
  %v287 = vunpack.c.l.b16 %v146
  %v288 = vunpack.c.l.b16 %v147
  %v289 = vunpack.c.l.b16 %v148
  %v290 = vunpack.c.l.b16 %v149
  %v291 = vunpack.c.l.b16 %v150
  %v292 = vunpack.c.l.b16 %v151
  %v293 = vunpack.c.l.b16 %v152
  %v294 = vunpack.c.l.b16 %v153
  %v295 = vunpack.c.l.b16 %v154
  %v296 = vpack.c.b16 %v285, %v284
  %v297 = vpack.c.b16 %v287, %v286
  %v298 = vpack.c.b16 %v289, %v288
  %v299 = vpack.c.b16 %v291, %v290
  %v300 = vpack.c.b16 %v293, %v292
  %v301 = vpack.c.b16 %v295, %v294
  %v309 = vsel %vm246, %v141, 0
  %v312 = vsel %vm246, %v142, 0
  %314 = vmatpush.bf16.msra.mxu0 0
  %315 = vmatpush.bf16.msra.mxu0 0
  %316 = vmatpush.bf16.msra.mxu0 %v301
  %317 = vmatpush.bf16.msra.mxu0 %v300
  %318 = vmatpush.bf16.msra.mxu0 %v299
  %319 = vmatpush.bf16.msra.mxu0 %v298
  %320 = vmatpush.bf16.msra.mxu0 %v297
  %321 = vmatpush.bf16.msra.mxu0 %v296
  %322 = vmatmul.bf16.gmra.mxu0 %v309
  %v323 = vpop.f32.mrf.mxu0
  %v324 = vadd.f32 %v263, %v323
  %v325 = vpop.f32.mrf.mxu0
  %v326 = vadd.f32 %v265, %v325
  %327 = vmatmul.bf16.gmra.mxu0 %v312
  %v328 = vpop.f32.mrf.mxu0
  %v329 = vadd.f32 %v268, %v328
  %v330 = vpop.f32.mrf.mxu0
  %v331 = vadd.f32 %v270, %v330
  %332 = vdwg.mxu0
  %s333 = scalar_lea.vmem %s1, 32
  %v334 = vld [vmem:[%s333] sm:$0xf]
  %v335 = vld [vmem:[%s333 + $0x4] sm:$0xf]
  %v336 = vld [vmem:[%s333 + $0x8] sm:$0xf]
  %v337 = vld [vmem:[%s333 + $0xc] sm:$0xf]
  %v342 = vunpack.c.l.b16 %v334
  %v343 = vunpack.c.l.b16 %v335
  %v344 = vunpack.c.l.b16 %v336
  %v345 = vunpack.c.l.b16 %v337
  %v346 = vpack.c.b16 %v343, %v342
  %v347 = vpack.c.b16 %v345, %v344
  %v349 = vsel %vm115, %v346, 0
  %v352 = vsel %vm115, %v347, 0
  %354 = vmatpush.bf16.msra.mxu0 0
  %355 = vmatpush.bf16.msra.mxu0 0
  %356 = vmatpush.bf16.msra.mxu0 0
  %357 = vmatpush.bf16.msra.mxu0 0
  %358 = vmatpush.bf16.msra.mxu0 %v100
  %359 = vmatpush.bf16.msra.mxu0 %v99
  %360 = vmatpush.bf16.msra.mxu0 %v98
  %361 = vmatpush.bf16.msra.mxu0 %v97
  %362 = vmatmul.bf16.gmra.mxu0 %v349
  %v363 = vpop.f32.mrf.mxu0
  %v364 = vadd.f32 0.0, %v363
  %v365 = vpop.f32.mrf.mxu0
  %v366 = vadd.f32 0.0, %v365
  %367 = vmatmul.bf16.gmra.mxu0 %v352
  %v368 = vpop.f32.mrf.mxu0
  %v369 = vadd.f32 0.0, %v368
  %v370 = vpop.f32.mrf.mxu0
  %v371 = vadd.f32 0.0, %v370
  %372 = vdwg.mxu0
  %v373 = vpack.c.bf16 %v366, %v364
  %v374 = vpack.c.bf16 %v371, %v369
  %s375 = scalar_lea.vmem %s2, 96
  %v376 = vld [vmem:[%s375] sm:$0xf]
  %v377 = vld [vmem:[%s375 + $0x4] sm:$0xf]
  %v378 = vld [vmem:[%s375 + $0x8] sm:$0xf]
  %v379 = vld [vmem:[%s375 + $0xc] sm:$0xf]
  %v380 = vld [vmem:[%s375 + $0x10] sm:$0xf]
  %v381 = vld [vmem:[%s375 + $0x14] sm:$0xf]
  %v382 = vld [vmem:[%s375 + $0x18] sm:$0xf]
  %v383 = vld [vmem:[%s375 + $0x1c] sm:$0xf]
  %v384 = vld [vmem:[%s375 + $0x20] sm:$0xf]
  %v385 = vld [vmem:[%s375 + $0x24] sm:$0xf]
  %v386 = vld [vmem:[%s375 + $0x28] sm:$0xf]
  %v387 = vld [vmem:[%s375 + $0x2c] sm:$0xf]
  %v400 = vunpack.c.l.b16 %v376
  %v401 = vunpack.c.l.b16 %v377
  %v402 = vunpack.c.l.b16 %v378
  %v403 = vunpack.c.l.b16 %v379
  %v404 = vunpack.c.l.b16 %v380
  %v405 = vunpack.c.l.b16 %v381
  %v406 = vunpack.c.l.b16 %v382
  %v407 = vunpack.c.l.b16 %v383
  %v408 = vunpack.c.l.b16 %v384
  %v409 = vunpack.c.l.b16 %v385
  %v410 = vunpack.c.l.b16 %v386
  %v411 = vunpack.c.l.b16 %v387
  %v412 = vpack.c.b16 %v401, %v400
  %v413 = vpack.c.b16 %v403, %v402
  %v414 = vpack.c.b16 %v405, %v404
  %v415 = vpack.c.b16 %v407, %v406
  %v416 = vpack.c.b16 %v409, %v408
  %v417 = vpack.c.b16 %v411, %v410
  %v425 = vsel %vm246, %v373, 0
  %v428 = vsel %vm246, %v374, 0
  %430 = vmatpush.bf16.msra.mxu0 0
  %431 = vmatpush.bf16.msra.mxu0 0
  %432 = vmatpush.bf16.msra.mxu0 %v417
  %433 = vmatpush.bf16.msra.mxu0 %v416
  %434 = vmatpush.bf16.msra.mxu0 %v415
  %435 = vmatpush.bf16.msra.mxu0 %v414
  %436 = vmatpush.bf16.msra.mxu0 %v413
  %437 = vmatpush.bf16.msra.mxu0 %v412
  %438 = vmatmul.bf16.gmra.mxu0 %v425
  %v439 = vpop.f32.mrf.mxu0
  %v440 = vadd.f32 0.0, %v439
  %v441 = vpop.f32.mrf.mxu0
  %v442 = vadd.f32 0.0, %v441
  %443 = vmatmul.bf16.gmra.mxu0 %v428
  %v444 = vpop.f32.mrf.mxu0
  %v445 = vadd.f32 0.0, %v444
  %v446 = vpop.f32.mrf.mxu0
  %v447 = vadd.f32 0.0, %v446
  %448 = vdwg.mxu0
  %v449 = vadd.f32 %v324, %v440
  %v450 = vadd.f32 %v326, %v442
  %v451 = vadd.f32 %v329, %v445
  %v452 = vadd.f32 %v331, %v447
  %s453 = scalar_lea.vmem %s1, 48
  %v454 = vld [vmem:[%s453] sm:$0xf]
  %v455 = vld [vmem:[%s453 + $0x4] sm:$0xf]
  %v456 = vld [vmem:[%s453 + $0x8] sm:$0xf]
  %v457 = vld [vmem:[%s453 + $0xc] sm:$0xf]
  %v462 = vunpack.c.l.b16 %v454
  %v463 = vunpack.c.l.b16 %v455
  %v464 = vunpack.c.l.b16 %v456
  %v465 = vunpack.c.l.b16 %v457
  %v466 = vpack.c.b16 %v463, %v462
  %v467 = vpack.c.b16 %v465, %v464
  %v469 = vsel %vm115, %v466, 0
  %v472 = vsel %vm115, %v467, 0
  %474 = vmatpush.bf16.msra.mxu0 0
  %475 = vmatpush.bf16.msra.mxu0 0
  %476 = vmatpush.bf16.msra.mxu0 0
  %477 = vmatpush.bf16.msra.mxu0 0
  %478 = vmatpush.bf16.msra.mxu0 %v100
  %479 = vmatpush.bf16.msra.mxu0 %v99
  %480 = vmatpush.bf16.msra.mxu0 %v98
  %481 = vmatpush.bf16.msra.mxu0 %v97
  %482 = vmatmul.bf16.gmra.mxu0 %v469
  %v483 = vpop.f32.mrf.mxu0
  %v484 = vadd.f32 0.0, %v483
  %v485 = vpop.f32.mrf.mxu0
  %v486 = vadd.f32 0.0, %v485
  %487 = vmatmul.bf16.gmra.mxu0 %v472
  %v488 = vpop.f32.mrf.mxu0
  %v489 = vadd.f32 0.0, %v488
  %v490 = vpop.f32.mrf.mxu0
  %v491 = vadd.f32 0.0, %v490
  %492 = vdwg.mxu0
  %v493 = vpack.c.bf16 %v486, %v484
  %v494 = vpack.c.bf16 %v491, %v489
  %s495 = scalar_lea.vmem %s2, 144
  %v496 = vld [vmem:[%s495] sm:$0xf]
  %v497 = vld [vmem:[%s495 + $0x4] sm:$0xf]
  %v498 = vld [vmem:[%s495 + $0x8] sm:$0xf]
  %v499 = vld [vmem:[%s495 + $0xc] sm:$0xf]
  %v500 = vld [vmem:[%s495 + $0x10] sm:$0xf]
  %v501 = vld [vmem:[%s495 + $0x14] sm:$0xf]
  %v502 = vld [vmem:[%s495 + $0x18] sm:$0xf]
  %v503 = vld [vmem:[%s495 + $0x1c] sm:$0xf]
  %v504 = vld [vmem:[%s495 + $0x20] sm:$0xf]
  %v505 = vld [vmem:[%s495 + $0x24] sm:$0xf]
  %v506 = vld [vmem:[%s495 + $0x28] sm:$0xf]
  %v507 = vld [vmem:[%s495 + $0x2c] sm:$0xf]
  %v520 = vunpack.c.l.b16 %v496
  %v521 = vunpack.c.l.b16 %v497
  %v522 = vunpack.c.l.b16 %v498
  %v523 = vunpack.c.l.b16 %v499
  %v524 = vunpack.c.l.b16 %v500
  %v525 = vunpack.c.l.b16 %v501
  %v526 = vunpack.c.l.b16 %v502
  %v527 = vunpack.c.l.b16 %v503
  %v528 = vunpack.c.l.b16 %v504
  %v529 = vunpack.c.l.b16 %v505
  %v530 = vunpack.c.l.b16 %v506
  %v531 = vunpack.c.l.b16 %v507
  %v532 = vpack.c.b16 %v521, %v520
  %v533 = vpack.c.b16 %v523, %v522
  %v534 = vpack.c.b16 %v525, %v524
  %v535 = vpack.c.b16 %v527, %v526
  %v536 = vpack.c.b16 %v529, %v528
  %v537 = vpack.c.b16 %v531, %v530
  %v545 = vsel %vm246, %v493, 0
  %v548 = vsel %vm246, %v494, 0
  %550 = vmatpush.bf16.msra.mxu0 0
  %551 = vmatpush.bf16.msra.mxu0 0
  %552 = vmatpush.bf16.msra.mxu0 %v537
  %553 = vmatpush.bf16.msra.mxu0 %v536
  %554 = vmatpush.bf16.msra.mxu0 %v535
  %555 = vmatpush.bf16.msra.mxu0 %v534
  %556 = vmatpush.bf16.msra.mxu0 %v533
  %557 = vmatpush.bf16.msra.mxu0 %v532
  %558 = vmatmul.bf16.gmra.mxu0 %v545
  %v559 = vpop.f32.mrf.mxu0
  %v560 = vadd.f32 0.0, %v559
  %v561 = vpop.f32.mrf.mxu0
  %v562 = vadd.f32 0.0, %v561
  %563 = vmatmul.bf16.gmra.mxu0 %v548
  %v564 = vpop.f32.mrf.mxu0
  %v565 = vadd.f32 0.0, %v564
  %v566 = vpop.f32.mrf.mxu0
  %v567 = vadd.f32 0.0, %v566
  %568 = vdwg.mxu0
  %v569 = vadd.f32 %v449, %v560
  %v570 = vadd.f32 %v450, %v562
  %v571 = vadd.f32 %v451, %v565
  %v572 = vadd.f32 %v452, %v567
  %v573 = vld [vmem:[%s3] sm:$0x1]
  %v575 = vperm.slane %v573, 0
  %v577 = vadd.f32 %v569, %v575
  %v578 = vadd.f32 %v570, %v575
  %v579 = vadd.f32 %v571, %v575
  %v580 = vadd.f32 %v572, %v575
  %vm581 = vcmp.ge.f32.partialorder %v577, 0.0
  %vm582 = vcmp.ge.f32.partialorder %v578, 0.0
  %vm583 = vcmp.ge.f32.partialorder %v579, 0.0
  %vm584 = vcmp.ge.f32.partialorder %v580, 0.0
  %v585 = vmul.f32 %v577, 0.2
  %v586 = vmul.f32 %v578, 0.2
  %v587 = vmul.f32 %v579, 0.2
  %v588 = vmul.f32 %v580, 0.2
  %v589 = vsel %vm581, %v577, %v585
  %v590 = vsel %vm582, %v578, %v586
  %v591 = vsel %vm583, %v579, %v587
  %v592 = vsel %vm584, %v580, %v588
  %v593 = vpack.c.bf16 %v590, %v589
  %v594 = vpack.c.bf16 %v592, %v591
  %v595 = vld [vmem:[%s4] sm:$0xf]
  %v596 = vld [vmem:[%s4 + $0x4] sm:$0xf]
  %v599 = vunpack.c.l.b16 %v595
  %v600 = vunpack.c.l.b16 %v596
  %v601 = vpack.c.b16 %v600, %v599
  %vm602 = vcmask 261120
  %v604 = vsel %vm602, %v601, 0
  %606 = vmatpush.bf16.msra.mxu0 0
  %607 = vmatpush.bf16.msra.mxu0 0
  %608 = vmatpush.bf16.msra.mxu0 0
  %609 = vmatpush.bf16.msra.mxu0 0
  %610 = vmatpush.bf16.msra.mxu0 0
  %611 = vmatpush.bf16.msra.mxu0 0
  %612 = vmatpush.bf16.msra.mxu0 %v594
  %613 = vmatpush.bf16.msra.mxu0 %v593
  %614 = vmatmul.bf16.gmra.mxu0 %v604
  %v615 = vpop.f32.mrf.mxu0
  %v616 = vadd.f32 0.0, %v615
  %v617 = vpop.f32.mrf.mxu0
  %v618 = vadd.f32 0.0, %v617
  %619 = vdwg.mxu0
  %v620 = vpack.c.bf16 %v618, %v616
  %v621 = vld [vmem:[%s5] sm:$0xf]
  %v622 = vld [vmem:[%s5 + $0x4] sm:$0xf]
  %v623 = vld [vmem:[%s5 + $0x8] sm:$0xf]
  %v624 = vld [vmem:[%s5 + $0xc] sm:$0xf]
  %v625 = vld [vmem:[%s5 + $0x10] sm:$0xf]
  %v626 = vld [vmem:[%s5 + $0x14] sm:$0xf]
  %v627 = vld [vmem:[%s5 + $0x18] sm:$0xf]
  %v628 = vld [vmem:[%s5 + $0x1c] sm:$0xf]
  %v629 = vld [vmem:[%s5 + $0x20] sm:$0xf]
  %v630 = vld [vmem:[%s5 + $0x24] sm:$0xf]
  %v631 = vld [vmem:[%s5 + $0x28] sm:$0xf]
  %v632 = vld [vmem:[%s5 + $0x2c] sm:$0xf]
  %v633 = vld [vmem:[%s5 + $0x30] sm:$0xf]
  %v634 = vld [vmem:[%s5 + $0x34] sm:$0xf]
  %v635 = vld [vmem:[%s5 + $0x38] sm:$0xf]
  %v636 = vld [vmem:[%s5 + $0x3c] sm:$0xf]
  %s637 = scalar_lea.vmem %s4, 8
  %v638 = vld [vmem:[%s637] sm:$0xf]
  %v639 = vld [vmem:[%s637 + $0x4] sm:$0xf]
  %v642 = vunpack.c.l.b16 %v638
  %v643 = vunpack.c.l.b16 %v639
  %v644 = vpack.c.b16 %v643, %v642
  %v646 = vsel %vm602, %v644, 0
  %648 = vmatpush.bf16.msra.mxu0 0
  %649 = vmatpush.bf16.msra.mxu0 0
  %650 = vmatpush.bf16.msra.mxu0 0
  %651 = vmatpush.bf16.msra.mxu0 0
  %652 = vmatpush.bf16.msra.mxu0 0
  %653 = vmatpush.bf16.msra.mxu0 0
  %654 = vmatpush.bf16.msra.mxu0 %v594
  %655 = vmatpush.bf16.msra.mxu0 %v593
  %656 = vmatmul.bf16.gmra.mxu0 %v646
  %v657 = vpop.f32.mrf.mxu0
  %v658 = vadd.f32 0.0, %v657
  %v659 = vpop.f32.mrf.mxu0
  %v660 = vadd.f32 0.0, %v659
  %661 = vdwg.mxu0
  %v662 = vpack.c.bf16 %v660, %v658
  %s663 = scalar_lea.vmem %s5, 64
  %v664 = vld [vmem:[%s663] sm:$0xf]
  %v665 = vld [vmem:[%s663 + $0x4] sm:$0xf]
  %v666 = vld [vmem:[%s663 + $0x8] sm:$0xf]
  %v667 = vld [vmem:[%s663 + $0xc] sm:$0xf]
  %v668 = vld [vmem:[%s663 + $0x10] sm:$0xf]
  %v669 = vld [vmem:[%s663 + $0x14] sm:$0xf]
  %v670 = vld [vmem:[%s663 + $0x18] sm:$0xf]
  %v671 = vld [vmem:[%s663 + $0x1c] sm:$0xf]
  %v672 = vld [vmem:[%s663 + $0x20] sm:$0xf]
  %v673 = vld [vmem:[%s663 + $0x24] sm:$0xf]
  %v674 = vld [vmem:[%s663 + $0x28] sm:$0xf]
  %v675 = vld [vmem:[%s663 + $0x2c] sm:$0xf]
  %v676 = vld [vmem:[%s663 + $0x30] sm:$0xf]
  %v677 = vld [vmem:[%s663 + $0x34] sm:$0xf]
  %v678 = vld [vmem:[%s663 + $0x38] sm:$0xf]
  %v679 = vld [vmem:[%s663 + $0x3c] sm:$0xf]
  %v696 = vunpack.c.l.b16 %v664
  %v697 = vunpack.c.l.b16 %v665
  %v698 = vunpack.c.l.b16 %v666
  %v699 = vunpack.c.l.b16 %v667
  %v700 = vunpack.c.l.b16 %v668
  %v701 = vunpack.c.l.b16 %v669
  %v702 = vunpack.c.l.b16 %v670
  %v703 = vunpack.c.l.b16 %v671
  %v704 = vunpack.c.l.b16 %v672
  %v705 = vunpack.c.l.b16 %v673
  %v706 = vunpack.c.l.b16 %v674
  %v707 = vunpack.c.l.b16 %v675
  %v708 = vunpack.c.l.b16 %v676
  %v709 = vunpack.c.l.b16 %v677
  %v710 = vunpack.c.l.b16 %v678
  %v711 = vunpack.c.l.b16 %v679
  %v712 = vpack.c.b16 %v697, %v696
  %v713 = vpack.c.b16 %v699, %v698
  %v714 = vpack.c.b16 %v701, %v700
  %v715 = vpack.c.b16 %v703, %v702
  %v716 = vpack.c.b16 %v705, %v704
  %v717 = vpack.c.b16 %v707, %v706
  %v718 = vpack.c.b16 %v709, %v708
  %v719 = vpack.c.b16 %v711, %v710
  %728 = vmatpush.bf16.msra.mxu0 %v719
  %729 = vmatpush.bf16.msra.mxu0 %v718
  %730 = vmatpush.bf16.msra.mxu0 %v717
  %731 = vmatpush.bf16.msra.mxu0 %v716
  %732 = vmatpush.bf16.msra.mxu0 %v715
  %733 = vmatpush.bf16.msra.mxu0 %v714
  %734 = vmatpush.bf16.msra.mxu0 %v713
  %735 = vmatpush.bf16.msra.mxu0 %v712
  %736 = vmatmul.bf16.gmra.mxu0 %v662
  %v737 = vpop.f32.mrf.mxu0
  %v738 = vadd.f32 0.0, %v737
  %v739 = vpop.f32.mrf.mxu0
  %v740 = vadd.f32 0.0, %v739
  %741 = vdwg.mxu0
  %v758 = vunpack.c.l.b16 %v621
  %v759 = vunpack.c.l.b16 %v622
  %v760 = vunpack.c.l.b16 %v623
  %v761 = vunpack.c.l.b16 %v624
  %v762 = vunpack.c.l.b16 %v625
  %v763 = vunpack.c.l.b16 %v626
  %v764 = vunpack.c.l.b16 %v627
  %v765 = vunpack.c.l.b16 %v628
  %v766 = vunpack.c.l.b16 %v629
  %v767 = vunpack.c.l.b16 %v630
  %v768 = vunpack.c.l.b16 %v631
  %v769 = vunpack.c.l.b16 %v632
  %v770 = vunpack.c.l.b16 %v633
  %v771 = vunpack.c.l.b16 %v634
  %v772 = vunpack.c.l.b16 %v635
  %v773 = vunpack.c.l.b16 %v636
  %v774 = vpack.c.b16 %v759, %v758
  %v775 = vpack.c.b16 %v761, %v760
  %v776 = vpack.c.b16 %v763, %v762
  %v777 = vpack.c.b16 %v765, %v764
  %v778 = vpack.c.b16 %v767, %v766
  %v779 = vpack.c.b16 %v769, %v768
  %v780 = vpack.c.b16 %v771, %v770
  %v781 = vpack.c.b16 %v773, %v772
  %790 = vmatpush.bf16.msra.mxu0 %v781
  %791 = vmatpush.bf16.msra.mxu0 %v780
  %792 = vmatpush.bf16.msra.mxu0 %v779
  %793 = vmatpush.bf16.msra.mxu0 %v778
  %794 = vmatpush.bf16.msra.mxu0 %v777
  %795 = vmatpush.bf16.msra.mxu0 %v776
  %796 = vmatpush.bf16.msra.mxu0 %v775
  %797 = vmatpush.bf16.msra.mxu0 %v774
  %798 = vmatmul.bf16.gmra.mxu0 %v620
  %v799 = vpop.f32.mrf.mxu0
  %v800 = vadd.f32 %v738, %v799
  %v801 = vpop.f32.mrf.mxu0
  %v802 = vadd.f32 %v740, %v801
  %803 = vdwg.mxu0
  %s804 = scalar_lea.vmem %s4, 16
  %v805 = vld [vmem:[%s804] sm:$0xf]
  %v806 = vld [vmem:[%s804 + $0x4] sm:$0xf]
  %v809 = vunpack.c.l.b16 %v805
  %v810 = vunpack.c.l.b16 %v806
  %v811 = vpack.c.b16 %v810, %v809
  %v813 = vsel %vm602, %v811, 0
  %815 = vmatpush.bf16.msra.mxu0 0
  %816 = vmatpush.bf16.msra.mxu0 0
  %817 = vmatpush.bf16.msra.mxu0 0
  %818 = vmatpush.bf16.msra.mxu0 0
  %819 = vmatpush.bf16.msra.mxu0 0
  %820 = vmatpush.bf16.msra.mxu0 0
  %821 = vmatpush.bf16.msra.mxu0 %v594
  %822 = vmatpush.bf16.msra.mxu0 %v593
  %823 = vmatmul.bf16.gmra.mxu0 %v813
  %v824 = vpop.f32.mrf.mxu0
  %v825 = vadd.f32 0.0, %v824
  %v826 = vpop.f32.mrf.mxu0
  %v827 = vadd.f32 0.0, %v826
  %828 = vdwg.mxu0
  %v829 = vpack.c.bf16 %v827, %v825
  %s830 = scalar_lea.vmem %s5, 128
  %v831 = vld [vmem:[%s830] sm:$0xf]
  %v832 = vld [vmem:[%s830 + $0x4] sm:$0xf]
  %v833 = vld [vmem:[%s830 + $0x8] sm:$0xf]
  %v834 = vld [vmem:[%s830 + $0xc] sm:$0xf]
  %v835 = vld [vmem:[%s830 + $0x10] sm:$0xf]
  %v836 = vld [vmem:[%s830 + $0x14] sm:$0xf]
  %v837 = vld [vmem:[%s830 + $0x18] sm:$0xf]
  %v838 = vld [vmem:[%s830 + $0x1c] sm:$0xf]
  %v839 = vld [vmem:[%s830 + $0x20] sm:$0xf]
  %v840 = vld [vmem:[%s830 + $0x24] sm:$0xf]
  %v841 = vld [vmem:[%s830 + $0x28] sm:$0xf]
  %v842 = vld [vmem:[%s830 + $0x2c] sm:$0xf]
  %v843 = vld [vmem:[%s830 + $0x30] sm:$0xf]
  %v844 = vld [vmem:[%s830 + $0x34] sm:$0xf]
  %v845 = vld [vmem:[%s830 + $0x38] sm:$0xf]
  %v846 = vld [vmem:[%s830 + $0x3c] sm:$0xf]
  %v863 = vunpack.c.l.b16 %v831
  %v864 = vunpack.c.l.b16 %v832
  %v865 = vunpack.c.l.b16 %v833
  %v866 = vunpack.c.l.b16 %v834
  %v867 = vunpack.c.l.b16 %v835
  %v868 = vunpack.c.l.b16 %v836
  %v869 = vunpack.c.l.b16 %v837
  %v870 = vunpack.c.l.b16 %v838
  %v871 = vunpack.c.l.b16 %v839
  %v872 = vunpack.c.l.b16 %v840
  %v873 = vunpack.c.l.b16 %v841
  %v874 = vunpack.c.l.b16 %v842
  %v875 = vunpack.c.l.b16 %v843
  %v876 = vunpack.c.l.b16 %v844
  %v877 = vunpack.c.l.b16 %v845
  %v878 = vunpack.c.l.b16 %v846
  %v879 = vpack.c.b16 %v864, %v863
  %v880 = vpack.c.b16 %v866, %v865
  %v881 = vpack.c.b16 %v868, %v867
  %v882 = vpack.c.b16 %v870, %v869
  %v883 = vpack.c.b16 %v872, %v871
  %v884 = vpack.c.b16 %v874, %v873
  %v885 = vpack.c.b16 %v876, %v875
  %v886 = vpack.c.b16 %v878, %v877
  %895 = vmatpush.bf16.msra.mxu0 %v886
  %896 = vmatpush.bf16.msra.mxu0 %v885
  %897 = vmatpush.bf16.msra.mxu0 %v884
  %898 = vmatpush.bf16.msra.mxu0 %v883
  %899 = vmatpush.bf16.msra.mxu0 %v882
  %900 = vmatpush.bf16.msra.mxu0 %v881
  %901 = vmatpush.bf16.msra.mxu0 %v880
  %902 = vmatpush.bf16.msra.mxu0 %v879
  %903 = vmatmul.bf16.gmra.mxu0 %v829
  %v904 = vpop.f32.mrf.mxu0
  %v905 = vadd.f32 0.0, %v904
  %v906 = vpop.f32.mrf.mxu0
  %v907 = vadd.f32 0.0, %v906
  %908 = vdwg.mxu0
  %v909 = vadd.f32 %v800, %v905
  %v910 = vadd.f32 %v802, %v907
  %s911 = scalar_lea.vmem %s4, 24
  %v912 = vld [vmem:[%s911] sm:$0xf]
  %v913 = vld [vmem:[%s911 + $0x4] sm:$0xf]
  %v916 = vunpack.c.l.b16 %v912
  %v917 = vunpack.c.l.b16 %v913
  %v918 = vpack.c.b16 %v917, %v916
  %v920 = vsel %vm602, %v918, 0
  %922 = vmatpush.bf16.msra.mxu0 0
  %923 = vmatpush.bf16.msra.mxu0 0
  %924 = vmatpush.bf16.msra.mxu0 0
  %925 = vmatpush.bf16.msra.mxu0 0
  %926 = vmatpush.bf16.msra.mxu0 0
  %927 = vmatpush.bf16.msra.mxu0 0
  %928 = vmatpush.bf16.msra.mxu0 %v594
  %929 = vmatpush.bf16.msra.mxu0 %v593
  %930 = vmatmul.bf16.gmra.mxu0 %v920
  %v931 = vpop.f32.mrf.mxu0
  %v932 = vadd.f32 0.0, %v931
  %v933 = vpop.f32.mrf.mxu0
  %v934 = vadd.f32 0.0, %v933
  %935 = vdwg.mxu0
  %v936 = vpack.c.bf16 %v934, %v932
  %s937 = scalar_lea.vmem %s5, 192
  %v938 = vld [vmem:[%s937] sm:$0xf]
  %v939 = vld [vmem:[%s937 + $0x4] sm:$0xf]
  %v940 = vld [vmem:[%s937 + $0x8] sm:$0xf]
  %v941 = vld [vmem:[%s937 + $0xc] sm:$0xf]
  %v942 = vld [vmem:[%s937 + $0x10] sm:$0xf]
  %v943 = vld [vmem:[%s937 + $0x14] sm:$0xf]
  %v944 = vld [vmem:[%s937 + $0x18] sm:$0xf]
  %v945 = vld [vmem:[%s937 + $0x1c] sm:$0xf]
  %v946 = vld [vmem:[%s937 + $0x20] sm:$0xf]
  %v947 = vld [vmem:[%s937 + $0x24] sm:$0xf]
  %v948 = vld [vmem:[%s937 + $0x28] sm:$0xf]
  %v949 = vld [vmem:[%s937 + $0x2c] sm:$0xf]
  %v950 = vld [vmem:[%s937 + $0x30] sm:$0xf]
  %v951 = vld [vmem:[%s937 + $0x34] sm:$0xf]
  %v952 = vld [vmem:[%s937 + $0x38] sm:$0xf]
  %v953 = vld [vmem:[%s937 + $0x3c] sm:$0xf]
  %v970 = vunpack.c.l.b16 %v938
  %v971 = vunpack.c.l.b16 %v939
  %v972 = vunpack.c.l.b16 %v940
  %v973 = vunpack.c.l.b16 %v941
  %v974 = vunpack.c.l.b16 %v942
  %v975 = vunpack.c.l.b16 %v943
  %v976 = vunpack.c.l.b16 %v944
  %v977 = vunpack.c.l.b16 %v945
  %v978 = vunpack.c.l.b16 %v946
  %v979 = vunpack.c.l.b16 %v947
  %v980 = vunpack.c.l.b16 %v948
  %v981 = vunpack.c.l.b16 %v949
  %v982 = vunpack.c.l.b16 %v950
  %v983 = vunpack.c.l.b16 %v951
  %v984 = vunpack.c.l.b16 %v952
  %v985 = vunpack.c.l.b16 %v953
  %v986 = vpack.c.b16 %v971, %v970
  %v987 = vpack.c.b16 %v973, %v972
  %v988 = vpack.c.b16 %v975, %v974
  %v989 = vpack.c.b16 %v977, %v976
  %v990 = vpack.c.b16 %v979, %v978
  %v991 = vpack.c.b16 %v981, %v980
  %v992 = vpack.c.b16 %v983, %v982
  %v993 = vpack.c.b16 %v985, %v984
  %1002 = vmatpush.bf16.msra.mxu0 %v993
  %1003 = vmatpush.bf16.msra.mxu0 %v992
  %1004 = vmatpush.bf16.msra.mxu0 %v991
  %1005 = vmatpush.bf16.msra.mxu0 %v990
  %1006 = vmatpush.bf16.msra.mxu0 %v989
  %1007 = vmatpush.bf16.msra.mxu0 %v988
  %1008 = vmatpush.bf16.msra.mxu0 %v987
  %1009 = vmatpush.bf16.msra.mxu0 %v986
  %1010 = vmatmul.bf16.gmra.mxu0 %v936
  %v1011 = vpop.f32.mrf.mxu0
  %v1012 = vadd.f32 0.0, %v1011
  %v1013 = vpop.f32.mrf.mxu0
  %v1014 = vadd.f32 0.0, %v1013
  %1015 = vdwg.mxu0
  %v1016 = vadd.f32 %v909, %v1012
  %v1017 = vadd.f32 %v910, %v1014
  %v1018 = vlaneseq
  %v1019 = vshrl.u32 %v1018, 7
  %v1020 = vadd.s32 %v1019, 8
  %v1021 = vadd.s32 %v1019, 16
  %v1022 = vadd.s32 %v1019, 24
  %v1023 = vadd.s32 %v1019, 32
  %v1024 = vadd.s32 %v1019, 40
  %v1025 = vadd.s32 %v1019, 48
  %v1026 = vadd.s32 %v1019, 56
  %v1027 = vadd.s32 %v1019, 64
  %v1028 = vadd.s32 %v1019, 72
  %v1029 = vadd.s32 %v1019, 80
  %v1030 = vadd.s32 %v1019, 88
  %v1031 = vadd.s32 %v1019, 96
  %v1032 = vadd.s32 %v1019, 104
  %v1033 = vadd.s32 %v1019, 112
  %v1034 = vadd.s32 %v1019, 120
  %v1035 = vlaneseq
  %v1036 = vand.u32 %v1035, 127
  %v1037 = vand.u32 %v1019, 15
  %v1038 = vand.u32 %v1020, 15
  %v1039 = vand.u32 %v1021, 15
  %v1040 = vand.u32 %v1022, 15
  %v1041 = vand.u32 %v1023, 15
  %v1042 = vand.u32 %v1024, 15
  %v1043 = vand.u32 %v1025, 15
  %v1044 = vand.u32 %v1026, 15
  %v1045 = vand.u32 %v1027, 15
  %v1046 = vand.u32 %v1028, 15
  %v1047 = vand.u32 %v1029, 15
  %v1048 = vand.u32 %v1030, 15
  %v1049 = vand.u32 %v1031, 15
  %v1050 = vand.u32 %v1032, 15
  %v1051 = vand.u32 %v1033, 15
  %v1052 = vand.u32 %v1034, 15
  %vm1053 = vcmp.eq.s32.totalorder %v1037, %v1036
  %vm1054 = vcmp.eq.s32.totalorder %v1038, %v1036
  %vm1055 = vcmp.eq.s32.totalorder %v1039, %v1036
  %vm1056 = vcmp.eq.s32.totalorder %v1040, %v1036
  %vm1057 = vcmp.eq.s32.totalorder %v1041, %v1036
  %vm1058 = vcmp.eq.s32.totalorder %v1042, %v1036
  %vm1059 = vcmp.eq.s32.totalorder %v1043, %v1036
  %vm1060 = vcmp.eq.s32.totalorder %v1044, %v1036
  %vm1061 = vcmp.eq.s32.totalorder %v1045, %v1036
  %vm1062 = vcmp.eq.s32.totalorder %v1046, %v1036
  %vm1063 = vcmp.eq.s32.totalorder %v1047, %v1036
  %vm1064 = vcmp.eq.s32.totalorder %v1048, %v1036
  %vm1065 = vcmp.eq.s32.totalorder %v1049, %v1036
  %vm1066 = vcmp.eq.s32.totalorder %v1050, %v1036
  %vm1067 = vcmp.eq.s32.totalorder %v1051, %v1036
  %vm1068 = vcmp.eq.s32.totalorder %v1052, %v1036
  %v1069 = vsel %vm1053, 1.0, 0.0
  %v1070 = vsel %vm1054, 1.0, 0.0
  %v1071 = vsel %vm1055, 1.0, 0.0
  %v1072 = vsel %vm1056, 1.0, 0.0
  %v1073 = vsel %vm1057, 1.0, 0.0
  %v1074 = vsel %vm1058, 1.0, 0.0
  %v1075 = vsel %vm1059, 1.0, 0.0
  %v1076 = vsel %vm1060, 1.0, 0.0
  %v1077 = vsel %vm1061, 1.0, 0.0
  %v1078 = vsel %vm1062, 1.0, 0.0
  %v1079 = vsel %vm1063, 1.0, 0.0
  %v1080 = vsel %vm1064, 1.0, 0.0
  %v1081 = vsel %vm1065, 1.0, 0.0
  %v1082 = vsel %vm1066, 1.0, 0.0
  %v1083 = vsel %vm1067, 1.0, 0.0
  %v1084 = vsel %vm1068, 1.0, 0.0
  %v1085 = vand.u32 %v1036, 15
  %vm1086 = vcmp.eq.s32.totalorder %v1085, %v1019
  %vm1087 = vcmp.eq.s32.totalorder %v1085, %v1020
  %v1088 = vsel %vm1086, 1.0, 0.0
  %v1089 = vsel %vm1087, 1.0, 0.0
  %v1090 = vadd.f32 %v1016, %v1017
  %v1091 = vrot.slane %v1090, 4
  %v1092 = vadd.f32 %v1090, %v1091
  %v1093 = vrot.slane %v1092, 2
  %v1094 = vadd.f32 %v1092, %v1093
  %v1095 = vrot.slane %v1094, 1
  %v1096 = vadd.f32 %v1094, %v1095
  %v1097 = vmul.f32 %v1016, %v1016
  %v1098 = vmul.f32 %v1017, %v1017
  %v1099 = vadd.f32 %v1097, %v1098
  %v1100 = vrot.slane %v1099, 4
  %v1101 = vadd.f32 %v1099, %v1100
  %v1102 = vrot.slane %v1101, 2
  %v1103 = vadd.f32 %v1101, %v1102
  %v1104 = vrot.slane %v1103, 1
  %v1105 = vadd.f32 %v1103, %v1104
  %1106 = vmatpush.msra.mxu0 %v1084
  %1107 = vmatpush.msra.mxu0 %v1083
  %1108 = vmatpush.msra.mxu0 %v1082
  %1109 = vmatpush.msra.mxu0 %v1081
  %1110 = vmatpush.msra.mxu0 %v1080
  %1111 = vmatpush.msra.mxu0 %v1079
  %1112 = vmatpush.msra.mxu0 %v1078
  %1113 = vmatpush.msra.mxu0 %v1077
  %1114 = vmatpush.msra.mxu0 %v1076
  %1115 = vmatpush.msra.mxu0 %v1075
  %1116 = vmatpush.msra.mxu0 %v1074
  %1117 = vmatpush.msra.mxu0 %v1073
  %1118 = vmatpush.msra.mxu0 %v1072
  %1119 = vmatpush.msra.mxu0 %v1071
  %1120 = vmatpush.msra.mxu0 %v1070
  %1121 = vmatpush.msra.mxu0 %v1069
  %1122 = vmatmul.f32.gmra.mxu0 %v1096
  %v1123 = vpop.f32.mrf.mxu0
  %v1124 = vadd.f32 0.0, %v1123
  %1125 = vdwg.mxu0
  %v1126 = vrcp.pop 128.0
  %v1127 = vmul.f32 128.0, %v1126
  %v1128 = vsub.f32 1.0, %v1127
  %v1129 = vmul.f32 %v1126, %v1128
  %v1130 = vadd.f32 %v1126, %v1129
  %vm1131 = vweird.f32 %v1126
  %v1132 = vsel %vm1131, %v1126, %v1130
  %v1133 = vmul.f32 %v1124, %v1132
  %1134 = vmatpush.msra.mxu0 %v1084
  %1135 = vmatpush.msra.mxu0 %v1083
  %1136 = vmatpush.msra.mxu0 %v1082
  %1137 = vmatpush.msra.mxu0 %v1081
  %1138 = vmatpush.msra.mxu0 %v1080
  %1139 = vmatpush.msra.mxu0 %v1079
  %1140 = vmatpush.msra.mxu0 %v1078
  %1141 = vmatpush.msra.mxu0 %v1077
  %1142 = vmatpush.msra.mxu0 %v1076
  %1143 = vmatpush.msra.mxu0 %v1075
  %1144 = vmatpush.msra.mxu0 %v1074
  %1145 = vmatpush.msra.mxu0 %v1073
  %1146 = vmatpush.msra.mxu0 %v1072
  %1147 = vmatpush.msra.mxu0 %v1071
  %1148 = vmatpush.msra.mxu0 %v1070
  %1149 = vmatpush.msra.mxu0 %v1069
  %1150 = vmatmul.f32.gmra.mxu0 %v1105
  %v1151 = vpop.f32.mrf.mxu0
  %v1152 = vadd.f32 0.0, %v1151
  %1153 = vdwg.mxu0
  %v1154 = vmul.f32 %v1152, %v1132
  %v1155 = vmul.f32 %v1133, %v1133
  %v1156 = vsub.f32 %v1154, %v1155
  %v1157 = vmax.f32 %v1156, 0.0
  %v1158 = vld [vmem:[%s6] sm:$0x1]
  %v1159 = vadd.f32 %v1157, 1e-05
  %v1160 = vrsqrt.pop %v1159
  %v1161 = vmul.f32 %v1160, %v1159
  %v1162 = vmul.f32 %v1161, %v1160
  %v1163 = vmul.f32 0.5, %v1162
  %v1164 = vsub.f32 1.5, %v1163
  %v1165 = vmul.f32 %v1160, %v1164
  %vm1166 = vweird.f32 %v1159
  %vm1167 = vweird.f32 %v1160
  %vm1168 = vmor %vm1166, %vm1167
  %v1169 = vsel %vm1168, %v1160, %v1165
  %v1170 = vmul.f32 %v1158, %v1169
  %v1171 = vld [vmem:[%s7] sm:$0x1]
  %v1172 = vmul.f32 %v1133, %v1170
  %v1173 = vsub.f32 %v1171, %v1172
  %vm1174 = vcmask 130048
  %v1176 = vsel %vm1174, %v1170, 0
  %1178 = vmatpush.msra.mxu0 0.0
  %1179 = vmatpush.msra.mxu0 0.0
  %1180 = vmatpush.msra.mxu0 0.0
  %1181 = vmatpush.msra.mxu0 0.0
  %1182 = vmatpush.msra.mxu0 0.0
  %1183 = vmatpush.msra.mxu0 0.0
  %1184 = vmatpush.msra.mxu0 0.0
  %1185 = vmatpush.msra.mxu0 0.0
  %1186 = vmatpush.msra.mxu0 0.0
  %1187 = vmatpush.msra.mxu0 0.0
  %1188 = vmatpush.msra.mxu0 0.0
  %1189 = vmatpush.msra.mxu0 0.0
  %1190 = vmatpush.msra.mxu0 0.0
  %1191 = vmatpush.msra.mxu0 0.0
  %1192 = vmatpush.msra.mxu0 %v1089
  %1193 = vmatpush.msra.mxu0 %v1088
  %1194 = vmatmul.f32.gmra.mxu0 %v1176
  %v1195 = vpop.f32.mrf.mxu0
  %v1196 = vadd.f32 0.0, %v1195
  %1197 = vdwg.mxu0
  %v1198 = vperm.slane %v1196, 0
  %v1199 = vmul.f32 %v1016, %v1198
  %v1200 = vmul.f32 %v1017, %v1198
  %v1202 = vsel %vm1174, %v1173, 0
  %1204 = vmatpush.msra.mxu0 0.0
  %1205 = vmatpush.msra.mxu0 0.0
  %1206 = vmatpush.msra.mxu0 0.0
  %1207 = vmatpush.msra.mxu0 0.0
  %1208 = vmatpush.msra.mxu0 0.0
  %1209 = vmatpush.msra.mxu0 0.0
  %1210 = vmatpush.msra.mxu0 0.0
  %1211 = vmatpush.msra.mxu0 0.0
  %1212 = vmatpush.msra.mxu0 0.0
  %1213 = vmatpush.msra.mxu0 0.0
  %1214 = vmatpush.msra.mxu0 0.0
  %1215 = vmatpush.msra.mxu0 0.0
  %1216 = vmatpush.msra.mxu0 0.0
  %1217 = vmatpush.msra.mxu0 0.0
  %1218 = vmatpush.msra.mxu0 %v1089
  %1219 = vmatpush.msra.mxu0 %v1088
  %1220 = vmatmul.f32.gmra.mxu0 %v1202
  %v1221 = vpop.f32.mrf.mxu0
  %v1222 = vadd.f32 0.0, %v1221
  %1223 = vdwg.mxu0
  %v1224 = vperm.slane %v1222, 0
  %v1225 = vadd.f32 %v1199, %v1224
  %v1226 = vadd.f32 %v1200, %v1224
  %vm1227 = vcmp.ge.f32.partialorder %v1225, 0.0
  %vm1228 = vcmp.ge.f32.partialorder %v1226, 0.0
  %v1229 = vmul.f32 %v1225, 0.2
  %v1230 = vmul.f32 %v1226, 0.2
  %v1231 = vsel %vm1227, %v1225, %v1229
  %v1232 = vsel %vm1228, %v1226, %v1230
  %v1233 = vpack.c.bf16 %v1232, %v1231
  %v1234 = vld [vmem:[%s8] sm:$0xf]
  %v1236 = vsel %vm1174, %v1234, 0
  %1238 = vmatpush.bf16.msra.mxu0 0
  %1239 = vmatpush.bf16.msra.mxu0 0
  %1240 = vmatpush.bf16.msra.mxu0 0
  %1241 = vmatpush.bf16.msra.mxu0 0
  %1242 = vmatpush.bf16.msra.mxu0 0
  %1243 = vmatpush.bf16.msra.mxu0 0
  %1244 = vmatpush.bf16.msra.mxu0 0
  %1245 = vmatpush.bf16.msra.mxu0 %v1233
  %1246 = vmatmul.bf16.gmra.mxu0 %v1236
  %v1247 = vpop.f32.mrf.mxu0
  %v1248 = vadd.f32 0.0, %v1247
  %v1249 = vpop.f32.mrf.mxu0
  %1250 = vdwg.mxu0
  %v1251 = vpack.c.bf16 %v1248, %v1248
  %v1252 = vld [vmem:[%s9] sm:$0xf]
  %v1253 = vld [vmem:[%s9 + $0x4] sm:$0xf]
  %v1254 = vld [vmem:[%s9 + $0x8] sm:$0xf]
  %v1255 = vld [vmem:[%s9 + $0xc] sm:$0xf]
  %v1256 = vld [vmem:[%s9 + $0x10] sm:$0xf]
  %v1257 = vld [vmem:[%s9 + $0x14] sm:$0xf]
  %v1258 = vld [vmem:[%s9 + $0x18] sm:$0xf]
  %v1259 = vld [vmem:[%s9 + $0x1c] sm:$0xf]
  %v1260 = vld [vmem:[%s9 + $0x20] sm:$0xf]
  %v1261 = vld [vmem:[%s9 + $0x24] sm:$0xf]
  %v1262 = vld [vmem:[%s9 + $0x28] sm:$0xf]
  %v1263 = vld [vmem:[%s9 + $0x2c] sm:$0xf]
  %v1264 = vld [vmem:[%s9 + $0x30] sm:$0xf]
  %v1265 = vld [vmem:[%s9 + $0x34] sm:$0xf]
  %v1266 = vld [vmem:[%s9 + $0x38] sm:$0xf]
  %v1267 = vld [vmem:[%s9 + $0x3c] sm:$0xf]
  %s1268 = scalar_lea.vmem %s8, 4
  %v1269 = vld [vmem:[%s1268] sm:$0xf]
  %v1271 = vsel %vm1174, %v1269, 0
  %1273 = vmatpush.bf16.msra.mxu0 0
  %1274 = vmatpush.bf16.msra.mxu0 0
  %1275 = vmatpush.bf16.msra.mxu0 0
  %1276 = vmatpush.bf16.msra.mxu0 0
  %1277 = vmatpush.bf16.msra.mxu0 0
  %1278 = vmatpush.bf16.msra.mxu0 0
  %1279 = vmatpush.bf16.msra.mxu0 0
  %1280 = vmatpush.bf16.msra.mxu0 %v1233
  %1281 = vmatmul.bf16.gmra.mxu0 %v1271
  %v1282 = vpop.f32.mrf.mxu0
  %v1283 = vadd.f32 0.0, %v1282
  %v1284 = vpop.f32.mrf.mxu0
  %1285 = vdwg.mxu0
  %v1286 = vpack.c.bf16 %v1283, %v1283
  %s1287 = scalar_lea.vmem %s9, 64
  %v1288 = vld [vmem:[%s1287] sm:$0xf]
  %v1289 = vld [vmem:[%s1287 + $0x4] sm:$0xf]
  %v1290 = vld [vmem:[%s1287 + $0x8] sm:$0xf]
  %v1291 = vld [vmem:[%s1287 + $0xc] sm:$0xf]
  %v1292 = vld [vmem:[%s1287 + $0x10] sm:$0xf]
  %v1293 = vld [vmem:[%s1287 + $0x14] sm:$0xf]
  %v1294 = vld [vmem:[%s1287 + $0x18] sm:$0xf]
  %v1295 = vld [vmem:[%s1287 + $0x1c] sm:$0xf]
  %v1296 = vld [vmem:[%s1287 + $0x20] sm:$0xf]
  %v1297 = vld [vmem:[%s1287 + $0x24] sm:$0xf]
  %v1298 = vld [vmem:[%s1287 + $0x28] sm:$0xf]
  %v1299 = vld [vmem:[%s1287 + $0x2c] sm:$0xf]
  %v1300 = vld [vmem:[%s1287 + $0x30] sm:$0xf]
  %v1301 = vld [vmem:[%s1287 + $0x34] sm:$0xf]
  %v1302 = vld [vmem:[%s1287 + $0x38] sm:$0xf]
  %v1303 = vld [vmem:[%s1287 + $0x3c] sm:$0xf]
  %v1320 = vunpack.c.l.b16 %v1288
  %v1321 = vunpack.c.l.b16 %v1289
  %v1322 = vunpack.c.l.b16 %v1290
  %v1323 = vunpack.c.l.b16 %v1291
  %v1324 = vunpack.c.l.b16 %v1292
  %v1325 = vunpack.c.l.b16 %v1293
  %v1326 = vunpack.c.l.b16 %v1294
  %v1327 = vunpack.c.l.b16 %v1295
  %v1328 = vunpack.c.l.b16 %v1296
  %v1329 = vunpack.c.l.b16 %v1297
  %v1330 = vunpack.c.l.b16 %v1298
  %v1331 = vunpack.c.l.b16 %v1299
  %v1332 = vunpack.c.l.b16 %v1300
  %v1333 = vunpack.c.l.b16 %v1301
  %v1334 = vunpack.c.l.b16 %v1302
  %v1335 = vunpack.c.l.b16 %v1303
  %v1336 = vpack.c.b16 %v1321, %v1320
  %v1337 = vpack.c.b16 %v1323, %v1322
  %v1338 = vpack.c.b16 %v1325, %v1324
  %v1339 = vpack.c.b16 %v1327, %v1326
  %v1340 = vpack.c.b16 %v1329, %v1328
  %v1341 = vpack.c.b16 %v1331, %v1330
  %v1342 = vpack.c.b16 %v1333, %v1332
  %v1343 = vpack.c.b16 %v1335, %v1334
  %1352 = vmatpush.bf16.msra.mxu0 %v1343
  %1353 = vmatpush.bf16.msra.mxu0 %v1342
  %1354 = vmatpush.bf16.msra.mxu0 %v1341
  %1355 = vmatpush.bf16.msra.mxu0 %v1340
  %1356 = vmatpush.bf16.msra.mxu0 %v1339
  %1357 = vmatpush.bf16.msra.mxu0 %v1338
  %1358 = vmatpush.bf16.msra.mxu0 %v1337
  %1359 = vmatpush.bf16.msra.mxu0 %v1336
  %1360 = vmatmul.bf16.gmra.mxu0 %v1286
  %v1361 = vpop.f32.mrf.mxu0
  %v1362 = vadd.f32 0.0, %v1361
  %v1363 = vpop.f32.mrf.mxu0
  %1364 = vdwg.mxu0
  %v1381 = vunpack.c.l.b16 %v1252
  %v1382 = vunpack.c.l.b16 %v1253
  %v1383 = vunpack.c.l.b16 %v1254
  %v1384 = vunpack.c.l.b16 %v1255
  %v1385 = vunpack.c.l.b16 %v1256
  %v1386 = vunpack.c.l.b16 %v1257
  %v1387 = vunpack.c.l.b16 %v1258
  %v1388 = vunpack.c.l.b16 %v1259
  %v1389 = vunpack.c.l.b16 %v1260
  %v1390 = vunpack.c.l.b16 %v1261
  %v1391 = vunpack.c.l.b16 %v1262
  %v1392 = vunpack.c.l.b16 %v1263
  %v1393 = vunpack.c.l.b16 %v1264
  %v1394 = vunpack.c.l.b16 %v1265
  %v1395 = vunpack.c.l.b16 %v1266
  %v1396 = vunpack.c.l.b16 %v1267
  %v1397 = vpack.c.b16 %v1382, %v1381
  %v1398 = vpack.c.b16 %v1384, %v1383
  %v1399 = vpack.c.b16 %v1386, %v1385
  %v1400 = vpack.c.b16 %v1388, %v1387
  %v1401 = vpack.c.b16 %v1390, %v1389
  %v1402 = vpack.c.b16 %v1392, %v1391
  %v1403 = vpack.c.b16 %v1394, %v1393
  %v1404 = vpack.c.b16 %v1396, %v1395
  %1413 = vmatpush.bf16.msra.mxu0 %v1404
  %1414 = vmatpush.bf16.msra.mxu0 %v1403
  %1415 = vmatpush.bf16.msra.mxu0 %v1402
  %1416 = vmatpush.bf16.msra.mxu0 %v1401
  %1417 = vmatpush.bf16.msra.mxu0 %v1400
  %1418 = vmatpush.bf16.msra.mxu0 %v1399
  %1419 = vmatpush.bf16.msra.mxu0 %v1398
  %1420 = vmatpush.bf16.msra.mxu0 %v1397
  %1421 = vmatmul.bf16.gmra.mxu0 %v1251
  %v1422 = vpop.f32.mrf.mxu0
  %v1423 = vadd.f32 %v1362, %v1422
  %v1424 = vpop.f32.mrf.mxu0
  %1425 = vdwg.mxu0
  %s1426 = scalar_lea.vmem %s8, 8
  %v1427 = vld [vmem:[%s1426] sm:$0xf]
  %v1429 = vsel %vm1174, %v1427, 0
  %1431 = vmatpush.bf16.msra.mxu0 0
  %1432 = vmatpush.bf16.msra.mxu0 0
  %1433 = vmatpush.bf16.msra.mxu0 0
  %1434 = vmatpush.bf16.msra.mxu0 0
  %1435 = vmatpush.bf16.msra.mxu0 0
  %1436 = vmatpush.bf16.msra.mxu0 0
  %1437 = vmatpush.bf16.msra.mxu0 0
  %1438 = vmatpush.bf16.msra.mxu0 %v1233
  %1439 = vmatmul.bf16.gmra.mxu0 %v1429
  %v1440 = vpop.f32.mrf.mxu0
  %v1441 = vadd.f32 0.0, %v1440
  %v1442 = vpop.f32.mrf.mxu0
  %1443 = vdwg.mxu0
  %v1444 = vpack.c.bf16 %v1441, %v1441
  %s1445 = scalar_lea.vmem %s9, 128
  %v1446 = vld [vmem:[%s1445] sm:$0xf]
  %v1447 = vld [vmem:[%s1445 + $0x4] sm:$0xf]
  %v1448 = vld [vmem:[%s1445 + $0x8] sm:$0xf]
  %v1449 = vld [vmem:[%s1445 + $0xc] sm:$0xf]
  %v1450 = vld [vmem:[%s1445 + $0x10] sm:$0xf]
  %v1451 = vld [vmem:[%s1445 + $0x14] sm:$0xf]
  %v1452 = vld [vmem:[%s1445 + $0x18] sm:$0xf]
  %v1453 = vld [vmem:[%s1445 + $0x1c] sm:$0xf]
  %v1454 = vld [vmem:[%s1445 + $0x20] sm:$0xf]
  %v1455 = vld [vmem:[%s1445 + $0x24] sm:$0xf]
  %v1456 = vld [vmem:[%s1445 + $0x28] sm:$0xf]
  %v1457 = vld [vmem:[%s1445 + $0x2c] sm:$0xf]
  %v1458 = vld [vmem:[%s1445 + $0x30] sm:$0xf]
  %v1459 = vld [vmem:[%s1445 + $0x34] sm:$0xf]
  %v1460 = vld [vmem:[%s1445 + $0x38] sm:$0xf]
  %v1461 = vld [vmem:[%s1445 + $0x3c] sm:$0xf]
  %v1478 = vunpack.c.l.b16 %v1446
  %v1479 = vunpack.c.l.b16 %v1447
  %v1480 = vunpack.c.l.b16 %v1448
  %v1481 = vunpack.c.l.b16 %v1449
  %v1482 = vunpack.c.l.b16 %v1450
  %v1483 = vunpack.c.l.b16 %v1451
  %v1484 = vunpack.c.l.b16 %v1452
  %v1485 = vunpack.c.l.b16 %v1453
  %v1486 = vunpack.c.l.b16 %v1454
  %v1487 = vunpack.c.l.b16 %v1455
  %v1488 = vunpack.c.l.b16 %v1456
  %v1489 = vunpack.c.l.b16 %v1457
  %v1490 = vunpack.c.l.b16 %v1458
  %v1491 = vunpack.c.l.b16 %v1459
  %v1492 = vunpack.c.l.b16 %v1460
  %v1493 = vunpack.c.l.b16 %v1461
  %v1494 = vpack.c.b16 %v1479, %v1478
  %v1495 = vpack.c.b16 %v1481, %v1480
  %v1496 = vpack.c.b16 %v1483, %v1482
  %v1497 = vpack.c.b16 %v1485, %v1484
  %v1498 = vpack.c.b16 %v1487, %v1486
  %v1499 = vpack.c.b16 %v1489, %v1488
  %v1500 = vpack.c.b16 %v1491, %v1490
  %v1501 = vpack.c.b16 %v1493, %v1492
  %1510 = vmatpush.bf16.msra.mxu0 %v1501
  %1511 = vmatpush.bf16.msra.mxu0 %v1500
  %1512 = vmatpush.bf16.msra.mxu0 %v1499
  %1513 = vmatpush.bf16.msra.mxu0 %v1498
  %1514 = vmatpush.bf16.msra.mxu0 %v1497
  %1515 = vmatpush.bf16.msra.mxu0 %v1496
  %1516 = vmatpush.bf16.msra.mxu0 %v1495
  %1517 = vmatpush.bf16.msra.mxu0 %v1494
  %1518 = vmatmul.bf16.gmra.mxu0 %v1444
  %v1519 = vpop.f32.mrf.mxu0
  %v1520 = vadd.f32 0.0, %v1519
  %v1521 = vpop.f32.mrf.mxu0
  %1522 = vdwg.mxu0
  %v1523 = vadd.f32 %v1423, %v1520
  %s1524 = scalar_lea.vmem %s8, 12
  %v1525 = vld [vmem:[%s1524] sm:$0xf]
  %v1527 = vsel %vm1174, %v1525, 0
  %1529 = vmatpush.bf16.msra.mxu0 0
  %1530 = vmatpush.bf16.msra.mxu0 0
  %1531 = vmatpush.bf16.msra.mxu0 0
  %1532 = vmatpush.bf16.msra.mxu0 0
  %1533 = vmatpush.bf16.msra.mxu0 0
  %1534 = vmatpush.bf16.msra.mxu0 0
  %1535 = vmatpush.bf16.msra.mxu0 0
  %1536 = vmatpush.bf16.msra.mxu0 %v1233
  %1537 = vmatmul.bf16.gmra.mxu0 %v1527
  %v1538 = vpop.f32.mrf.mxu0
  %v1539 = vadd.f32 0.0, %v1538
  %v1540 = vpop.f32.mrf.mxu0
  %1541 = vdwg.mxu0
  %v1542 = vpack.c.bf16 %v1539, %v1539
  %s1543 = scalar_lea.vmem %s9, 192
  %v1544 = vld [vmem:[%s1543] sm:$0xf]
  %v1545 = vld [vmem:[%s1543 + $0x4] sm:$0xf]
  %v1546 = vld [vmem:[%s1543 + $0x8] sm:$0xf]
  %v1547 = vld [vmem:[%s1543 + $0xc] sm:$0xf]
  %v1548 = vld [vmem:[%s1543 + $0x10] sm:$0xf]
  %v1549 = vld [vmem:[%s1543 + $0x14] sm:$0xf]
  %v1550 = vld [vmem:[%s1543 + $0x18] sm:$0xf]
  %v1551 = vld [vmem:[%s1543 + $0x1c] sm:$0xf]
  %v1552 = vld [vmem:[%s1543 + $0x20] sm:$0xf]
  %v1553 = vld [vmem:[%s1543 + $0x24] sm:$0xf]
  %v1554 = vld [vmem:[%s1543 + $0x28] sm:$0xf]
  %v1555 = vld [vmem:[%s1543 + $0x2c] sm:$0xf]
  %v1556 = vld [vmem:[%s1543 + $0x30] sm:$0xf]
  %v1557 = vld [vmem:[%s1543 + $0x34] sm:$0xf]
  %v1558 = vld [vmem:[%s1543 + $0x38] sm:$0xf]
  %v1559 = vld [vmem:[%s1543 + $0x3c] sm:$0xf]
  %v1576 = vunpack.c.l.b16 %v1544
  %v1577 = vunpack.c.l.b16 %v1545
  %v1578 = vunpack.c.l.b16 %v1546
  %v1579 = vunpack.c.l.b16 %v1547
  %v1580 = vunpack.c.l.b16 %v1548
  %v1581 = vunpack.c.l.b16 %v1549
  %v1582 = vunpack.c.l.b16 %v1550
  %v1583 = vunpack.c.l.b16 %v1551
  %v1584 = vunpack.c.l.b16 %v1552
  %v1585 = vunpack.c.l.b16 %v1553
  %v1586 = vunpack.c.l.b16 %v1554
  %v1587 = vunpack.c.l.b16 %v1555
  %v1588 = vunpack.c.l.b16 %v1556
  %v1589 = vunpack.c.l.b16 %v1557
  %v1590 = vunpack.c.l.b16 %v1558
  %v1591 = vunpack.c.l.b16 %v1559
  %v1592 = vpack.c.b16 %v1577, %v1576
  %v1593 = vpack.c.b16 %v1579, %v1578
  %v1594 = vpack.c.b16 %v1581, %v1580
  %v1595 = vpack.c.b16 %v1583, %v1582
  %v1596 = vpack.c.b16 %v1585, %v1584
  %v1597 = vpack.c.b16 %v1587, %v1586
  %v1598 = vpack.c.b16 %v1589, %v1588
  %v1599 = vpack.c.b16 %v1591, %v1590
  %1608 = vmatpush.bf16.msra.mxu0 %v1599
  %1609 = vmatpush.bf16.msra.mxu0 %v1598
  %1610 = vmatpush.bf16.msra.mxu0 %v1597
  %1611 = vmatpush.bf16.msra.mxu0 %v1596
  %1612 = vmatpush.bf16.msra.mxu0 %v1595
  %1613 = vmatpush.bf16.msra.mxu0 %v1594
  %1614 = vmatpush.bf16.msra.mxu0 %v1593
  %1615 = vmatpush.bf16.msra.mxu0 %v1592
  %1616 = vmatmul.bf16.gmra.mxu0 %v1542
  %v1617 = vpop.f32.mrf.mxu0
  %v1618 = vadd.f32 0.0, %v1617
  %v1619 = vpop.f32.mrf.mxu0
  %1620 = vdwg.mxu0
  %v1621 = vadd.f32 %v1523, %v1618
  %v1622 = vand.u32 %v1019, 31
  %v1623 = vand.u32 %v1020, 31
  %v1624 = vand.u32 %v1021, 31
  %v1625 = vand.u32 %v1022, 31
  %v1626 = vand.u32 %v1023, 31
  %v1627 = vand.u32 %v1024, 31
  %v1628 = vand.u32 %v1025, 31
  %v1629 = vand.u32 %v1026, 31
  %v1630 = vand.u32 %v1027, 31
  %v1631 = vand.u32 %v1028, 31
  %v1632 = vand.u32 %v1029, 31
  %v1633 = vand.u32 %v1030, 31
  %v1634 = vand.u32 %v1031, 31
  %v1635 = vand.u32 %v1032, 31
  %v1636 = vand.u32 %v1033, 31
  %v1637 = vand.u32 %v1034, 31
  %vm1638 = vcmp.eq.s32.totalorder %v1622, %v1036
  %vm1639 = vcmp.eq.s32.totalorder %v1623, %v1036
  %vm1640 = vcmp.eq.s32.totalorder %v1624, %v1036
  %vm1641 = vcmp.eq.s32.totalorder %v1625, %v1036
  %vm1642 = vcmp.eq.s32.totalorder %v1626, %v1036
  %vm1643 = vcmp.eq.s32.totalorder %v1627, %v1036
  %vm1644 = vcmp.eq.s32.totalorder %v1628, %v1036
  %vm1645 = vcmp.eq.s32.totalorder %v1629, %v1036
  %vm1646 = vcmp.eq.s32.totalorder %v1630, %v1036
  %vm1647 = vcmp.eq.s32.totalorder %v1631, %v1036
  %vm1648 = vcmp.eq.s32.totalorder %v1632, %v1036
  %vm1649 = vcmp.eq.s32.totalorder %v1633, %v1036
  %vm1650 = vcmp.eq.s32.totalorder %v1634, %v1036
  %vm1651 = vcmp.eq.s32.totalorder %v1635, %v1036
  %vm1652 = vcmp.eq.s32.totalorder %v1636, %v1036
  %vm1653 = vcmp.eq.s32.totalorder %v1637, %v1036
  %v1654 = vsel %vm1638, 1.0, 0.0
  %v1655 = vsel %vm1639, 1.0, 0.0
  %v1656 = vsel %vm1640, 1.0, 0.0
  %v1657 = vsel %vm1641, 1.0, 0.0
  %v1658 = vsel %vm1642, 1.0, 0.0
  %v1659 = vsel %vm1643, 1.0, 0.0
  %v1660 = vsel %vm1644, 1.0, 0.0
  %v1661 = vsel %vm1645, 1.0, 0.0
  %v1662 = vsel %vm1646, 1.0, 0.0
  %v1663 = vsel %vm1647, 1.0, 0.0
  %v1664 = vsel %vm1648, 1.0, 0.0
  %v1665 = vsel %vm1649, 1.0, 0.0
  %v1666 = vsel %vm1650, 1.0, 0.0
  %v1667 = vsel %vm1651, 1.0, 0.0
  %v1668 = vsel %vm1652, 1.0, 0.0
  %v1669 = vsel %vm1653, 1.0, 0.0
  %v1670 = vand.u32 %v1036, 31
  %vm1671 = vcmp.eq.s32.totalorder %v1670, %v1019
  %vm1672 = vcmp.eq.s32.totalorder %v1670, %v1020
  %vm1673 = vcmp.eq.s32.totalorder %v1670, %v1021
  %vm1674 = vcmp.eq.s32.totalorder %v1670, %v1022
  %v1675 = vsel %vm1671, 1.0, 0.0
  %v1676 = vsel %vm1672, 1.0, 0.0
  %v1677 = vsel %vm1673, 1.0, 0.0
  %v1678 = vsel %vm1674, 1.0, 0.0
  %v1679 = vrot.slane %v1621, 4
  %v1680 = vadd.f32 %v1621, %v1679
  %v1681 = vrot.slane %v1680, 2
  %v1682 = vadd.f32 %v1680, %v1681
  %v1683 = vrot.slane %v1682, 1
  %v1684 = vadd.f32 %v1682, %v1683
  %v1685 = vmul.f32 %v1621, %v1621
  %v1686 = vrot.slane %v1685, 4
  %v1687 = vadd.f32 %v1685, %v1686
  %v1688 = vrot.slane %v1687, 2
  %v1689 = vadd.f32 %v1687, %v1688
  %v1690 = vrot.slane %v1689, 1
  %v1691 = vadd.f32 %v1689, %v1690
  %1692 = vmatpush.msra.mxu0 %v1669
  %1693 = vmatpush.msra.mxu0 %v1668
  %1694 = vmatpush.msra.mxu0 %v1667
  %1695 = vmatpush.msra.mxu0 %v1666
  %1696 = vmatpush.msra.mxu0 %v1665
  %1697 = vmatpush.msra.mxu0 %v1664
  %1698 = vmatpush.msra.mxu0 %v1663
  %1699 = vmatpush.msra.mxu0 %v1662
  %1700 = vmatpush.msra.mxu0 %v1661
  %1701 = vmatpush.msra.mxu0 %v1660
  %1702 = vmatpush.msra.mxu0 %v1659
  %1703 = vmatpush.msra.mxu0 %v1658
  %1704 = vmatpush.msra.mxu0 %v1657
  %1705 = vmatpush.msra.mxu0 %v1656
  %1706 = vmatpush.msra.mxu0 %v1655
  %1707 = vmatpush.msra.mxu0 %v1654
  %1708 = vmatmul.f32.gmra.mxu0 %v1684
  %v1709 = vpop.f32.mrf.mxu0
  %v1710 = vadd.f32 0.0, %v1709
  %1711 = vdwg.mxu0
  %v1712 = vrcp.pop 32.0
  %v1713 = vmul.f32 32.0, %v1712
  %v1714 = vsub.f32 1.0, %v1713
  %v1715 = vmul.f32 %v1712, %v1714
  %v1716 = vadd.f32 %v1712, %v1715
  %vm1717 = vweird.f32 %v1712
  %v1718 = vsel %vm1717, %v1712, %v1716
  %v1719 = vmul.f32 %v1710, %v1718
  %1720 = vmatpush.msra.mxu0 %v1669
  %1721 = vmatpush.msra.mxu0 %v1668
  %1722 = vmatpush.msra.mxu0 %v1667
  %1723 = vmatpush.msra.mxu0 %v1666
  %1724 = vmatpush.msra.mxu0 %v1665
  %1725 = vmatpush.msra.mxu0 %v1664
  %1726 = vmatpush.msra.mxu0 %v1663
  %1727 = vmatpush.msra.mxu0 %v1662
  %1728 = vmatpush.msra.mxu0 %v1661
  %1729 = vmatpush.msra.mxu0 %v1660
  %1730 = vmatpush.msra.mxu0 %v1659
  %1731 = vmatpush.msra.mxu0 %v1658
  %1732 = vmatpush.msra.mxu0 %v1657
  %1733 = vmatpush.msra.mxu0 %v1656
  %1734 = vmatpush.msra.mxu0 %v1655
  %1735 = vmatpush.msra.mxu0 %v1654
  %1736 = vmatmul.f32.gmra.mxu0 %v1691
  %v1737 = vpop.f32.mrf.mxu0
  %v1738 = vadd.f32 0.0, %v1737
  %1739 = vdwg.mxu0
  %v1740 = vmul.f32 %v1738, %v1718
  %v1741 = vmul.f32 %v1719, %v1719
  %v1742 = vsub.f32 %v1740, %v1741
  %v1743 = vmax.f32 %v1742, 0.0
  %v1744 = vld [vmem:[%s10] sm:$0x1]
  %v1745 = vadd.f32 %v1743, 1e-05
  %v1746 = vrsqrt.pop %v1745
  %v1747 = vmul.f32 %v1746, %v1745
  %v1748 = vmul.f32 %v1747, %v1746
  %v1749 = vmul.f32 0.5, %v1748
  %v1750 = vsub.f32 1.5, %v1749
  %v1751 = vmul.f32 %v1746, %v1750
  %vm1752 = vweird.f32 %v1745
  %vm1753 = vweird.f32 %v1746
  %vm1754 = vmor %vm1752, %vm1753
  %v1755 = vsel %vm1754, %v1746, %v1751
  %v1756 = vmul.f32 %v1744, %v1755
  %v1757 = vld [vmem:[%s11] sm:$0x1]
  %v1758 = vmul.f32 %v1719, %v1756
  %v1759 = vsub.f32 %v1757, %v1758
  %v1761 = vsel %vm602, %v1756, 0
  %1763 = vmatpush.msra.mxu0 0.0
  %1764 = vmatpush.msra.mxu0 0.0
  %1765 = vmatpush.msra.mxu0 0.0
  %1766 = vmatpush.msra.mxu0 0.0
  %1767 = vmatpush.msra.mxu0 0.0
  %1768 = vmatpush.msra.mxu0 0.0
  %1769 = vmatpush.msra.mxu0 0.0
  %1770 = vmatpush.msra.mxu0 0.0
  %1771 = vmatpush.msra.mxu0 0.0
  %1772 = vmatpush.msra.mxu0 0.0
  %1773 = vmatpush.msra.mxu0 0.0
  %1774 = vmatpush.msra.mxu0 0.0
  %1775 = vmatpush.msra.mxu0 %v1678
  %1776 = vmatpush.msra.mxu0 %v1677
  %1777 = vmatpush.msra.mxu0 %v1676
  %1778 = vmatpush.msra.mxu0 %v1675
  %1779 = vmatmul.f32.gmra.mxu0 %v1761
  %v1780 = vpop.f32.mrf.mxu0
  %v1781 = vadd.f32 0.0, %v1780
  %1782 = vdwg.mxu0
  %v1783 = vperm.slane %v1781, 0
  %v1784 = vmul.f32 %v1621, %v1783
  %v1786 = vsel %vm602, %v1759, 0
  %1788 = vmatpush.msra.mxu0 0.0
  %1789 = vmatpush.msra.mxu0 0.0
  %1790 = vmatpush.msra.mxu0 0.0
  %1791 = vmatpush.msra.mxu0 0.0
  %1792 = vmatpush.msra.mxu0 0.0
  %1793 = vmatpush.msra.mxu0 0.0
  %1794 = vmatpush.msra.mxu0 0.0
  %1795 = vmatpush.msra.mxu0 0.0
  %1796 = vmatpush.msra.mxu0 0.0
  %1797 = vmatpush.msra.mxu0 0.0
  %1798 = vmatpush.msra.mxu0 0.0
  %1799 = vmatpush.msra.mxu0 0.0
  %1800 = vmatpush.msra.mxu0 %v1678
  %1801 = vmatpush.msra.mxu0 %v1677
  %1802 = vmatpush.msra.mxu0 %v1676
  %1803 = vmatpush.msra.mxu0 %v1675
  %1804 = vmatmul.f32.gmra.mxu0 %v1786
  %v1805 = vpop.f32.mrf.mxu0
  %v1806 = vadd.f32 0.0, %v1805
  %1807 = vdwg.mxu0
  %v1808 = vperm.slane %v1806, 0
  %v1809 = vadd.f32 %v1784, %v1808
  %vm1810 = vcmp.ge.f32.partialorder %v1809, 0.0
  %v1811 = vmul.f32 %v1809, 0.2
  %v1812 = vsel %vm1810, %v1809, %v1811
  %v1813 = vpack.c.bf16 %v1812, %v1812
  %v1814 = vld [vmem:[%s12] sm:$0x3]
  %vm1815 = vcmask 64512
  %v1817 = vsel %vm1815, %v1814, 0
  %vm1819 = vcmask 1043456
  %v1821 = vsel %vm1819, %v1813, 0
  %1823 = vmatpush.bf16.msra.mxu0 0
  %1824 = vmatpush.bf16.msra.mxu0 0
  %1825 = vmatpush.bf16.msra.mxu0 0
  %1826 = vmatpush.bf16.msra.mxu0 0
  %1827 = vmatpush.bf16.msra.mxu0 0
  %1828 = vmatpush.bf16.msra.mxu0 0
  %1829 = vmatpush.bf16.msra.mxu0 0
  %1830 = vmatpush.bf16.msra.mxu0 %v1821
  %1831 = vmatmul.bf16.gmra.mxu0 %v1817
  %v1832 = vpop.f32.mrf.mxu0
  %v1833 = vadd.f32 0.0, %v1832
  %v1834 = vpop.f32.mrf.mxu0
  %1835 = vdwg.mxu0
  %v1836 = vpack.c.bf16 %v1833, %v1833
  %v1837 = vld [vmem:[%s13] sm:$0xf]
  %v1838 = vld [vmem:[%s13 + $0x4] sm:$0xf]
  %v1839 = vld [vmem:[%s13 + $0x8] sm:$0xf]
  %v1840 = vld [vmem:[%s13 + $0xc] sm:$0xf]
  %v1841 = vld [vmem:[%s13 + $0x10] sm:$0xf]
  %v1842 = vld [vmem:[%s13 + $0x14] sm:$0xf]
  %v1843 = vld [vmem:[%s13 + $0x18] sm:$0xf]
  %v1844 = vld [vmem:[%s13 + $0x1c] sm:$0xf]
  %v1845 = vld [vmem:[%s13 + $0x20] sm:$0xf]
  %v1846 = vld [vmem:[%s13 + $0x24] sm:$0xf]
  %v1847 = vld [vmem:[%s13 + $0x28] sm:$0xf]
  %v1848 = vld [vmem:[%s13 + $0x2c] sm:$0xf]
  %v1849 = vld [vmem:[%s13 + $0x30] sm:$0xf]
  %v1850 = vld [vmem:[%s13 + $0x34] sm:$0xf]
  %v1851 = vld [vmem:[%s13 + $0x38] sm:$0xf]
  %v1852 = vld [vmem:[%s13 + $0x3c] sm:$0xf]
  %s1853 = scalar_lea.vmem %s12, 2
  %v1854 = vld [vmem:[%s1853] sm:$0x3]
  %v1856 = vsel %vm1815, %v1854, 0
  %1858 = vmatpush.bf16.msra.mxu0 0
  %1859 = vmatpush.bf16.msra.mxu0 0
  %1860 = vmatpush.bf16.msra.mxu0 0
  %1861 = vmatpush.bf16.msra.mxu0 0
  %1862 = vmatpush.bf16.msra.mxu0 0
  %1863 = vmatpush.bf16.msra.mxu0 0
  %1864 = vmatpush.bf16.msra.mxu0 0
  %1865 = vmatpush.bf16.msra.mxu0 %v1821
  %1866 = vmatmul.bf16.gmra.mxu0 %v1856
  %v1867 = vpop.f32.mrf.mxu0
  %v1868 = vadd.f32 0.0, %v1867
  %v1869 = vpop.f32.mrf.mxu0
  %1870 = vdwg.mxu0
  %v1871 = vpack.c.bf16 %v1868, %v1868
  %s1872 = scalar_lea.vmem %s13, 64
  %v1873 = vld [vmem:[%s1872] sm:$0xf]
  %v1874 = vld [vmem:[%s1872 + $0x4] sm:$0xf]
  %v1875 = vld [vmem:[%s1872 + $0x8] sm:$0xf]
  %v1876 = vld [vmem:[%s1872 + $0xc] sm:$0xf]
  %v1877 = vld [vmem:[%s1872 + $0x10] sm:$0xf]
  %v1878 = vld [vmem:[%s1872 + $0x14] sm:$0xf]
  %v1879 = vld [vmem:[%s1872 + $0x18] sm:$0xf]
  %v1880 = vld [vmem:[%s1872 + $0x1c] sm:$0xf]
  %v1881 = vld [vmem:[%s1872 + $0x20] sm:$0xf]
  %v1882 = vld [vmem:[%s1872 + $0x24] sm:$0xf]
  %v1883 = vld [vmem:[%s1872 + $0x28] sm:$0xf]
  %v1884 = vld [vmem:[%s1872 + $0x2c] sm:$0xf]
  %v1885 = vld [vmem:[%s1872 + $0x30] sm:$0xf]
  %v1886 = vld [vmem:[%s1872 + $0x34] sm:$0xf]
  %v1887 = vld [vmem:[%s1872 + $0x38] sm:$0xf]
  %v1888 = vld [vmem:[%s1872 + $0x3c] sm:$0xf]
  %v1905 = vunpack.c.l.b16 %v1873
  %v1906 = vunpack.c.l.b16 %v1874
  %v1907 = vunpack.c.l.b16 %v1875
  %v1908 = vunpack.c.l.b16 %v1876
  %v1909 = vunpack.c.l.b16 %v1877
  %v1910 = vunpack.c.l.b16 %v1878
  %v1911 = vunpack.c.l.b16 %v1879
  %v1912 = vunpack.c.l.b16 %v1880
  %v1913 = vunpack.c.l.b16 %v1881
  %v1914 = vunpack.c.l.b16 %v1882
  %v1915 = vunpack.c.l.b16 %v1883
  %v1916 = vunpack.c.l.b16 %v1884
  %v1917 = vunpack.c.l.b16 %v1885
  %v1918 = vunpack.c.l.b16 %v1886
  %v1919 = vunpack.c.l.b16 %v1887
  %v1920 = vunpack.c.l.b16 %v1888
  %v1921 = vpack.c.b16 %v1906, %v1905
  %v1922 = vpack.c.b16 %v1908, %v1907
  %v1923 = vpack.c.b16 %v1910, %v1909
  %v1924 = vpack.c.b16 %v1912, %v1911
  %v1925 = vpack.c.b16 %v1914, %v1913
  %v1926 = vpack.c.b16 %v1916, %v1915
  %v1927 = vpack.c.b16 %v1918, %v1917
  %v1928 = vpack.c.b16 %v1920, %v1919
  %1937 = vmatpush.bf16.msra.mxu0 %v1928
  %1938 = vmatpush.bf16.msra.mxu0 %v1927
  %1939 = vmatpush.bf16.msra.mxu0 %v1926
  %1940 = vmatpush.bf16.msra.mxu0 %v1925
  %1941 = vmatpush.bf16.msra.mxu0 %v1924
  %1942 = vmatpush.bf16.msra.mxu0 %v1923
  %1943 = vmatpush.bf16.msra.mxu0 %v1922
  %1944 = vmatpush.bf16.msra.mxu0 %v1921
  %1945 = vmatmul.bf16.gmra.mxu0 %v1871
  %v1946 = vpop.f32.mrf.mxu0
  %v1947 = vadd.f32 0.0, %v1946
  %v1948 = vpop.f32.mrf.mxu0
  %1949 = vdwg.mxu0
  %v1966 = vunpack.c.l.b16 %v1837
  %v1967 = vunpack.c.l.b16 %v1838
  %v1968 = vunpack.c.l.b16 %v1839
  %v1969 = vunpack.c.l.b16 %v1840
  %v1970 = vunpack.c.l.b16 %v1841
  %v1971 = vunpack.c.l.b16 %v1842
  %v1972 = vunpack.c.l.b16 %v1843
  %v1973 = vunpack.c.l.b16 %v1844
  %v1974 = vunpack.c.l.b16 %v1845
  %v1975 = vunpack.c.l.b16 %v1846
  %v1976 = vunpack.c.l.b16 %v1847
  %v1977 = vunpack.c.l.b16 %v1848
  %v1978 = vunpack.c.l.b16 %v1849
  %v1979 = vunpack.c.l.b16 %v1850
  %v1980 = vunpack.c.l.b16 %v1851
  %v1981 = vunpack.c.l.b16 %v1852
  %v1982 = vpack.c.b16 %v1967, %v1966
  %v1983 = vpack.c.b16 %v1969, %v1968
  %v1984 = vpack.c.b16 %v1971, %v1970
  %v1985 = vpack.c.b16 %v1973, %v1972
  %v1986 = vpack.c.b16 %v1975, %v1974
  %v1987 = vpack.c.b16 %v1977, %v1976
  %v1988 = vpack.c.b16 %v1979, %v1978
  %v1989 = vpack.c.b16 %v1981, %v1980
  %1998 = vmatpush.bf16.msra.mxu0 %v1989
  %1999 = vmatpush.bf16.msra.mxu0 %v1988
  %2000 = vmatpush.bf16.msra.mxu0 %v1987
  %2001 = vmatpush.bf16.msra.mxu0 %v1986
  %2002 = vmatpush.bf16.msra.mxu0 %v1985
  %2003 = vmatpush.bf16.msra.mxu0 %v1984
  %2004 = vmatpush.bf16.msra.mxu0 %v1983
  %2005 = vmatpush.bf16.msra.mxu0 %v1982
  %2006 = vmatmul.bf16.gmra.mxu0 %v1836
  %v2007 = vpop.f32.mrf.mxu0
  %v2008 = vadd.f32 %v1947, %v2007
  %v2009 = vpop.f32.mrf.mxu0
  %2010 = vdwg.mxu0
  %s2011 = scalar_lea.vmem %s12, 4
  %v2012 = vld [vmem:[%s2011] sm:$0x3]
  %v2014 = vsel %vm1815, %v2012, 0
  %2016 = vmatpush.bf16.msra.mxu0 0
  %2017 = vmatpush.bf16.msra.mxu0 0
  %2018 = vmatpush.bf16.msra.mxu0 0
  %2019 = vmatpush.bf16.msra.mxu0 0
  %2020 = vmatpush.bf16.msra.mxu0 0
  %2021 = vmatpush.bf16.msra.mxu0 0
  %2022 = vmatpush.bf16.msra.mxu0 0
  %2023 = vmatpush.bf16.msra.mxu0 %v1821
  %2024 = vmatmul.bf16.gmra.mxu0 %v2014
  %v2025 = vpop.f32.mrf.mxu0
  %v2026 = vadd.f32 0.0, %v2025
  %v2027 = vpop.f32.mrf.mxu0
  %2028 = vdwg.mxu0
  %v2029 = vpack.c.bf16 %v2026, %v2026
  %s2030 = scalar_lea.vmem %s13, 128
  %v2031 = vld [vmem:[%s2030] sm:$0xf]
  %v2032 = vld [vmem:[%s2030 + $0x4] sm:$0xf]
  %v2033 = vld [vmem:[%s2030 + $0x8] sm:$0xf]
  %v2034 = vld [vmem:[%s2030 + $0xc] sm:$0xf]
  %v2035 = vld [vmem:[%s2030 + $0x10] sm:$0xf]
  %v2036 = vld [vmem:[%s2030 + $0x14] sm:$0xf]
  %v2037 = vld [vmem:[%s2030 + $0x18] sm:$0xf]
  %v2038 = vld [vmem:[%s2030 + $0x1c] sm:$0xf]
  %v2039 = vld [vmem:[%s2030 + $0x20] sm:$0xf]
  %v2040 = vld [vmem:[%s2030 + $0x24] sm:$0xf]
  %v2041 = vld [vmem:[%s2030 + $0x28] sm:$0xf]
  %v2042 = vld [vmem:[%s2030 + $0x2c] sm:$0xf]
  %v2043 = vld [vmem:[%s2030 + $0x30] sm:$0xf]
  %v2044 = vld [vmem:[%s2030 + $0x34] sm:$0xf]
  %v2045 = vld [vmem:[%s2030 + $0x38] sm:$0xf]
  %v2046 = vld [vmem:[%s2030 + $0x3c] sm:$0xf]
  %v2063 = vunpack.c.l.b16 %v2031
  %v2064 = vunpack.c.l.b16 %v2032
  %v2065 = vunpack.c.l.b16 %v2033
  %v2066 = vunpack.c.l.b16 %v2034
  %v2067 = vunpack.c.l.b16 %v2035
  %v2068 = vunpack.c.l.b16 %v2036
  %v2069 = vunpack.c.l.b16 %v2037
  %v2070 = vunpack.c.l.b16 %v2038
  %v2071 = vunpack.c.l.b16 %v2039
  %v2072 = vunpack.c.l.b16 %v2040
  %v2073 = vunpack.c.l.b16 %v2041
  %v2074 = vunpack.c.l.b16 %v2042
  %v2075 = vunpack.c.l.b16 %v2043
  %v2076 = vunpack.c.l.b16 %v2044
  %v2077 = vunpack.c.l.b16 %v2045
  %v2078 = vunpack.c.l.b16 %v2046
  %v2079 = vpack.c.b16 %v2064, %v2063
  %v2080 = vpack.c.b16 %v2066, %v2065
  %v2081 = vpack.c.b16 %v2068, %v2067
  %v2082 = vpack.c.b16 %v2070, %v2069
  %v2083 = vpack.c.b16 %v2072, %v2071
  %v2084 = vpack.c.b16 %v2074, %v2073
  %v2085 = vpack.c.b16 %v2076, %v2075
  %v2086 = vpack.c.b16 %v2078, %v2077
  %2095 = vmatpush.bf16.msra.mxu0 %v2086
  %2096 = vmatpush.bf16.msra.mxu0 %v2085
  %2097 = vmatpush.bf16.msra.mxu0 %v2084
  %2098 = vmatpush.bf16.msra.mxu0 %v2083
  %2099 = vmatpush.bf16.msra.mxu0 %v2082
  %2100 = vmatpush.bf16.msra.mxu0 %v2081
  %2101 = vmatpush.bf16.msra.mxu0 %v2080
  %2102 = vmatpush.bf16.msra.mxu0 %v2079
  %2103 = vmatmul.bf16.gmra.mxu0 %v2029
  %v2104 = vpop.f32.mrf.mxu0
  %v2105 = vadd.f32 0.0, %v2104
  %v2106 = vpop.f32.mrf.mxu0
  %2107 = vdwg.mxu0
  %v2108 = vadd.f32 %v2008, %v2105
  %s2109 = scalar_lea.vmem %s12, 6
  %v2110 = vld [vmem:[%s2109] sm:$0x3]
  %v2112 = vsel %vm1815, %v2110, 0
  %2114 = vmatpush.bf16.msra.mxu0 0
  %2115 = vmatpush.bf16.msra.mxu0 0
  %2116 = vmatpush.bf16.msra.mxu0 0
  %2117 = vmatpush.bf16.msra.mxu0 0
  %2118 = vmatpush.bf16.msra.mxu0 0
  %2119 = vmatpush.bf16.msra.mxu0 0
  %2120 = vmatpush.bf16.msra.mxu0 0
  %2121 = vmatpush.bf16.msra.mxu0 %v1821
  %2122 = vmatmul.bf16.gmra.mxu0 %v2112
  %v2123 = vpop.f32.mrf.mxu0
  %v2124 = vadd.f32 0.0, %v2123
  %v2125 = vpop.f32.mrf.mxu0
  %2126 = vdwg.mxu0
  %v2127 = vpack.c.bf16 %v2124, %v2124
  %s2128 = scalar_lea.vmem %s13, 192
  %v2129 = vld [vmem:[%s2128] sm:$0xf]
  %v2130 = vld [vmem:[%s2128 + $0x4] sm:$0xf]
  %v2131 = vld [vmem:[%s2128 + $0x8] sm:$0xf]
  %v2132 = vld [vmem:[%s2128 + $0xc] sm:$0xf]
  %v2133 = vld [vmem:[%s2128 + $0x10] sm:$0xf]
  %v2134 = vld [vmem:[%s2128 + $0x14] sm:$0xf]
  %v2135 = vld [vmem:[%s2128 + $0x18] sm:$0xf]
  %v2136 = vld [vmem:[%s2128 + $0x1c] sm:$0xf]
  %v2137 = vld [vmem:[%s2128 + $0x20] sm:$0xf]
  %v2138 = vld [vmem:[%s2128 + $0x24] sm:$0xf]
  %v2139 = vld [vmem:[%s2128 + $0x28] sm:$0xf]
  %v2140 = vld [vmem:[%s2128 + $0x2c] sm:$0xf]
  %v2141 = vld [vmem:[%s2128 + $0x30] sm:$0xf]
  %v2142 = vld [vmem:[%s2128 + $0x34] sm:$0xf]
  %v2143 = vld [vmem:[%s2128 + $0x38] sm:$0xf]
  %v2144 = vld [vmem:[%s2128 + $0x3c] sm:$0xf]
  %v2161 = vunpack.c.l.b16 %v2129
  %v2162 = vunpack.c.l.b16 %v2130
  %v2163 = vunpack.c.l.b16 %v2131
  %v2164 = vunpack.c.l.b16 %v2132
  %v2165 = vunpack.c.l.b16 %v2133
  %v2166 = vunpack.c.l.b16 %v2134
  %v2167 = vunpack.c.l.b16 %v2135
  %v2168 = vunpack.c.l.b16 %v2136
  %v2169 = vunpack.c.l.b16 %v2137
  %v2170 = vunpack.c.l.b16 %v2138
  %v2171 = vunpack.c.l.b16 %v2139
  %v2172 = vunpack.c.l.b16 %v2140
  %v2173 = vunpack.c.l.b16 %v2141
  %v2174 = vunpack.c.l.b16 %v2142
  %v2175 = vunpack.c.l.b16 %v2143
  %v2176 = vunpack.c.l.b16 %v2144
  %v2177 = vpack.c.b16 %v2162, %v2161
  %v2178 = vpack.c.b16 %v2164, %v2163
  %v2179 = vpack.c.b16 %v2166, %v2165
  %v2180 = vpack.c.b16 %v2168, %v2167
  %v2181 = vpack.c.b16 %v2170, %v2169
  %v2182 = vpack.c.b16 %v2172, %v2171
  %v2183 = vpack.c.b16 %v2174, %v2173
  %v2184 = vpack.c.b16 %v2176, %v2175
  %2193 = vmatpush.bf16.msra.mxu0 %v2184
  %2194 = vmatpush.bf16.msra.mxu0 %v2183
  %2195 = vmatpush.bf16.msra.mxu0 %v2182
  %2196 = vmatpush.bf16.msra.mxu0 %v2181
  %2197 = vmatpush.bf16.msra.mxu0 %v2180
  %2198 = vmatpush.bf16.msra.mxu0 %v2179
  %2199 = vmatpush.bf16.msra.mxu0 %v2178
  %2200 = vmatpush.bf16.msra.mxu0 %v2177
  %2201 = vmatmul.bf16.gmra.mxu0 %v2127
  %v2202 = vpop.f32.mrf.mxu0
  %v2203 = vadd.f32 0.0, %v2202
  %v2204 = vpop.f32.mrf.mxu0
  %2205 = vdwg.mxu0
  %v2206 = vadd.f32 %v2108, %v2203
  %v2207 = vand.u32 %v1019, 63
  %v2208 = vand.u32 %v1020, 63
  %v2209 = vand.u32 %v1021, 63
  %v2210 = vand.u32 %v1022, 63
  %v2211 = vand.u32 %v1023, 63
  %v2212 = vand.u32 %v1024, 63
  %v2213 = vand.u32 %v1025, 63
  %v2214 = vand.u32 %v1026, 63
  %v2215 = vand.u32 %v1027, 63
  %v2216 = vand.u32 %v1028, 63
  %v2217 = vand.u32 %v1029, 63
  %v2218 = vand.u32 %v1030, 63
  %v2219 = vand.u32 %v1031, 63
  %v2220 = vand.u32 %v1032, 63
  %v2221 = vand.u32 %v1033, 63
  %v2222 = vand.u32 %v1034, 63
  %vm2223 = vcmp.eq.s32.totalorder %v2207, %v1036
  %vm2224 = vcmp.eq.s32.totalorder %v2208, %v1036
  %vm2225 = vcmp.eq.s32.totalorder %v2209, %v1036
  %vm2226 = vcmp.eq.s32.totalorder %v2210, %v1036
  %vm2227 = vcmp.eq.s32.totalorder %v2211, %v1036
  %vm2228 = vcmp.eq.s32.totalorder %v2212, %v1036
  %vm2229 = vcmp.eq.s32.totalorder %v2213, %v1036
  %vm2230 = vcmp.eq.s32.totalorder %v2214, %v1036
  %vm2231 = vcmp.eq.s32.totalorder %v2215, %v1036
  %vm2232 = vcmp.eq.s32.totalorder %v2216, %v1036
  %vm2233 = vcmp.eq.s32.totalorder %v2217, %v1036
  %vm2234 = vcmp.eq.s32.totalorder %v2218, %v1036
  %vm2235 = vcmp.eq.s32.totalorder %v2219, %v1036
  %vm2236 = vcmp.eq.s32.totalorder %v2220, %v1036
  %vm2237 = vcmp.eq.s32.totalorder %v2221, %v1036
  %vm2238 = vcmp.eq.s32.totalorder %v2222, %v1036
  %v2239 = vsel %vm2223, 1.0, 0.0
  %v2240 = vsel %vm2224, 1.0, 0.0
  %v2241 = vsel %vm2225, 1.0, 0.0
  %v2242 = vsel %vm2226, 1.0, 0.0
  %v2243 = vsel %vm2227, 1.0, 0.0
  %v2244 = vsel %vm2228, 1.0, 0.0
  %v2245 = vsel %vm2229, 1.0, 0.0
  %v2246 = vsel %vm2230, 1.0, 0.0
  %v2247 = vsel %vm2231, 1.0, 0.0
  %v2248 = vsel %vm2232, 1.0, 0.0
  %v2249 = vsel %vm2233, 1.0, 0.0
  %v2250 = vsel %vm2234, 1.0, 0.0
  %v2251 = vsel %vm2235, 1.0, 0.0
  %v2252 = vsel %vm2236, 1.0, 0.0
  %v2253 = vsel %vm2237, 1.0, 0.0
  %v2254 = vsel %vm2238, 1.0, 0.0
  %v2255 = vand.u32 %v1036, 63
  %vm2256 = vcmp.eq.s32.totalorder %v2255, %v1019
  %vm2257 = vcmp.eq.s32.totalorder %v2255, %v1020
  %vm2258 = vcmp.eq.s32.totalorder %v2255, %v1021
  %vm2259 = vcmp.eq.s32.totalorder %v2255, %v1022
  %vm2260 = vcmp.eq.s32.totalorder %v2255, %v1023
  %vm2261 = vcmp.eq.s32.totalorder %v2255, %v1024
  %vm2262 = vcmp.eq.s32.totalorder %v2255, %v1025
  %vm2263 = vcmp.eq.s32.totalorder %v2255, %v1026
  %v2264 = vsel %vm2256, 1.0, 0.0
  %v2265 = vsel %vm2257, 1.0, 0.0
  %v2266 = vsel %vm2258, 1.0, 0.0
  %v2267 = vsel %vm2259, 1.0, 0.0
  %v2268 = vsel %vm2260, 1.0, 0.0
  %v2269 = vsel %vm2261, 1.0, 0.0
  %v2270 = vsel %vm2262, 1.0, 0.0
  %v2271 = vsel %vm2263, 1.0, 0.0
  %v2272 = vsel %vm1819, %v2206, 0.0
  %v2273 = vrot.slane %v2272, 4
  %v2274 = vadd.f32 %v2272, %v2273
  %v2275 = vrot.slane %v2274, 2
  %v2276 = vadd.f32 %v2274, %v2275
  %v2277 = vrot.slane %v2276, 1
  %v2278 = vadd.f32 %v2276, %v2277
  %v2279 = vmul.f32 %v2206, %v2206
  %v2280 = vsel %vm1819, %v2279, 0.0
  %v2281 = vrot.slane %v2280, 4
  %v2282 = vadd.f32 %v2280, %v2281
  %v2283 = vrot.slane %v2282, 2
  %v2284 = vadd.f32 %v2282, %v2283
  %v2285 = vrot.slane %v2284, 1
  %v2286 = vadd.f32 %v2284, %v2285
  %2287 = vmatpush.msra.mxu0 %v2254
  %2288 = vmatpush.msra.mxu0 %v2253
  %2289 = vmatpush.msra.mxu0 %v2252
  %2290 = vmatpush.msra.mxu0 %v2251
  %2291 = vmatpush.msra.mxu0 %v2250
  %2292 = vmatpush.msra.mxu0 %v2249
  %2293 = vmatpush.msra.mxu0 %v2248
  %2294 = vmatpush.msra.mxu0 %v2247
  %2295 = vmatpush.msra.mxu0 %v2246
  %2296 = vmatpush.msra.mxu0 %v2245
  %2297 = vmatpush.msra.mxu0 %v2244
  %2298 = vmatpush.msra.mxu0 %v2243
  %2299 = vmatpush.msra.mxu0 %v2242
  %2300 = vmatpush.msra.mxu0 %v2241
  %2301 = vmatpush.msra.mxu0 %v2240
  %2302 = vmatpush.msra.mxu0 %v2239
  %2303 = vmatmul.f32.gmra.mxu0 %v2278
  %v2304 = vpop.f32.mrf.mxu0
  %v2305 = vadd.f32 0.0, %v2304
  %2306 = vdwg.mxu0
  %v2307 = vrcp.pop 8.0
  %v2308 = vmul.f32 8.0, %v2307
  %v2309 = vsub.f32 1.0, %v2308
  %v2310 = vmul.f32 %v2307, %v2309
  %v2311 = vadd.f32 %v2307, %v2310
  %vm2312 = vweird.f32 %v2307
  %v2313 = vsel %vm2312, %v2307, %v2311
  %v2314 = vmul.f32 %v2305, %v2313
  %2315 = vmatpush.msra.mxu0 %v2254
  %2316 = vmatpush.msra.mxu0 %v2253
  %2317 = vmatpush.msra.mxu0 %v2252
  %2318 = vmatpush.msra.mxu0 %v2251
  %2319 = vmatpush.msra.mxu0 %v2250
  %2320 = vmatpush.msra.mxu0 %v2249
  %2321 = vmatpush.msra.mxu0 %v2248
  %2322 = vmatpush.msra.mxu0 %v2247
  %2323 = vmatpush.msra.mxu0 %v2246
  %2324 = vmatpush.msra.mxu0 %v2245
  %2325 = vmatpush.msra.mxu0 %v2244
  %2326 = vmatpush.msra.mxu0 %v2243
  %2327 = vmatpush.msra.mxu0 %v2242
  %2328 = vmatpush.msra.mxu0 %v2241
  %2329 = vmatpush.msra.mxu0 %v2240
  %2330 = vmatpush.msra.mxu0 %v2239
  %2331 = vmatmul.f32.gmra.mxu0 %v2286
  %v2332 = vpop.f32.mrf.mxu0
  %v2333 = vadd.f32 0.0, %v2332
  %2334 = vdwg.mxu0
  %v2335 = vmul.f32 %v2333, %v2313
  %v2336 = vmul.f32 %v2314, %v2314
  %v2337 = vsub.f32 %v2335, %v2336
  %v2338 = vmax.f32 %v2337, 0.0
  %v2339 = vld [vmem:[%s14] sm:$0x1]
  %v2340 = vadd.f32 %v2338, 1e-05
  %v2341 = vrsqrt.pop %v2340
  %v2342 = vmul.f32 %v2341, %v2340
  %v2343 = vmul.f32 %v2342, %v2341
  %v2344 = vmul.f32 0.5, %v2343
  %v2345 = vsub.f32 1.5, %v2344
  %v2346 = vmul.f32 %v2341, %v2345
  %vm2347 = vweird.f32 %v2340
  %vm2348 = vweird.f32 %v2341
  %vm2349 = vmor %vm2347, %vm2348
  %v2350 = vsel %vm2349, %v2341, %v2346
  %v2351 = vmul.f32 %v2339, %v2350
  %v2352 = vld [vmem:[%s15] sm:$0x1]
  %v2353 = vmul.f32 %v2314, %v2351
  %v2354 = vsub.f32 %v2352, %v2353
  %v2356 = vsel %vm115, %v2351, 0
  %2358 = vmatpush.msra.mxu0 0.0
  %2359 = vmatpush.msra.mxu0 0.0
  %2360 = vmatpush.msra.mxu0 0.0
  %2361 = vmatpush.msra.mxu0 0.0
  %2362 = vmatpush.msra.mxu0 0.0
  %2363 = vmatpush.msra.mxu0 0.0
  %2364 = vmatpush.msra.mxu0 0.0
  %2365 = vmatpush.msra.mxu0 0.0
  %2366 = vmatpush.msra.mxu0 %v2271
  %2367 = vmatpush.msra.mxu0 %v2270
  %2368 = vmatpush.msra.mxu0 %v2269
  %2369 = vmatpush.msra.mxu0 %v2268
  %2370 = vmatpush.msra.mxu0 %v2267
  %2371 = vmatpush.msra.mxu0 %v2266
  %2372 = vmatpush.msra.mxu0 %v2265
  %2373 = vmatpush.msra.mxu0 %v2264
  %2374 = vmatmul.f32.gmra.mxu0 %v2356
  %v2375 = vpop.f32.mrf.mxu0
  %v2376 = vadd.f32 0.0, %v2375
  %2377 = vdwg.mxu0
  %v2378 = vperm.slane %v2376, 0
  %v2379 = vmul.f32 %v2206, %v2378
  %v2381 = vsel %vm115, %v2354, 0
  %2383 = vmatpush.msra.mxu0 0.0
  %2384 = vmatpush.msra.mxu0 0.0
  %2385 = vmatpush.msra.mxu0 0.0
  %2386 = vmatpush.msra.mxu0 0.0
  %2387 = vmatpush.msra.mxu0 0.0
  %2388 = vmatpush.msra.mxu0 0.0
  %2389 = vmatpush.msra.mxu0 0.0
  %2390 = vmatpush.msra.mxu0 0.0
  %2391 = vmatpush.msra.mxu0 %v2271
  %2392 = vmatpush.msra.mxu0 %v2270
  %2393 = vmatpush.msra.mxu0 %v2269
  %2394 = vmatpush.msra.mxu0 %v2268
  %2395 = vmatpush.msra.mxu0 %v2267
  %2396 = vmatpush.msra.mxu0 %v2266
  %2397 = vmatpush.msra.mxu0 %v2265
  %2398 = vmatpush.msra.mxu0 %v2264
  %2399 = vmatmul.f32.gmra.mxu0 %v2381
  %v2400 = vpop.f32.mrf.mxu0
  %v2401 = vadd.f32 0.0, %v2400
  %2402 = vdwg.mxu0
  %v2403 = vperm.slane %v2401, 0
  %v2404 = vadd.f32 %v2379, %v2403
  %vm2405 = vcmp.ge.f32.partialorder %v2404, 0.0
  %v2406 = vmul.f32 %v2404, 0.2
  %v2407 = vsel %vm2405, %v2404, %v2406
  %v2408 = vpack.c.bf16 %v2407, %v2407
  %v2409 = vld [vmem:[%s16] sm:$0x3]
  %vm2410 = vcmask 31744
  %v2412 = vsel %vm2410, %v2409, 0
  %vm2414 = vcmask 1041408
  %v2416 = vsel %vm2414, %v2408, 0
  %2418 = vmatpush.bf16.msra.mxu0 0
  %2419 = vmatpush.bf16.msra.mxu0 0
  %2420 = vmatpush.bf16.msra.mxu0 0
  %2421 = vmatpush.bf16.msra.mxu0 0
  %2422 = vmatpush.bf16.msra.mxu0 0
  %2423 = vmatpush.bf16.msra.mxu0 0
  %2424 = vmatpush.bf16.msra.mxu0 0
  %2425 = vmatpush.bf16.msra.mxu0 %v2416
  %2426 = vmatmul.bf16.gmra.mxu0 %v2412
  %v2427 = vpop.f32.mrf.mxu0
  %v2428 = vadd.f32 0.0, %v2427
  %v2429 = vpop.f32.mrf.mxu0
  %2430 = vdwg.mxu0
  %v2431 = vpack.c.bf16 %v2428, %v2428
  %v2432 = vld [vmem:[%s17] sm:$0xf]
  %v2433 = vld [vmem:[%s17 + $0x4] sm:$0xf]
  %v2434 = vld [vmem:[%s17 + $0x8] sm:$0xf]
  %v2435 = vld [vmem:[%s17 + $0xc] sm:$0xf]
  %v2436 = vld [vmem:[%s17 + $0x10] sm:$0xf]
  %v2437 = vld [vmem:[%s17 + $0x14] sm:$0xf]
  %v2438 = vld [vmem:[%s17 + $0x18] sm:$0xf]
  %v2439 = vld [vmem:[%s17 + $0x1c] sm:$0xf]
  %v2440 = vld [vmem:[%s17 + $0x20] sm:$0xf]
  %v2441 = vld [vmem:[%s17 + $0x24] sm:$0xf]
  %v2442 = vld [vmem:[%s17 + $0x28] sm:$0xf]
  %v2443 = vld [vmem:[%s17 + $0x2c] sm:$0xf]
  %v2444 = vld [vmem:[%s17 + $0x30] sm:$0xf]
  %v2445 = vld [vmem:[%s17 + $0x34] sm:$0xf]
  %v2446 = vld [vmem:[%s17 + $0x38] sm:$0xf]
  %v2447 = vld [vmem:[%s17 + $0x3c] sm:$0xf]
  %s2448 = scalar_lea.vmem %s16, 2
  %v2449 = vld [vmem:[%s2448] sm:$0x3]
  %v2451 = vsel %vm2410, %v2449, 0
  %2453 = vmatpush.bf16.msra.mxu0 0
  %2454 = vmatpush.bf16.msra.mxu0 0
  %2455 = vmatpush.bf16.msra.mxu0 0
  %2456 = vmatpush.bf16.msra.mxu0 0
  %2457 = vmatpush.bf16.msra.mxu0 0
  %2458 = vmatpush.bf16.msra.mxu0 0
  %2459 = vmatpush.bf16.msra.mxu0 0
  %2460 = vmatpush.bf16.msra.mxu0 %v2416
  %2461 = vmatmul.bf16.gmra.mxu0 %v2451
  %v2462 = vpop.f32.mrf.mxu0
  %v2463 = vadd.f32 0.0, %v2462
  %v2464 = vpop.f32.mrf.mxu0
  %2465 = vdwg.mxu0
  %v2466 = vpack.c.bf16 %v2463, %v2463
  %s2467 = scalar_lea.vmem %s17, 64
  %v2468 = vld [vmem:[%s2467] sm:$0xf]
  %v2469 = vld [vmem:[%s2467 + $0x4] sm:$0xf]
  %v2470 = vld [vmem:[%s2467 + $0x8] sm:$0xf]
  %v2471 = vld [vmem:[%s2467 + $0xc] sm:$0xf]
  %v2472 = vld [vmem:[%s2467 + $0x10] sm:$0xf]
  %v2473 = vld [vmem:[%s2467 + $0x14] sm:$0xf]
  %v2474 = vld [vmem:[%s2467 + $0x18] sm:$0xf]
  %v2475 = vld [vmem:[%s2467 + $0x1c] sm:$0xf]
  %v2476 = vld [vmem:[%s2467 + $0x20] sm:$0xf]
  %v2477 = vld [vmem:[%s2467 + $0x24] sm:$0xf]
  %v2478 = vld [vmem:[%s2467 + $0x28] sm:$0xf]
  %v2479 = vld [vmem:[%s2467 + $0x2c] sm:$0xf]
  %v2480 = vld [vmem:[%s2467 + $0x30] sm:$0xf]
  %v2481 = vld [vmem:[%s2467 + $0x34] sm:$0xf]
  %v2482 = vld [vmem:[%s2467 + $0x38] sm:$0xf]
  %v2483 = vld [vmem:[%s2467 + $0x3c] sm:$0xf]
  %v2500 = vunpack.c.l.b16 %v2468
  %v2501 = vunpack.c.l.b16 %v2469
  %v2502 = vunpack.c.l.b16 %v2470
  %v2503 = vunpack.c.l.b16 %v2471
  %v2504 = vunpack.c.l.b16 %v2472
  %v2505 = vunpack.c.l.b16 %v2473
  %v2506 = vunpack.c.l.b16 %v2474
  %v2507 = vunpack.c.l.b16 %v2475
  %v2508 = vunpack.c.l.b16 %v2476
  %v2509 = vunpack.c.l.b16 %v2477
  %v2510 = vunpack.c.l.b16 %v2478
  %v2511 = vunpack.c.l.b16 %v2479
  %v2512 = vunpack.c.l.b16 %v2480
  %v2513 = vunpack.c.l.b16 %v2481
  %v2514 = vunpack.c.l.b16 %v2482
  %v2515 = vunpack.c.l.b16 %v2483
  %v2516 = vpack.c.b16 %v2501, %v2500
  %v2517 = vpack.c.b16 %v2503, %v2502
  %v2518 = vpack.c.b16 %v2505, %v2504
  %v2519 = vpack.c.b16 %v2507, %v2506
  %v2520 = vpack.c.b16 %v2509, %v2508
  %v2521 = vpack.c.b16 %v2511, %v2510
  %v2522 = vpack.c.b16 %v2513, %v2512
  %v2523 = vpack.c.b16 %v2515, %v2514
  %2532 = vmatpush.bf16.msra.mxu0 %v2523
  %2533 = vmatpush.bf16.msra.mxu0 %v2522
  %2534 = vmatpush.bf16.msra.mxu0 %v2521
  %2535 = vmatpush.bf16.msra.mxu0 %v2520
  %2536 = vmatpush.bf16.msra.mxu0 %v2519
  %2537 = vmatpush.bf16.msra.mxu0 %v2518
  %2538 = vmatpush.bf16.msra.mxu0 %v2517
  %2539 = vmatpush.bf16.msra.mxu0 %v2516
  %2540 = vmatmul.bf16.gmra.mxu0 %v2466
  %v2541 = vpop.f32.mrf.mxu0
  %v2542 = vadd.f32 0.0, %v2541
  %v2543 = vpop.f32.mrf.mxu0
  %2544 = vdwg.mxu0
  %v2561 = vunpack.c.l.b16 %v2432
  %v2562 = vunpack.c.l.b16 %v2433
  %v2563 = vunpack.c.l.b16 %v2434
  %v2564 = vunpack.c.l.b16 %v2435
  %v2565 = vunpack.c.l.b16 %v2436
  %v2566 = vunpack.c.l.b16 %v2437
  %v2567 = vunpack.c.l.b16 %v2438
  %v2568 = vunpack.c.l.b16 %v2439
  %v2569 = vunpack.c.l.b16 %v2440
  %v2570 = vunpack.c.l.b16 %v2441
  %v2571 = vunpack.c.l.b16 %v2442
  %v2572 = vunpack.c.l.b16 %v2443
  %v2573 = vunpack.c.l.b16 %v2444
  %v2574 = vunpack.c.l.b16 %v2445
  %v2575 = vunpack.c.l.b16 %v2446
  %v2576 = vunpack.c.l.b16 %v2447
  %v2577 = vpack.c.b16 %v2562, %v2561
  %v2578 = vpack.c.b16 %v2564, %v2563
  %v2579 = vpack.c.b16 %v2566, %v2565
  %v2580 = vpack.c.b16 %v2568, %v2567
  %v2581 = vpack.c.b16 %v2570, %v2569
  %v2582 = vpack.c.b16 %v2572, %v2571
  %v2583 = vpack.c.b16 %v2574, %v2573
  %v2584 = vpack.c.b16 %v2576, %v2575
  %2593 = vmatpush.bf16.msra.mxu0 %v2584
  %2594 = vmatpush.bf16.msra.mxu0 %v2583
  %2595 = vmatpush.bf16.msra.mxu0 %v2582
  %2596 = vmatpush.bf16.msra.mxu0 %v2581
  %2597 = vmatpush.bf16.msra.mxu0 %v2580
  %2598 = vmatpush.bf16.msra.mxu0 %v2579
  %2599 = vmatpush.bf16.msra.mxu0 %v2578
  %2600 = vmatpush.bf16.msra.mxu0 %v2577
  %2601 = vmatmul.bf16.gmra.mxu0 %v2431
  %v2602 = vpop.f32.mrf.mxu0
  %v2603 = vadd.f32 %v2542, %v2602
  %v2604 = vpop.f32.mrf.mxu0
  %2605 = vdwg.mxu0
  %s2606 = scalar_lea.vmem %s16, 4
  %v2607 = vld [vmem:[%s2606] sm:$0x3]
  %v2609 = vsel %vm2410, %v2607, 0
  %2611 = vmatpush.bf16.msra.mxu0 0
  %2612 = vmatpush.bf16.msra.mxu0 0
  %2613 = vmatpush.bf16.msra.mxu0 0
  %2614 = vmatpush.bf16.msra.mxu0 0
  %2615 = vmatpush.bf16.msra.mxu0 0
  %2616 = vmatpush.bf16.msra.mxu0 0
  %2617 = vmatpush.bf16.msra.mxu0 0
  %2618 = vmatpush.bf16.msra.mxu0 %v2416
  %2619 = vmatmul.bf16.gmra.mxu0 %v2609
  %v2620 = vpop.f32.mrf.mxu0
  %v2621 = vadd.f32 0.0, %v2620
  %v2622 = vpop.f32.mrf.mxu0
  %2623 = vdwg.mxu0
  %v2624 = vpack.c.bf16 %v2621, %v2621
  %s2625 = scalar_lea.vmem %s17, 128
  %v2626 = vld [vmem:[%s2625] sm:$0xf]
  %v2627 = vld [vmem:[%s2625 + $0x4] sm:$0xf]
  %v2628 = vld [vmem:[%s2625 + $0x8] sm:$0xf]
  %v2629 = vld [vmem:[%s2625 + $0xc] sm:$0xf]
  %v2630 = vld [vmem:[%s2625 + $0x10] sm:$0xf]
  %v2631 = vld [vmem:[%s2625 + $0x14] sm:$0xf]
  %v2632 = vld [vmem:[%s2625 + $0x18] sm:$0xf]
  %v2633 = vld [vmem:[%s2625 + $0x1c] sm:$0xf]
  %v2634 = vld [vmem:[%s2625 + $0x20] sm:$0xf]
  %v2635 = vld [vmem:[%s2625 + $0x24] sm:$0xf]
  %v2636 = vld [vmem:[%s2625 + $0x28] sm:$0xf]
  %v2637 = vld [vmem:[%s2625 + $0x2c] sm:$0xf]
  %v2638 = vld [vmem:[%s2625 + $0x30] sm:$0xf]
  %v2639 = vld [vmem:[%s2625 + $0x34] sm:$0xf]
  %v2640 = vld [vmem:[%s2625 + $0x38] sm:$0xf]
  %v2641 = vld [vmem:[%s2625 + $0x3c] sm:$0xf]
  %v2658 = vunpack.c.l.b16 %v2626
  %v2659 = vunpack.c.l.b16 %v2627
  %v2660 = vunpack.c.l.b16 %v2628
  %v2661 = vunpack.c.l.b16 %v2629
  %v2662 = vunpack.c.l.b16 %v2630
  %v2663 = vunpack.c.l.b16 %v2631
  %v2664 = vunpack.c.l.b16 %v2632
  %v2665 = vunpack.c.l.b16 %v2633
  %v2666 = vunpack.c.l.b16 %v2634
  %v2667 = vunpack.c.l.b16 %v2635
  %v2668 = vunpack.c.l.b16 %v2636
  %v2669 = vunpack.c.l.b16 %v2637
  %v2670 = vunpack.c.l.b16 %v2638
  %v2671 = vunpack.c.l.b16 %v2639
  %v2672 = vunpack.c.l.b16 %v2640
  %v2673 = vunpack.c.l.b16 %v2641
  %v2674 = vpack.c.b16 %v2659, %v2658
  %v2675 = vpack.c.b16 %v2661, %v2660
  %v2676 = vpack.c.b16 %v2663, %v2662
  %v2677 = vpack.c.b16 %v2665, %v2664
  %v2678 = vpack.c.b16 %v2667, %v2666
  %v2679 = vpack.c.b16 %v2669, %v2668
  %v2680 = vpack.c.b16 %v2671, %v2670
  %v2681 = vpack.c.b16 %v2673, %v2672
  %2690 = vmatpush.bf16.msra.mxu0 %v2681
  %2691 = vmatpush.bf16.msra.mxu0 %v2680
  %2692 = vmatpush.bf16.msra.mxu0 %v2679
  %2693 = vmatpush.bf16.msra.mxu0 %v2678
  %2694 = vmatpush.bf16.msra.mxu0 %v2677
  %2695 = vmatpush.bf16.msra.mxu0 %v2676
  %2696 = vmatpush.bf16.msra.mxu0 %v2675
  %2697 = vmatpush.bf16.msra.mxu0 %v2674
  %2698 = vmatmul.bf16.gmra.mxu0 %v2624
  %v2699 = vpop.f32.mrf.mxu0
  %v2700 = vadd.f32 0.0, %v2699
  %v2701 = vpop.f32.mrf.mxu0
  %2702 = vdwg.mxu0
  %v2703 = vadd.f32 %v2603, %v2700
  %s2704 = scalar_lea.vmem %s16, 6
  %v2705 = vld [vmem:[%s2704] sm:$0x3]
  %v2707 = vsel %vm2410, %v2705, 0
  %2709 = vmatpush.bf16.msra.mxu0 0
  %2710 = vmatpush.bf16.msra.mxu0 0
  %2711 = vmatpush.bf16.msra.mxu0 0
  %2712 = vmatpush.bf16.msra.mxu0 0
  %2713 = vmatpush.bf16.msra.mxu0 0
  %2714 = vmatpush.bf16.msra.mxu0 0
  %2715 = vmatpush.bf16.msra.mxu0 0
  %2716 = vmatpush.bf16.msra.mxu0 %v2416
  %2717 = vmatmul.bf16.gmra.mxu0 %v2707
  %v2718 = vpop.f32.mrf.mxu0
  %v2719 = vadd.f32 0.0, %v2718
  %v2720 = vpop.f32.mrf.mxu0
  %2721 = vdwg.mxu0
  %v2722 = vpack.c.bf16 %v2719, %v2719
  %s2723 = scalar_lea.vmem %s17, 192
  %v2724 = vld [vmem:[%s2723] sm:$0xf]
  %v2725 = vld [vmem:[%s2723 + $0x4] sm:$0xf]
  %v2726 = vld [vmem:[%s2723 + $0x8] sm:$0xf]
  %v2727 = vld [vmem:[%s2723 + $0xc] sm:$0xf]
  %v2728 = vld [vmem:[%s2723 + $0x10] sm:$0xf]
  %v2729 = vld [vmem:[%s2723 + $0x14] sm:$0xf]
  %v2730 = vld [vmem:[%s2723 + $0x18] sm:$0xf]
  %v2731 = vld [vmem:[%s2723 + $0x1c] sm:$0xf]
  %v2732 = vld [vmem:[%s2723 + $0x20] sm:$0xf]
  %v2733 = vld [vmem:[%s2723 + $0x24] sm:$0xf]
  %v2734 = vld [vmem:[%s2723 + $0x28] sm:$0xf]
  %v2735 = vld [vmem:[%s2723 + $0x2c] sm:$0xf]
  %v2736 = vld [vmem:[%s2723 + $0x30] sm:$0xf]
  %v2737 = vld [vmem:[%s2723 + $0x34] sm:$0xf]
  %v2738 = vld [vmem:[%s2723 + $0x38] sm:$0xf]
  %v2739 = vld [vmem:[%s2723 + $0x3c] sm:$0xf]
  %v2756 = vunpack.c.l.b16 %v2724
  %v2757 = vunpack.c.l.b16 %v2725
  %v2758 = vunpack.c.l.b16 %v2726
  %v2759 = vunpack.c.l.b16 %v2727
  %v2760 = vunpack.c.l.b16 %v2728
  %v2761 = vunpack.c.l.b16 %v2729
  %v2762 = vunpack.c.l.b16 %v2730
  %v2763 = vunpack.c.l.b16 %v2731
  %v2764 = vunpack.c.l.b16 %v2732
  %v2765 = vunpack.c.l.b16 %v2733
  %v2766 = vunpack.c.l.b16 %v2734
  %v2767 = vunpack.c.l.b16 %v2735
  %v2768 = vunpack.c.l.b16 %v2736
  %v2769 = vunpack.c.l.b16 %v2737
  %v2770 = vunpack.c.l.b16 %v2738
  %v2771 = vunpack.c.l.b16 %v2739
  %v2772 = vpack.c.b16 %v2757, %v2756
  %v2773 = vpack.c.b16 %v2759, %v2758
  %v2774 = vpack.c.b16 %v2761, %v2760
  %v2775 = vpack.c.b16 %v2763, %v2762
  %v2776 = vpack.c.b16 %v2765, %v2764
  %v2777 = vpack.c.b16 %v2767, %v2766
  %v2778 = vpack.c.b16 %v2769, %v2768
  %v2779 = vpack.c.b16 %v2771, %v2770
  %2788 = vmatpush.bf16.msra.mxu0 %v2779
  %2789 = vmatpush.bf16.msra.mxu0 %v2778
  %2790 = vmatpush.bf16.msra.mxu0 %v2777
  %2791 = vmatpush.bf16.msra.mxu0 %v2776
  %2792 = vmatpush.bf16.msra.mxu0 %v2775
  %2793 = vmatpush.bf16.msra.mxu0 %v2774
  %2794 = vmatpush.bf16.msra.mxu0 %v2773
  %2795 = vmatpush.bf16.msra.mxu0 %v2772
  %2796 = vmatmul.bf16.gmra.mxu0 %v2722
  %v2797 = vpop.f32.mrf.mxu0
  %v2798 = vadd.f32 0.0, %v2797
  %v2799 = vpop.f32.mrf.mxu0
  %2800 = vdwg.mxu0
  %v2801 = vadd.f32 %v2703, %v2798
  %v2802 = vsel %vm1819, %v2801, 0.0
  %v2803 = vrot.slane %v2802, 4
  %v2804 = vadd.f32 %v2802, %v2803
  %v2805 = vrot.slane %v2804, 2
  %v2806 = vadd.f32 %v2804, %v2805
  %v2807 = vrot.slane %v2806, 1
  %v2808 = vadd.f32 %v2806, %v2807
  %v2809 = vmul.f32 %v2801, %v2801
  %v2810 = vsel %vm1819, %v2809, 0.0
  %v2811 = vrot.slane %v2810, 4
  %v2812 = vadd.f32 %v2810, %v2811
  %v2813 = vrot.slane %v2812, 2
  %v2814 = vadd.f32 %v2812, %v2813
  %v2815 = vrot.slane %v2814, 1
  %v2816 = vadd.f32 %v2814, %v2815
  %2817 = vmatpush.msra.mxu0 %v2254
  %2818 = vmatpush.msra.mxu0 %v2253
  %2819 = vmatpush.msra.mxu0 %v2252
  %2820 = vmatpush.msra.mxu0 %v2251
  %2821 = vmatpush.msra.mxu0 %v2250
  %2822 = vmatpush.msra.mxu0 %v2249
  %2823 = vmatpush.msra.mxu0 %v2248
  %2824 = vmatpush.msra.mxu0 %v2247
  %2825 = vmatpush.msra.mxu0 %v2246
  %2826 = vmatpush.msra.mxu0 %v2245
  %2827 = vmatpush.msra.mxu0 %v2244
  %2828 = vmatpush.msra.mxu0 %v2243
  %2829 = vmatpush.msra.mxu0 %v2242
  %2830 = vmatpush.msra.mxu0 %v2241
  %2831 = vmatpush.msra.mxu0 %v2240
  %2832 = vmatpush.msra.mxu0 %v2239
  %2833 = vmatmul.f32.gmra.mxu0 %v2808
  %v2834 = vpop.f32.mrf.mxu0
  %v2835 = vadd.f32 0.0, %v2834
  %2836 = vdwg.mxu0
  %v2837 = vmul.f32 %v2835, %v2313
  %2838 = vmatpush.msra.mxu0 %v2254
  %2839 = vmatpush.msra.mxu0 %v2253
  %2840 = vmatpush.msra.mxu0 %v2252
  %2841 = vmatpush.msra.mxu0 %v2251
  %2842 = vmatpush.msra.mxu0 %v2250
  %2843 = vmatpush.msra.mxu0 %v2249
  %2844 = vmatpush.msra.mxu0 %v2248
  %2845 = vmatpush.msra.mxu0 %v2247
  %2846 = vmatpush.msra.mxu0 %v2246
  %2847 = vmatpush.msra.mxu0 %v2245
  %2848 = vmatpush.msra.mxu0 %v2244
  %2849 = vmatpush.msra.mxu0 %v2243
  %2850 = vmatpush.msra.mxu0 %v2242
  %2851 = vmatpush.msra.mxu0 %v2241
  %2852 = vmatpush.msra.mxu0 %v2240
  %2853 = vmatpush.msra.mxu0 %v2239
  %2854 = vmatmul.f32.gmra.mxu0 %v2816
  %v2855 = vpop.f32.mrf.mxu0
  %v2856 = vadd.f32 0.0, %v2855
  %2857 = vdwg.mxu0
  %v2858 = vmul.f32 %v2856, %v2313
  %v2859 = vmul.f32 %v2837, %v2837
  %v2860 = vsub.f32 %v2858, %v2859
  %v2861 = vmax.f32 %v2860, 0.0
  %v2862 = vld [vmem:[%s18] sm:$0x1]
  %v2863 = vadd.f32 %v2861, 1e-05
  %v2864 = vrsqrt.pop %v2863
  %v2865 = vmul.f32 %v2864, %v2863
  %v2866 = vmul.f32 %v2865, %v2864
  %v2867 = vmul.f32 0.5, %v2866
  %v2868 = vsub.f32 1.5, %v2867
  %v2869 = vmul.f32 %v2864, %v2868
  %vm2870 = vweird.f32 %v2863
  %vm2871 = vweird.f32 %v2864
  %vm2872 = vmor %vm2870, %vm2871
  %v2873 = vsel %vm2872, %v2864, %v2869
  %v2874 = vmul.f32 %v2862, %v2873
  %v2875 = vld [vmem:[%s19] sm:$0x1]
  %v2876 = vmul.f32 %v2837, %v2874
  %v2877 = vsub.f32 %v2875, %v2876
  %v2879 = vsel %vm115, %v2874, 0
  %2881 = vmatpush.msra.mxu0 0.0
  %2882 = vmatpush.msra.mxu0 0.0
  %2883 = vmatpush.msra.mxu0 0.0
  %2884 = vmatpush.msra.mxu0 0.0
  %2885 = vmatpush.msra.mxu0 0.0
  %2886 = vmatpush.msra.mxu0 0.0
  %2887 = vmatpush.msra.mxu0 0.0
  %2888 = vmatpush.msra.mxu0 0.0
  %2889 = vmatpush.msra.mxu0 %v2271
  %2890 = vmatpush.msra.mxu0 %v2270
  %2891 = vmatpush.msra.mxu0 %v2269
  %2892 = vmatpush.msra.mxu0 %v2268
  %2893 = vmatpush.msra.mxu0 %v2267
  %2894 = vmatpush.msra.mxu0 %v2266
  %2895 = vmatpush.msra.mxu0 %v2265
  %2896 = vmatpush.msra.mxu0 %v2264
  %2897 = vmatmul.f32.gmra.mxu0 %v2879
  %v2898 = vpop.f32.mrf.mxu0
  %v2899 = vadd.f32 0.0, %v2898
  %2900 = vdwg.mxu0
  %v2901 = vperm.slane %v2899, 0
  %v2902 = vmul.f32 %v2801, %v2901
  %v2904 = vsel %vm115, %v2877, 0
  %2906 = vmatpush.msra.mxu0 0.0
  %2907 = vmatpush.msra.mxu0 0.0
  %2908 = vmatpush.msra.mxu0 0.0
  %2909 = vmatpush.msra.mxu0 0.0
  %2910 = vmatpush.msra.mxu0 0.0
  %2911 = vmatpush.msra.mxu0 0.0
  %2912 = vmatpush.msra.mxu0 0.0
  %2913 = vmatpush.msra.mxu0 0.0
  %2914 = vmatpush.msra.mxu0 %v2271
  %2915 = vmatpush.msra.mxu0 %v2270
  %2916 = vmatpush.msra.mxu0 %v2269
  %2917 = vmatpush.msra.mxu0 %v2268
  %2918 = vmatpush.msra.mxu0 %v2267
  %2919 = vmatpush.msra.mxu0 %v2266
  %2920 = vmatpush.msra.mxu0 %v2265
  %2921 = vmatpush.msra.mxu0 %v2264
  %2922 = vmatmul.f32.gmra.mxu0 %v2904
  %v2923 = vpop.f32.mrf.mxu0
  %v2924 = vadd.f32 0.0, %v2923
  %2925 = vdwg.mxu0
  %v2926 = vperm.slane %v2924, 0
  %v2927 = vadd.f32 %v2902, %v2926
  %vm2928 = vcmp.ge.f32.partialorder %v2927, 0.0
  %v2929 = vmul.f32 %v2927, 0.2
  %v2930 = vsel %vm2928, %v2927, %v2929
  %v2931 = vpack.c.bf16 %v2930, %v2930
  %v2932 = vld [vmem:[%s20] sm:$0x3]
  %v2934 = vsel %vm2410, %v2932, 0
  %v2937 = vsel %vm2414, %v2931, 0
  %2939 = vmatpush.bf16.msra.mxu0 0
  %2940 = vmatpush.bf16.msra.mxu0 0
  %2941 = vmatpush.bf16.msra.mxu0 0
  %2942 = vmatpush.bf16.msra.mxu0 0
  %2943 = vmatpush.bf16.msra.mxu0 0
  %2944 = vmatpush.bf16.msra.mxu0 0
  %2945 = vmatpush.bf16.msra.mxu0 0
  %2946 = vmatpush.bf16.msra.mxu0 %v2937
  %2947 = vmatmul.bf16.gmra.mxu0 %v2934
  %v2948 = vpop.f32.mrf.mxu0
  %v2949 = vadd.f32 0.0, %v2948
  %v2950 = vpop.f32.mrf.mxu0
  %2951 = vdwg.mxu0
  %v2952 = vpack.c.bf16 %v2949, %v2949
  %v2953 = vld [vmem:[%s21] sm:$0xf]
  %v2954 = vld [vmem:[%s21 + $0x4] sm:$0xf]
  %v2955 = vld [vmem:[%s21 + $0x8] sm:$0xf]
  %v2956 = vld [vmem:[%s21 + $0xc] sm:$0xf]
  %v2957 = vld [vmem:[%s21 + $0x10] sm:$0xf]
  %v2958 = vld [vmem:[%s21 + $0x14] sm:$0xf]
  %v2959 = vld [vmem:[%s21 + $0x18] sm:$0xf]
  %v2960 = vld [vmem:[%s21 + $0x1c] sm:$0xf]
  %v2961 = vld [vmem:[%s21 + $0x20] sm:$0xf]
  %v2962 = vld [vmem:[%s21 + $0x24] sm:$0xf]
  %v2963 = vld [vmem:[%s21 + $0x28] sm:$0xf]
  %v2964 = vld [vmem:[%s21 + $0x2c] sm:$0xf]
  %v2965 = vld [vmem:[%s21 + $0x30] sm:$0xf]
  %v2966 = vld [vmem:[%s21 + $0x34] sm:$0xf]
  %v2967 = vld [vmem:[%s21 + $0x38] sm:$0xf]
  %v2968 = vld [vmem:[%s21 + $0x3c] sm:$0xf]
  %s2969 = scalar_lea.vmem %s20, 2
  %v2970 = vld [vmem:[%s2969] sm:$0x3]
  %v2972 = vsel %vm2410, %v2970, 0
  %2974 = vmatpush.bf16.msra.mxu0 0
  %2975 = vmatpush.bf16.msra.mxu0 0
  %2976 = vmatpush.bf16.msra.mxu0 0
  %2977 = vmatpush.bf16.msra.mxu0 0
  %2978 = vmatpush.bf16.msra.mxu0 0
  %2979 = vmatpush.bf16.msra.mxu0 0
  %2980 = vmatpush.bf16.msra.mxu0 0
  %2981 = vmatpush.bf16.msra.mxu0 %v2937
  %2982 = vmatmul.bf16.gmra.mxu0 %v2972
  %v2983 = vpop.f32.mrf.mxu0
  %v2984 = vadd.f32 0.0, %v2983
  %v2985 = vpop.f32.mrf.mxu0
  %2986 = vdwg.mxu0
  %v2987 = vpack.c.bf16 %v2984, %v2984
  %s2988 = scalar_lea.vmem %s21, 64
  %v2989 = vld [vmem:[%s2988] sm:$0xf]
  %v2990 = vld [vmem:[%s2988 + $0x4] sm:$0xf]
  %v2991 = vld [vmem:[%s2988 + $0x8] sm:$0xf]
  %v2992 = vld [vmem:[%s2988 + $0xc] sm:$0xf]
  %v2993 = vld [vmem:[%s2988 + $0x10] sm:$0xf]
  %v2994 = vld [vmem:[%s2988 + $0x14] sm:$0xf]
  %v2995 = vld [vmem:[%s2988 + $0x18] sm:$0xf]
  %v2996 = vld [vmem:[%s2988 + $0x1c] sm:$0xf]
  %v2997 = vld [vmem:[%s2988 + $0x20] sm:$0xf]
  %v2998 = vld [vmem:[%s2988 + $0x24] sm:$0xf]
  %v2999 = vld [vmem:[%s2988 + $0x28] sm:$0xf]
  %v3000 = vld [vmem:[%s2988 + $0x2c] sm:$0xf]
  %v3001 = vld [vmem:[%s2988 + $0x30] sm:$0xf]
  %v3002 = vld [vmem:[%s2988 + $0x34] sm:$0xf]
  %v3003 = vld [vmem:[%s2988 + $0x38] sm:$0xf]
  %v3004 = vld [vmem:[%s2988 + $0x3c] sm:$0xf]
  %v3021 = vunpack.c.l.b16 %v2989
  %v3022 = vunpack.c.l.b16 %v2990
  %v3023 = vunpack.c.l.b16 %v2991
  %v3024 = vunpack.c.l.b16 %v2992
  %v3025 = vunpack.c.l.b16 %v2993
  %v3026 = vunpack.c.l.b16 %v2994
  %v3027 = vunpack.c.l.b16 %v2995
  %v3028 = vunpack.c.l.b16 %v2996
  %v3029 = vunpack.c.l.b16 %v2997
  %v3030 = vunpack.c.l.b16 %v2998
  %v3031 = vunpack.c.l.b16 %v2999
  %v3032 = vunpack.c.l.b16 %v3000
  %v3033 = vunpack.c.l.b16 %v3001
  %v3034 = vunpack.c.l.b16 %v3002
  %v3035 = vunpack.c.l.b16 %v3003
  %v3036 = vunpack.c.l.b16 %v3004
  %v3037 = vpack.c.b16 %v3022, %v3021
  %v3038 = vpack.c.b16 %v3024, %v3023
  %v3039 = vpack.c.b16 %v3026, %v3025
  %v3040 = vpack.c.b16 %v3028, %v3027
  %v3041 = vpack.c.b16 %v3030, %v3029
  %v3042 = vpack.c.b16 %v3032, %v3031
  %v3043 = vpack.c.b16 %v3034, %v3033
  %v3044 = vpack.c.b16 %v3036, %v3035
  %3053 = vmatpush.bf16.msra.mxu0 %v3044
  %3054 = vmatpush.bf16.msra.mxu0 %v3043
  %3055 = vmatpush.bf16.msra.mxu0 %v3042
  %3056 = vmatpush.bf16.msra.mxu0 %v3041
  %3057 = vmatpush.bf16.msra.mxu0 %v3040
  %3058 = vmatpush.bf16.msra.mxu0 %v3039
  %3059 = vmatpush.bf16.msra.mxu0 %v3038
  %3060 = vmatpush.bf16.msra.mxu0 %v3037
  %3061 = vmatmul.bf16.gmra.mxu0 %v2987
  %v3062 = vpop.f32.mrf.mxu0
  %v3063 = vadd.f32 0.0, %v3062
  %v3064 = vpop.f32.mrf.mxu0
  %3065 = vdwg.mxu0
  %v3082 = vunpack.c.l.b16 %v2953
  %v3083 = vunpack.c.l.b16 %v2954
  %v3084 = vunpack.c.l.b16 %v2955
  %v3085 = vunpack.c.l.b16 %v2956
  %v3086 = vunpack.c.l.b16 %v2957
  %v3087 = vunpack.c.l.b16 %v2958
  %v3088 = vunpack.c.l.b16 %v2959
  %v3089 = vunpack.c.l.b16 %v2960
  %v3090 = vunpack.c.l.b16 %v2961
  %v3091 = vunpack.c.l.b16 %v2962
  %v3092 = vunpack.c.l.b16 %v2963
  %v3093 = vunpack.c.l.b16 %v2964
  %v3094 = vunpack.c.l.b16 %v2965
  %v3095 = vunpack.c.l.b16 %v2966
  %v3096 = vunpack.c.l.b16 %v2967
  %v3097 = vunpack.c.l.b16 %v2968
  %v3098 = vpack.c.b16 %v3083, %v3082
  %v3099 = vpack.c.b16 %v3085, %v3084
  %v3100 = vpack.c.b16 %v3087, %v3086
  %v3101 = vpack.c.b16 %v3089, %v3088
  %v3102 = vpack.c.b16 %v3091, %v3090
  %v3103 = vpack.c.b16 %v3093, %v3092
  %v3104 = vpack.c.b16 %v3095, %v3094
  %v3105 = vpack.c.b16 %v3097, %v3096
  %3114 = vmatpush.bf16.msra.mxu0 %v3105
  %3115 = vmatpush.bf16.msra.mxu0 %v3104
  %3116 = vmatpush.bf16.msra.mxu0 %v3103
  %3117 = vmatpush.bf16.msra.mxu0 %v3102
  %3118 = vmatpush.bf16.msra.mxu0 %v3101
  %3119 = vmatpush.bf16.msra.mxu0 %v3100
  %3120 = vmatpush.bf16.msra.mxu0 %v3099
  %3121 = vmatpush.bf16.msra.mxu0 %v3098
  %3122 = vmatmul.bf16.gmra.mxu0 %v2952
  %v3123 = vpop.f32.mrf.mxu0
  %v3124 = vadd.f32 %v3063, %v3123
  %v3125 = vpop.f32.mrf.mxu0
  %3126 = vdwg.mxu0
  %s3127 = scalar_lea.vmem %s20, 4
  %v3128 = vld [vmem:[%s3127] sm:$0x3]
  %v3130 = vsel %vm2410, %v3128, 0
  %3132 = vmatpush.bf16.msra.mxu0 0
  %3133 = vmatpush.bf16.msra.mxu0 0
  %3134 = vmatpush.bf16.msra.mxu0 0
  %3135 = vmatpush.bf16.msra.mxu0 0
  %3136 = vmatpush.bf16.msra.mxu0 0
  %3137 = vmatpush.bf16.msra.mxu0 0
  %3138 = vmatpush.bf16.msra.mxu0 0
  %3139 = vmatpush.bf16.msra.mxu0 %v2937
  %3140 = vmatmul.bf16.gmra.mxu0 %v3130
  %v3141 = vpop.f32.mrf.mxu0
  %v3142 = vadd.f32 0.0, %v3141
  %v3143 = vpop.f32.mrf.mxu0
  %3144 = vdwg.mxu0
  %v3145 = vpack.c.bf16 %v3142, %v3142
  %s3146 = scalar_lea.vmem %s21, 128
  %v3147 = vld [vmem:[%s3146] sm:$0xf]
  %v3148 = vld [vmem:[%s3146 + $0x4] sm:$0xf]
  %v3149 = vld [vmem:[%s3146 + $0x8] sm:$0xf]
  %v3150 = vld [vmem:[%s3146 + $0xc] sm:$0xf]
  %v3151 = vld [vmem:[%s3146 + $0x10] sm:$0xf]
  %v3152 = vld [vmem:[%s3146 + $0x14] sm:$0xf]
  %v3153 = vld [vmem:[%s3146 + $0x18] sm:$0xf]
  %v3154 = vld [vmem:[%s3146 + $0x1c] sm:$0xf]
  %v3155 = vld [vmem:[%s3146 + $0x20] sm:$0xf]
  %v3156 = vld [vmem:[%s3146 + $0x24] sm:$0xf]
  %v3157 = vld [vmem:[%s3146 + $0x28] sm:$0xf]
  %v3158 = vld [vmem:[%s3146 + $0x2c] sm:$0xf]
  %v3159 = vld [vmem:[%s3146 + $0x30] sm:$0xf]
  %v3160 = vld [vmem:[%s3146 + $0x34] sm:$0xf]
  %v3161 = vld [vmem:[%s3146 + $0x38] sm:$0xf]
  %v3162 = vld [vmem:[%s3146 + $0x3c] sm:$0xf]
  %v3179 = vunpack.c.l.b16 %v3147
  %v3180 = vunpack.c.l.b16 %v3148
  %v3181 = vunpack.c.l.b16 %v3149
  %v3182 = vunpack.c.l.b16 %v3150
  %v3183 = vunpack.c.l.b16 %v3151
  %v3184 = vunpack.c.l.b16 %v3152
  %v3185 = vunpack.c.l.b16 %v3153
  %v3186 = vunpack.c.l.b16 %v3154
  %v3187 = vunpack.c.l.b16 %v3155
  %v3188 = vunpack.c.l.b16 %v3156
  %v3189 = vunpack.c.l.b16 %v3157
  %v3190 = vunpack.c.l.b16 %v3158
  %v3191 = vunpack.c.l.b16 %v3159
  %v3192 = vunpack.c.l.b16 %v3160
  %v3193 = vunpack.c.l.b16 %v3161
  %v3194 = vunpack.c.l.b16 %v3162
  %v3195 = vpack.c.b16 %v3180, %v3179
  %v3196 = vpack.c.b16 %v3182, %v3181
  %v3197 = vpack.c.b16 %v3184, %v3183
  %v3198 = vpack.c.b16 %v3186, %v3185
  %v3199 = vpack.c.b16 %v3188, %v3187
  %v3200 = vpack.c.b16 %v3190, %v3189
  %v3201 = vpack.c.b16 %v3192, %v3191
  %v3202 = vpack.c.b16 %v3194, %v3193
  %3211 = vmatpush.bf16.msra.mxu0 %v3202
  %3212 = vmatpush.bf16.msra.mxu0 %v3201
  %3213 = vmatpush.bf16.msra.mxu0 %v3200
  %3214 = vmatpush.bf16.msra.mxu0 %v3199
  %3215 = vmatpush.bf16.msra.mxu0 %v3198
  %3216 = vmatpush.bf16.msra.mxu0 %v3197
  %3217 = vmatpush.bf16.msra.mxu0 %v3196
  %3218 = vmatpush.bf16.msra.mxu0 %v3195
  %3219 = vmatmul.bf16.gmra.mxu0 %v3145
  %v3220 = vpop.f32.mrf.mxu0
  %v3221 = vadd.f32 0.0, %v3220
  %v3222 = vpop.f32.mrf.mxu0
  %3223 = vdwg.mxu0
  %v3224 = vadd.f32 %v3124, %v3221
  %s3225 = scalar_lea.vmem %s20, 6
  %v3226 = vld [vmem:[%s3225] sm:$0x3]
  %v3228 = vsel %vm2410, %v3226, 0
  %3230 = vmatpush.bf16.msra.mxu0 0
  %3231 = vmatpush.bf16.msra.mxu0 0
  %3232 = vmatpush.bf16.msra.mxu0 0
  %3233 = vmatpush.bf16.msra.mxu0 0
  %3234 = vmatpush.bf16.msra.mxu0 0
  %3235 = vmatpush.bf16.msra.mxu0 0
  %3236 = vmatpush.bf16.msra.mxu0 0
  %3237 = vmatpush.bf16.msra.mxu0 %v2937
  %3238 = vmatmul.bf16.gmra.mxu0 %v3228
  %v3239 = vpop.f32.mrf.mxu0
  %v3240 = vadd.f32 0.0, %v3239
  %v3241 = vpop.f32.mrf.mxu0
  %3242 = vdwg.mxu0
  %v3243 = vpack.c.bf16 %v3240, %v3240
  %s3244 = scalar_lea.vmem %s21, 192
  %v3245 = vld [vmem:[%s3244] sm:$0xf]
  %v3246 = vld [vmem:[%s3244 + $0x4] sm:$0xf]
  %v3247 = vld [vmem:[%s3244 + $0x8] sm:$0xf]
  %v3248 = vld [vmem:[%s3244 + $0xc] sm:$0xf]
  %v3249 = vld [vmem:[%s3244 + $0x10] sm:$0xf]
  %v3250 = vld [vmem:[%s3244 + $0x14] sm:$0xf]
  %v3251 = vld [vmem:[%s3244 + $0x18] sm:$0xf]
  %v3252 = vld [vmem:[%s3244 + $0x1c] sm:$0xf]
  %v3253 = vld [vmem:[%s3244 + $0x20] sm:$0xf]
  %v3254 = vld [vmem:[%s3244 + $0x24] sm:$0xf]
  %v3255 = vld [vmem:[%s3244 + $0x28] sm:$0xf]
  %v3256 = vld [vmem:[%s3244 + $0x2c] sm:$0xf]
  %v3257 = vld [vmem:[%s3244 + $0x30] sm:$0xf]
  %v3258 = vld [vmem:[%s3244 + $0x34] sm:$0xf]
  %v3259 = vld [vmem:[%s3244 + $0x38] sm:$0xf]
  %v3260 = vld [vmem:[%s3244 + $0x3c] sm:$0xf]
  %v3277 = vunpack.c.l.b16 %v3245
  %v3278 = vunpack.c.l.b16 %v3246
  %v3279 = vunpack.c.l.b16 %v3247
  %v3280 = vunpack.c.l.b16 %v3248
  %v3281 = vunpack.c.l.b16 %v3249
  %v3282 = vunpack.c.l.b16 %v3250
  %v3283 = vunpack.c.l.b16 %v3251
  %v3284 = vunpack.c.l.b16 %v3252
  %v3285 = vunpack.c.l.b16 %v3253
  %v3286 = vunpack.c.l.b16 %v3254
  %v3287 = vunpack.c.l.b16 %v3255
  %v3288 = vunpack.c.l.b16 %v3256
  %v3289 = vunpack.c.l.b16 %v3257
  %v3290 = vunpack.c.l.b16 %v3258
  %v3291 = vunpack.c.l.b16 %v3259
  %v3292 = vunpack.c.l.b16 %v3260
  %v3293 = vpack.c.b16 %v3278, %v3277
  %v3294 = vpack.c.b16 %v3280, %v3279
  %v3295 = vpack.c.b16 %v3282, %v3281
  %v3296 = vpack.c.b16 %v3284, %v3283
  %v3297 = vpack.c.b16 %v3286, %v3285
  %v3298 = vpack.c.b16 %v3288, %v3287
  %v3299 = vpack.c.b16 %v3290, %v3289
  %v3300 = vpack.c.b16 %v3292, %v3291
  %3309 = vmatpush.bf16.msra.mxu0 %v3300
  %3310 = vmatpush.bf16.msra.mxu0 %v3299
  %3311 = vmatpush.bf16.msra.mxu0 %v3298
  %3312 = vmatpush.bf16.msra.mxu0 %v3297
  %3313 = vmatpush.bf16.msra.mxu0 %v3296
  %3314 = vmatpush.bf16.msra.mxu0 %v3295
  %3315 = vmatpush.bf16.msra.mxu0 %v3294
  %3316 = vmatpush.bf16.msra.mxu0 %v3293
  %3317 = vmatmul.bf16.gmra.mxu0 %v3243
  %v3318 = vpop.f32.mrf.mxu0
  %v3319 = vadd.f32 0.0, %v3318
  %v3320 = vpop.f32.mrf.mxu0
  %3321 = vdwg.mxu0
  %v3322 = vadd.f32 %v3224, %v3319
  %v3323 = vld [vmem:[%s22] sm:$0x1]
  %v3325 = vperm.slane %v3323, 0
  %v3327 = vadd.f32 %v3322, %v3325
  %v3328 = vxor.u32 %v3327, 2147483648
  %v3329 = vmul.f32 %v3328, 1.442695
  %v3330 = vpow.pop %v3329
  %v3331 = vadd.f32 %v3330, 1.0
  %v3332 = vrcp.pop %v3331
  %v3333 = vmul.f32 %v3331, %v3332
  %v3334 = vsub.f32 1.0, %v3333
  %v3335 = vmul.f32 %v3332, %v3334
  %v3336 = vadd.f32 %v3332, %v3335
  %vm3337 = vweird.f32 %v3331
  %vm3338 = vweird.f32 %v3332
  %vm3339 = vmor %vm3337, %vm3338
  %v3340 = vsel %vm3339, %v3332, %v3336
  %v3341 = vand.u32 2147483647, %v3331
  %vm3342 = vcmp.eq.f32.partialorder %v3341, 8.507059e+37
  %v3343 = vand.u32 %v3331, 2147483648
  %v3344 = vor.u32 1.1754944e-38, %v3343
  %v3345 = vsel %vm3342, %v3344, %v3340
  %v3346 = vmul.f32 1.0, %v3345
  %v3347 = vld [vmem:[%s23] sm:$0xff]
  %v3348 = vld [vmem:[%s23 + $0x8] sm:$0xff]
  %v3349 = vld [vmem:[%s23 + $0x10] sm:$0xff]
  %v3350 = vld [vmem:[%s23 + $0x18] sm:$0xff]
  %v3352 = vrot.slane %v3346, 1
  %3357 = vst [vmem:[#allocation1] ss:$2 sm:$0xff] %v3347
  %s3358 = scalar_lea.vmem [#allocation1], 16
  %3359 = vst [vmem:[%s3358] ss:$2 sm:$0xff] %v3348
  %s3360 = scalar_lea.vmem [#allocation1], 32
  %3361 = vst [vmem:[%s3360] ss:$2 sm:$0xff] %v3349
  %s3362 = scalar_lea.vmem [#allocation1], 48
  %3363 = vst [vmem:[%s3362] ss:$2 sm:$0xff] %v3350
  %v3364 = vld.sshfl [vmem:[#allocation1] sm:$0xff pattern:$0x75316420]
  %v3365 = vld.sshfl [vmem:[#allocation1 + $0x8] sm:$0xff pattern:$0x75316420]
  %v3366 = vld.sshfl [vmem:[#allocation1 + $0x10] sm:$0xff pattern:$0x75316420]
  %v3367 = vld.sshfl [vmem:[#allocation1 + $0x18] sm:$0xff pattern:$0x75316420]
  %v3368 = vld.sshfl [vmem:[#allocation1 + $0x20] sm:$0xff pattern:$0x75316420]
  %v3369 = vld.sshfl [vmem:[#allocation1 + $0x28] sm:$0xff pattern:$0x75316420]
  %v3370 = vld.sshfl [vmem:[#allocation1 + $0x30] sm:$0xff pattern:$0x75316420]
  %v3371 = vld.sshfl [vmem:[#allocation1 + $0x38] sm:$0xff pattern:$0x75316420]
  %v3372 = vrot.slane %v3364, 2
  %v3373 = vrot.slane %v3365, 2
  %v3374 = vrot.slane %v3366, 2
  %v3375 = vrot.slane %v3367, 2
  %v3376 = vrot.slane %v3368, 2
  %v3377 = vrot.slane %v3369, 2
  %v3378 = vrot.slane %v3370, 2
  %v3379 = vrot.slane %v3371, 2
  %vm3380 = vcmask 15360
  %v3381 = vsel %vm3380, %v3352, 0
  %v3383 = vsel %vm2414, %v3372, 0
  %v3385 = vsel %vm2414, %v3373, 0
  %v3387 = vsel %vm2414, %v3374, 0
  %v3389 = vsel %vm2414, %v3375, 0
  %v3391 = vsel %vm2414, %v3376, 0
  %v3393 = vsel %vm2414, %v3377, 0
  %v3395 = vsel %vm2414, %v3378, 0
  %v3397 = vsel %vm2414, %v3379, 0
  %3399 = vmatpush.msra.mxu0 0.0
  %3400 = vmatpush.msra.mxu0 0.0
  %3401 = vmatpush.msra.mxu0 0.0
  %3402 = vmatpush.msra.mxu0 0.0
  %3403 = vmatpush.msra.mxu0 0.0
  %3404 = vmatpush.msra.mxu0 0.0
  %3405 = vmatpush.msra.mxu0 0.0
  %3406 = vmatpush.msra.mxu0 0.0
  %3407 = vmatpush.msra.mxu0 0.0
  %3408 = vmatpush.msra.mxu0 0.0
  %3409 = vmatpush.msra.mxu0 0.0
  %3410 = vmatpush.msra.mxu0 0.0
  %3411 = vmatpush.msra.mxu0 0.0
  %3412 = vmatpush.msra.mxu0 0.0
  %3413 = vmatpush.msra.mxu0 0.0
  %3414 = vmatpush.msra.mxu0 %v3383
  %3415 = vmatmul.f32.gmra.mxu0 %v3381
  %v3416 = vpop.f32.mrf.mxu0
  %v3417 = vadd.f32 0.0, %v3416
  %3418 = vdwg.mxu0
  %3419 = vmatpush.msra.mxu0 0.0
  %3420 = vmatpush.msra.mxu0 0.0
  %3421 = vmatpush.msra.mxu0 0.0
  %3422 = vmatpush.msra.mxu0 0.0
  %3423 = vmatpush.msra.mxu0 0.0
  %3424 = vmatpush.msra.mxu0 0.0
  %3425 = vmatpush.msra.mxu0 0.0
  %3426 = vmatpush.msra.mxu0 0.0
  %3427 = vmatpush.msra.mxu0 0.0
  %3428 = vmatpush.msra.mxu0 0.0
  %3429 = vmatpush.msra.mxu0 0.0
  %3430 = vmatpush.msra.mxu0 0.0
  %3431 = vmatpush.msra.mxu0 0.0
  %3432 = vmatpush.msra.mxu0 0.0
  %3433 = vmatpush.msra.mxu0 0.0
  %3434 = vmatpush.msra.mxu0 %v3385
  %3435 = vmatmul.f32.gmra.mxu0 %v3381
  %v3436 = vpop.f32.mrf.mxu0
  %v3437 = vadd.f32 0.0, %v3436
  %3438 = vdwg.mxu0
  %3439 = vmatpush.msra.mxu0 0.0
  %3440 = vmatpush.msra.mxu0 0.0
  %3441 = vmatpush.msra.mxu0 0.0
  %3442 = vmatpush.msra.mxu0 0.0
  %3443 = vmatpush.msra.mxu0 0.0
  %3444 = vmatpush.msra.mxu0 0.0
  %3445 = vmatpush.msra.mxu0 0.0
  %3446 = vmatpush.msra.mxu0 0.0
  %3447 = vmatpush.msra.mxu0 0.0
  %3448 = vmatpush.msra.mxu0 0.0
  %3449 = vmatpush.msra.mxu0 0.0
  %3450 = vmatpush.msra.mxu0 0.0
  %3451 = vmatpush.msra.mxu0 0.0
  %3452 = vmatpush.msra.mxu0 0.0
  %3453 = vmatpush.msra.mxu0 0.0
  %3454 = vmatpush.msra.mxu0 %v3387
  %3455 = vmatmul.f32.gmra.mxu0 %v3381
  %v3456 = vpop.f32.mrf.mxu0
  %v3457 = vadd.f32 0.0, %v3456
  %3458 = vdwg.mxu0
  %3459 = vmatpush.msra.mxu0 0.0
  %3460 = vmatpush.msra.mxu0 0.0
  %3461 = vmatpush.msra.mxu0 0.0
  %3462 = vmatpush.msra.mxu0 0.0
  %3463 = vmatpush.msra.mxu0 0.0
  %3464 = vmatpush.msra.mxu0 0.0
  %3465 = vmatpush.msra.mxu0 0.0
  %3466 = vmatpush.msra.mxu0 0.0
  %3467 = vmatpush.msra.mxu0 0.0
  %3468 = vmatpush.msra.mxu0 0.0
  %3469 = vmatpush.msra.mxu0 0.0
  %3470 = vmatpush.msra.mxu0 0.0
  %3471 = vmatpush.msra.mxu0 0.0
  %3472 = vmatpush.msra.mxu0 0.0
  %3473 = vmatpush.msra.mxu0 0.0
  %3474 = vmatpush.msra.mxu0 %v3389
  %3475 = vmatmul.f32.gmra.mxu0 %v3381
  %v3476 = vpop.f32.mrf.mxu0
  %v3477 = vadd.f32 0.0, %v3476
  %3478 = vdwg.mxu0
  %3479 = vmatpush.msra.mxu0 0.0
  %3480 = vmatpush.msra.mxu0 0.0
  %3481 = vmatpush.msra.mxu0 0.0
  %3482 = vmatpush.msra.mxu0 0.0
  %3483 = vmatpush.msra.mxu0 0.0
  %3484 = vmatpush.msra.mxu0 0.0
  %3485 = vmatpush.msra.mxu0 0.0
  %3486 = vmatpush.msra.mxu0 0.0
  %3487 = vmatpush.msra.mxu0 0.0
  %3488 = vmatpush.msra.mxu0 0.0
  %3489 = vmatpush.msra.mxu0 0.0
  %3490 = vmatpush.msra.mxu0 0.0
  %3491 = vmatpush.msra.mxu0 0.0
  %3492 = vmatpush.msra.mxu0 0.0
  %3493 = vmatpush.msra.mxu0 0.0
  %3494 = vmatpush.msra.mxu0 %v3391
  %3495 = vmatmul.f32.gmra.mxu0 %v3381
  %v3496 = vpop.f32.mrf.mxu0
  %v3497 = vadd.f32 0.0, %v3496
  %3498 = vdwg.mxu0
  %3499 = vmatpush.msra.mxu0 0.0
  %3500 = vmatpush.msra.mxu0 0.0
  %3501 = vmatpush.msra.mxu0 0.0
  %3502 = vmatpush.msra.mxu0 0.0
  %3503 = vmatpush.msra.mxu0 0.0
  %3504 = vmatpush.msra.mxu0 0.0
  %3505 = vmatpush.msra.mxu0 0.0
  %3506 = vmatpush.msra.mxu0 0.0
  %3507 = vmatpush.msra.mxu0 0.0
  %3508 = vmatpush.msra.mxu0 0.0
  %3509 = vmatpush.msra.mxu0 0.0
  %3510 = vmatpush.msra.mxu0 0.0
  %3511 = vmatpush.msra.mxu0 0.0
  %3512 = vmatpush.msra.mxu0 0.0
  %3513 = vmatpush.msra.mxu0 0.0
  %3514 = vmatpush.msra.mxu0 %v3393
  %3515 = vmatmul.f32.gmra.mxu0 %v3381
  %v3516 = vpop.f32.mrf.mxu0
  %v3517 = vadd.f32 0.0, %v3516
  %3518 = vdwg.mxu0
  %3519 = vmatpush.msra.mxu0 0.0
  %3520 = vmatpush.msra.mxu0 0.0
  %3521 = vmatpush.msra.mxu0 0.0
  %3522 = vmatpush.msra.mxu0 0.0
  %3523 = vmatpush.msra.mxu0 0.0
  %3524 = vmatpush.msra.mxu0 0.0
  %3525 = vmatpush.msra.mxu0 0.0
  %3526 = vmatpush.msra.mxu0 0.0
  %3527 = vmatpush.msra.mxu0 0.0
  %3528 = vmatpush.msra.mxu0 0.0
  %3529 = vmatpush.msra.mxu0 0.0
  %3530 = vmatpush.msra.mxu0 0.0
  %3531 = vmatpush.msra.mxu0 0.0
  %3532 = vmatpush.msra.mxu0 0.0
  %3533 = vmatpush.msra.mxu0 0.0
  %3534 = vmatpush.msra.mxu0 %v3395
  %3535 = vmatmul.f32.gmra.mxu0 %v3381
  %v3536 = vpop.f32.mrf.mxu0
  %v3537 = vadd.f32 0.0, %v3536
  %3538 = vdwg.mxu0
  %3539 = vmatpush.msra.mxu0 0.0
  %3540 = vmatpush.msra.mxu0 0.0
  %3541 = vmatpush.msra.mxu0 0.0
  %3542 = vmatpush.msra.mxu0 0.0
  %3543 = vmatpush.msra.mxu0 0.0
  %3544 = vmatpush.msra.mxu0 0.0
  %3545 = vmatpush.msra.mxu0 0.0
  %3546 = vmatpush.msra.mxu0 0.0
  %3547 = vmatpush.msra.mxu0 0.0
  %3548 = vmatpush.msra.mxu0 0.0
  %3549 = vmatpush.msra.mxu0 0.0
  %3550 = vmatpush.msra.mxu0 0.0
  %3551 = vmatpush.msra.mxu0 0.0
  %3552 = vmatpush.msra.mxu0 0.0
  %3553 = vmatpush.msra.mxu0 0.0
  %3554 = vmatpush.msra.mxu0 %v3397
  %3555 = vmatmul.f32.gmra.mxu0 %v3381
  %v3556 = vpop.f32.mrf.mxu0
  %v3557 = vadd.f32 0.0, %v3556
  %3558 = vdwg.mxu0
  %3559 = vst [vmem:[#allocation1] ss:$2 sm:$0xff] %v3347
  %s3560 = scalar_lea.vmem [#allocation1], 16
  %3561 = vst [vmem:[%s3560] ss:$2 sm:$0xff] %v3348
  %s3562 = scalar_lea.vmem [#allocation1], 32
  %3563 = vst [vmem:[%s3562] ss:$2 sm:$0xff] %v3349
  %s3564 = scalar_lea.vmem [#allocation1], 48
  %3565 = vst [vmem:[%s3564] ss:$2 sm:$0xff] %v3350
  %v3566 = vld.sshfl [vmem:[#allocation1] sm:$0xff pattern:$0x75316420]
  %v3567 = vld.sshfl [vmem:[#allocation1 + $0x8] sm:$0xff pattern:$0x75316420]
  %v3568 = vld.sshfl [vmem:[#allocation1 + $0x10] sm:$0xff pattern:$0x75316420]
  %v3569 = vld.sshfl [vmem:[#allocation1 + $0x18] sm:$0xff pattern:$0x75316420]
  %v3570 = vld.sshfl [vmem:[#allocation1 + $0x20] sm:$0xff pattern:$0x75316420]
  %v3571 = vld.sshfl [vmem:[#allocation1 + $0x28] sm:$0xff pattern:$0x75316420]
  %v3572 = vld.sshfl [vmem:[#allocation1 + $0x30] sm:$0xff pattern:$0x75316420]
  %v3573 = vld.sshfl [vmem:[#allocation1 + $0x38] sm:$0xff pattern:$0x75316420]
  %v3574 = vsel %vm3380, %v3346, 0
  %v3576 = vsel %vm2414, %v3566, 0
  %v3578 = vsel %vm2414, %v3567, 0
  %v3580 = vsel %vm2414, %v3568, 0
  %v3582 = vsel %vm2414, %v3569, 0
  %v3584 = vsel %vm2414, %v3570, 0
  %v3586 = vsel %vm2414, %v3571, 0
  %v3588 = vsel %vm2414, %v3572, 0
  %v3590 = vsel %vm2414, %v3573, 0
  %3592 = vmatpush.msra.mxu0 0.0
  %3593 = vmatpush.msra.mxu0 0.0
  %3594 = vmatpush.msra.mxu0 0.0
  %3595 = vmatpush.msra.mxu0 0.0
  %3596 = vmatpush.msra.mxu0 0.0
  %3597 = vmatpush.msra.mxu0 0.0
  %3598 = vmatpush.msra.mxu0 0.0
  %3599 = vmatpush.msra.mxu0 0.0
  %3600 = vmatpush.msra.mxu0 0.0
  %3601 = vmatpush.msra.mxu0 0.0
  %3602 = vmatpush.msra.mxu0 0.0
  %3603 = vmatpush.msra.mxu0 0.0
  %3604 = vmatpush.msra.mxu0 0.0
  %3605 = vmatpush.msra.mxu0 0.0
  %3606 = vmatpush.msra.mxu0 0.0
  %3607 = vmatpush.msra.mxu0 %v3576
  %3608 = vmatmul.f32.gmra.mxu0 %v3574
  %v3609 = vpop.f32.mrf.mxu0
  %v3610 = vadd.f32 %v3417, %v3609
  %3611 = vdwg.mxu0
  %3612 = vmatpush.msra.mxu0 0.0
  %3613 = vmatpush.msra.mxu0 0.0
  %3614 = vmatpush.msra.mxu0 0.0
  %3615 = vmatpush.msra.mxu0 0.0
  %3616 = vmatpush.msra.mxu0 0.0
  %3617 = vmatpush.msra.mxu0 0.0
  %3618 = vmatpush.msra.mxu0 0.0
  %3619 = vmatpush.msra.mxu0 0.0
  %3620 = vmatpush.msra.mxu0 0.0
  %3621 = vmatpush.msra.mxu0 0.0
  %3622 = vmatpush.msra.mxu0 0.0
  %3623 = vmatpush.msra.mxu0 0.0
  %3624 = vmatpush.msra.mxu0 0.0
  %3625 = vmatpush.msra.mxu0 0.0
  %3626 = vmatpush.msra.mxu0 0.0
  %3627 = vmatpush.msra.mxu0 %v3578
  %3628 = vmatmul.f32.gmra.mxu0 %v3574
  %v3629 = vpop.f32.mrf.mxu0
  %v3630 = vadd.f32 %v3437, %v3629
  %3631 = vdwg.mxu0
  %3632 = vmatpush.msra.mxu0 0.0
  %3633 = vmatpush.msra.mxu0 0.0
  %3634 = vmatpush.msra.mxu0 0.0
  %3635 = vmatpush.msra.mxu0 0.0
  %3636 = vmatpush.msra.mxu0 0.0
  %3637 = vmatpush.msra.mxu0 0.0
  %3638 = vmatpush.msra.mxu0 0.0
  %3639 = vmatpush.msra.mxu0 0.0
  %3640 = vmatpush.msra.mxu0 0.0
  %3641 = vmatpush.msra.mxu0 0.0
  %3642 = vmatpush.msra.mxu0 0.0
  %3643 = vmatpush.msra.mxu0 0.0
  %3644 = vmatpush.msra.mxu0 0.0
  %3645 = vmatpush.msra.mxu0 0.0
  %3646 = vmatpush.msra.mxu0 0.0
  %3647 = vmatpush.msra.mxu0 %v3580
  %3648 = vmatmul.f32.gmra.mxu0 %v3574
  %v3649 = vpop.f32.mrf.mxu0
  %v3650 = vadd.f32 %v3457, %v3649
  %3651 = vdwg.mxu0
  %3652 = vmatpush.msra.mxu0 0.0
  %3653 = vmatpush.msra.mxu0 0.0
  %3654 = vmatpush.msra.mxu0 0.0
  %3655 = vmatpush.msra.mxu0 0.0
  %3656 = vmatpush.msra.mxu0 0.0
  %3657 = vmatpush.msra.mxu0 0.0
  %3658 = vmatpush.msra.mxu0 0.0
  %3659 = vmatpush.msra.mxu0 0.0
  %3660 = vmatpush.msra.mxu0 0.0
  %3661 = vmatpush.msra.mxu0 0.0
  %3662 = vmatpush.msra.mxu0 0.0
  %3663 = vmatpush.msra.mxu0 0.0
  %3664 = vmatpush.msra.mxu0 0.0
  %3665 = vmatpush.msra.mxu0 0.0
  %3666 = vmatpush.msra.mxu0 0.0
  %3667 = vmatpush.msra.mxu0 %v3582
  %3668 = vmatmul.f32.gmra.mxu0 %v3574
  %v3669 = vpop.f32.mrf.mxu0
  %v3670 = vadd.f32 %v3477, %v3669
  %3671 = vdwg.mxu0
  %3672 = vmatpush.msra.mxu0 0.0
  %3673 = vmatpush.msra.mxu0 0.0
  %3674 = vmatpush.msra.mxu0 0.0
  %3675 = vmatpush.msra.mxu0 0.0
  %3676 = vmatpush.msra.mxu0 0.0
  %3677 = vmatpush.msra.mxu0 0.0
  %3678 = vmatpush.msra.mxu0 0.0
  %3679 = vmatpush.msra.mxu0 0.0
  %3680 = vmatpush.msra.mxu0 0.0
  %3681 = vmatpush.msra.mxu0 0.0
  %3682 = vmatpush.msra.mxu0 0.0
  %3683 = vmatpush.msra.mxu0 0.0
  %3684 = vmatpush.msra.mxu0 0.0
  %3685 = vmatpush.msra.mxu0 0.0
  %3686 = vmatpush.msra.mxu0 0.0
  %3687 = vmatpush.msra.mxu0 %v3584
  %3688 = vmatmul.f32.gmra.mxu0 %v3574
  %v3689 = vpop.f32.mrf.mxu0
  %v3690 = vadd.f32 %v3497, %v3689
  %3691 = vdwg.mxu0
  %3692 = vmatpush.msra.mxu0 0.0
  %3693 = vmatpush.msra.mxu0 0.0
  %3694 = vmatpush.msra.mxu0 0.0
  %3695 = vmatpush.msra.mxu0 0.0
  %3696 = vmatpush.msra.mxu0 0.0
  %3697 = vmatpush.msra.mxu0 0.0
  %3698 = vmatpush.msra.mxu0 0.0
  %3699 = vmatpush.msra.mxu0 0.0
  %3700 = vmatpush.msra.mxu0 0.0
  %3701 = vmatpush.msra.mxu0 0.0
  %3702 = vmatpush.msra.mxu0 0.0
  %3703 = vmatpush.msra.mxu0 0.0
  %3704 = vmatpush.msra.mxu0 0.0
  %3705 = vmatpush.msra.mxu0 0.0
  %3706 = vmatpush.msra.mxu0 0.0
  %3707 = vmatpush.msra.mxu0 %v3586
  %3708 = vmatmul.f32.gmra.mxu0 %v3574
  %v3709 = vpop.f32.mrf.mxu0
  %v3710 = vadd.f32 %v3517, %v3709
  %3711 = vdwg.mxu0
  %3712 = vmatpush.msra.mxu0 0.0
  %3713 = vmatpush.msra.mxu0 0.0
  %3714 = vmatpush.msra.mxu0 0.0
  %3715 = vmatpush.msra.mxu0 0.0
  %3716 = vmatpush.msra.mxu0 0.0
  %3717 = vmatpush.msra.mxu0 0.0
  %3718 = vmatpush.msra.mxu0 0.0
  %3719 = vmatpush.msra.mxu0 0.0
  %3720 = vmatpush.msra.mxu0 0.0
  %3721 = vmatpush.msra.mxu0 0.0
  %3722 = vmatpush.msra.mxu0 0.0
  %3723 = vmatpush.msra.mxu0 0.0
  %3724 = vmatpush.msra.mxu0 0.0
  %3725 = vmatpush.msra.mxu0 0.0
  %3726 = vmatpush.msra.mxu0 0.0
  %3727 = vmatpush.msra.mxu0 %v3588
  %3728 = vmatmul.f32.gmra.mxu0 %v3574
  %v3729 = vpop.f32.mrf.mxu0
  %v3730 = vadd.f32 %v3537, %v3729
  %3731 = vdwg.mxu0
  %3732 = vmatpush.msra.mxu0 0.0
  %3733 = vmatpush.msra.mxu0 0.0
  %3734 = vmatpush.msra.mxu0 0.0
  %3735 = vmatpush.msra.mxu0 0.0
  %3736 = vmatpush.msra.mxu0 0.0
  %3737 = vmatpush.msra.mxu0 0.0
  %3738 = vmatpush.msra.mxu0 0.0
  %3739 = vmatpush.msra.mxu0 0.0
  %3740 = vmatpush.msra.mxu0 0.0
  %3741 = vmatpush.msra.mxu0 0.0
  %3742 = vmatpush.msra.mxu0 0.0
  %3743 = vmatpush.msra.mxu0 0.0
  %3744 = vmatpush.msra.mxu0 0.0
  %3745 = vmatpush.msra.mxu0 0.0
  %3746 = vmatpush.msra.mxu0 0.0
  %3747 = vmatpush.msra.mxu0 %v3590
  %3748 = vmatmul.f32.gmra.mxu0 %v3574
  %v3749 = vpop.f32.mrf.mxu0
  %v3750 = vadd.f32 %v3557, %v3749
  %3751 = vdwg.mxu0
  %v3752 = vld [vmem:[%s24] sm:$0xff]
  %v3754 = vperm.slane %v3752, 0
  %v3755 = vperm.slane %v3752, 1
  %v3756 = vperm.slane %v3752, 2
  %v3757 = vperm.slane %v3752, 3
  %v3758 = vperm.slane %v3752, 4
  %v3759 = vperm.slane %v3752, 5
  %v3760 = vperm.slane %v3752, 6
  %v3761 = vperm.slane %v3752, 7
  %v3770 = vadd.f32 %v3610, %v3754
  %v3771 = vadd.f32 %v3630, %v3755
  %v3772 = vadd.f32 %v3650, %v3756
  %v3773 = vadd.f32 %v3670, %v3757
  %v3774 = vadd.f32 %v3690, %v3758
  %v3775 = vadd.f32 %v3710, %v3759
  %v3776 = vadd.f32 %v3730, %v3760
  %v3777 = vadd.f32 %v3750, %v3761
  %v3778 = vtanh.pop %v3770
  %v3779 = vtanh.pop %v3771
  %v3780 = vtanh.pop %v3772
  %v3781 = vtanh.pop %v3773
  %v3782 = vtanh.pop %v3774
  %v3783 = vtanh.pop %v3775
  %v3784 = vtanh.pop %v3776
  %v3785 = vtanh.pop %v3777
  %v3786 = vld [vmem:[%s25] sm:$0xff]
  %v3787 = vld [vmem:[%s25 + $0x8] sm:$0xff]
  %v3788 = vld [vmem:[%s25 + $0x10] sm:$0xff]
  %v3789 = vld [vmem:[%s25 + $0x18] sm:$0xff]
  %v3790 = vld [vmem:[%s25 + $0x20] sm:$0xff]
  %v3791 = vld [vmem:[%s25 + $0x28] sm:$0xff]
  %v3792 = vld [vmem:[%s25 + $0x30] sm:$0xff]
  %v3793 = vld [vmem:[%s25 + $0x38] sm:$0xff]
  %v3794 = vld [vmem:[%s25 + $0x40] sm:$0xff]
  %v3795 = vld [vmem:[%s25 + $0x48] sm:$0xff]
  %v3796 = vld [vmem:[%s25 + $0x50] sm:$0xff]
  %v3797 = vld [vmem:[%s25 + $0x58] sm:$0xff]
  %v3798 = vld [vmem:[%s25 + $0x60] sm:$0xff]
  %v3799 = vld [vmem:[%s25 + $0x68] sm:$0xff]
  %v3800 = vld [vmem:[%s25 + $0x70] sm:$0xff]
  %v3801 = vld [vmem:[%s25 + $0x78] sm:$0xff]
  %v3802 = vld [vmem:[%s25 + $0x80] sm:$0xff]
  %v3803 = vld [vmem:[%s25 + $0x88] sm:$0xff]
  %v3804 = vld [vmem:[%s25 + $0x90] sm:$0xff]
  %v3805 = vld [vmem:[%s25 + $0x98] sm:$0xff]
  %v3806 = vld [vmem:[%s25 + $0xa0] sm:$0xff]
  %v3807 = vld [vmem:[%s25 + $0xa8] sm:$0xff]
  %v3808 = vld [vmem:[%s25 + $0xb0] sm:$0xff]
  %v3809 = vld [vmem:[%s25 + $0xb8] sm:$0xff]
  %v3810 = vld [vmem:[%s25 + $0xc0] sm:$0xff]
  %v3811 = vld [vmem:[%s25 + $0xc8] sm:$0xff]
  %v3812 = vld [vmem:[%s25 + $0xd0] sm:$0xff]
  %v3813 = vld [vmem:[%s25 + $0xd8] sm:$0xff]
  %v3814 = vld [vmem:[%s25 + $0xe0] sm:$0xff]
  %v3815 = vld [vmem:[%s25 + $0xe8] sm:$0xff]
  %v3816 = vld [vmem:[%s25 + $0xf0] sm:$0xff]
  %v3817 = vld [vmem:[%s25 + $0xf8] sm:$0xff]
  %v3818 = vld [vmem:[%s25 + $0x100] sm:$0xff]
  %v3819 = vld [vmem:[%s25 + $0x108] sm:$0xff]
  %v3820 = vld [vmem:[%s25 + $0x110] sm:$0xff]
  %v3821 = vld [vmem:[%s25 + $0x118] sm:$0xff]
  %v3822 = vld [vmem:[%s25 + $0x120] sm:$0xff]
  %v3823 = vld [vmem:[%s25 + $0x128] sm:$0xff]
  %v3824 = vld [vmem:[%s25 + $0x130] sm:$0xff]
  %v3825 = vld [vmem:[%s25 + $0x138] sm:$0xff]
  %v3826 = vld [vmem:[%s25 + $0x140] sm:$0xff]
  %v3827 = vld [vmem:[%s25 + $0x148] sm:$0xff]
  %v3828 = vld [vmem:[%s25 + $0x150] sm:$0xff]
  %v3829 = vld [vmem:[%s25 + $0x158] sm:$0xff]
  %v3830 = vld [vmem:[%s25 + $0x160] sm:$0xff]
  %v3831 = vld [vmem:[%s25 + $0x168] sm:$0xff]
  %v3832 = vld [vmem:[%s25 + $0x170] sm:$0xff]
  %v3833 = vld [vmem:[%s25 + $0x178] sm:$0xff]
  %v3834 = vld [vmem:[%s25 + $0x180] sm:$0xff]
  %v3835 = vld [vmem:[%s25 + $0x188] sm:$0xff]
  %v3836 = vld [vmem:[%s25 + $0x190] sm:$0xff]
  %v3837 = vld [vmem:[%s25 + $0x198] sm:$0xff]
  %v3838 = vld [vmem:[%s25 + $0x1a0] sm:$0xff]
  %v3839 = vld [vmem:[%s25 + $0x1a8] sm:$0xff]
  %v3840 = vld [vmem:[%s25 + $0x1b0] sm:$0xff]
  %v3841 = vld [vmem:[%s25 + $0x1b8] sm:$0xff]
  %v3842 = vld [vmem:[%s25 + $0x1c0] sm:$0xff]
  %v3843 = vld [vmem:[%s25 + $0x1c8] sm:$0xff]
  %v3844 = vld [vmem:[%s25 + $0x1d0] sm:$0xff]
  %v3845 = vld [vmem:[%s25 + $0x1d8] sm:$0xff]
  %v3846 = vld [vmem:[%s25 + $0x1e0] sm:$0xff]
  %v3847 = vld [vmem:[%s25 + $0x1e8] sm:$0xff]
  %v3848 = vld [vmem:[%s25 + $0x1f0] sm:$0xff]
  %v3849 = vld [vmem:[%s25 + $0x1f8] sm:$0xff]
  %v3850 = vld [vmem:[%s25 + $0x200] sm:$0xff]
  %v3851 = vld [vmem:[%s25 + $0x208] sm:$0xff]
  %v3852 = vld [vmem:[%s25 + $0x210] sm:$0xff]
  %v3853 = vld [vmem:[%s25 + $0x218] sm:$0xff]
  %v3854 = vld [vmem:[%s25 + $0x220] sm:$0xff]
  %v3855 = vld [vmem:[%s25 + $0x228] sm:$0xff]
  %v3856 = vld [vmem:[%s25 + $0x230] sm:$0xff]
  %v3857 = vld [vmem:[%s25 + $0x238] sm:$0xff]
  %v3858 = vld [vmem:[%s25 + $0x240] sm:$0xff]
  %v3859 = vld [vmem:[%s25 + $0x248] sm:$0xff]
  %v3860 = vld [vmem:[%s25 + $0x250] sm:$0xff]
  %v3861 = vld [vmem:[%s25 + $0x258] sm:$0xff]
  %v3862 = vld [vmem:[%s25 + $0x260] sm:$0xff]
  %v3863 = vld [vmem:[%s25 + $0x268] sm:$0xff]
  %v3864 = vld [vmem:[%s25 + $0x270] sm:$0xff]
  %v3865 = vld [vmem:[%s25 + $0x278] sm:$0xff]
  %v3866 = vld [vmem:[%s25 + $0x280] sm:$0xff]
  %v3867 = vld [vmem:[%s25 + $0x288] sm:$0xff]
  %v3868 = vld [vmem:[%s25 + $0x290] sm:$0xff]
  %v3869 = vld [vmem:[%s25 + $0x298] sm:$0xff]
  %v3870 = vld [vmem:[%s25 + $0x2a0] sm:$0xff]
  %v3871 = vld [vmem:[%s25 + $0x2a8] sm:$0xff]
  %v3872 = vld [vmem:[%s25 + $0x2b0] sm:$0xff]
  %v3873 = vld [vmem:[%s25 + $0x2b8] sm:$0xff]
  %v3874 = vld [vmem:[%s25 + $0x2c0] sm:$0xff]
  %v3875 = vld [vmem:[%s25 + $0x2c8] sm:$0xff]
  %v3876 = vld [vmem:[%s25 + $0x2d0] sm:$0xff]
  %v3877 = vld [vmem:[%s25 + $0x2d8] sm:$0xff]
  %v3878 = vld [vmem:[%s25 + $0x2e0] sm:$0xff]
  %v3879 = vld [vmem:[%s25 + $0x2e8] sm:$0xff]
  %v3880 = vld [vmem:[%s25 + $0x2f0] sm:$0xff]
  %v3881 = vld [vmem:[%s25 + $0x2f8] sm:$0xff]
  %v3882 = vld [vmem:[%s25 + $0x300] sm:$0xff]
  %v3883 = vld [vmem:[%s25 + $0x308] sm:$0xff]
  %v3884 = vld [vmem:[%s25 + $0x310] sm:$0xff]
  %v3885 = vld [vmem:[%s25 + $0x318] sm:$0xff]
  %v3886 = vld [vmem:[%s25 + $0x320] sm:$0xff]
  %v3887 = vld [vmem:[%s25 + $0x328] sm:$0xff]
  %v3888 = vld [vmem:[%s25 + $0x330] sm:$0xff]
  %v3889 = vld [vmem:[%s25 + $0x338] sm:$0xff]
  %v3890 = vld [vmem:[%s25 + $0x340] sm:$0xff]
  %v3891 = vld [vmem:[%s25 + $0x348] sm:$0xff]
  %v3892 = vld [vmem:[%s25 + $0x350] sm:$0xff]
  %v3893 = vld [vmem:[%s25 + $0x358] sm:$0xff]
  %v3894 = vld [vmem:[%s25 + $0x360] sm:$0xff]
  %v3895 = vld [vmem:[%s25 + $0x368] sm:$0xff]
  %v3896 = vld [vmem:[%s25 + $0x370] sm:$0xff]
  %v3897 = vld [vmem:[%s25 + $0x378] sm:$0xff]
  %v3898 = vld [vmem:[%s25 + $0x380] sm:$0xff]
  %v3899 = vld [vmem:[%s25 + $0x388] sm:$0xff]
  %v3900 = vld [vmem:[%s25 + $0x390] sm:$0xff]
  %v3901 = vld [vmem:[%s25 + $0x398] sm:$0xff]
  %v3902 = vld [vmem:[%s25 + $0x3a0] sm:$0xff]
  %v3903 = vld [vmem:[%s25 + $0x3a8] sm:$0xff]
  %v3904 = vld [vmem:[%s25 + $0x3b0] sm:$0xff]
  %v3905 = vld [vmem:[%s25 + $0x3b8] sm:$0xff]
  %v3906 = vld [vmem:[%s25 + $0x3c0] sm:$0xff]
  %v3907 = vld [vmem:[%s25 + $0x3c8] sm:$0xff]
  %v3908 = vld [vmem:[%s25 + $0x3d0] sm:$0xff]
  %v3909 = vld [vmem:[%s25 + $0x3d8] sm:$0xff]
  %v3910 = vld [vmem:[%s25 + $0x3e0] sm:$0xff]
  %v3911 = vld [vmem:[%s25 + $0x3e8] sm:$0xff]
  %v3912 = vld [vmem:[%s25 + $0x3f0] sm:$0xff]
  %v3913 = vld [vmem:[%s25 + $0x3f8] sm:$0xff]
  %v3914 = vld [vmem:[#allocation2] sm:$0x1]
  %3915 = vmatpush.msra.mxu0 %v3801
  %3916 = vmatpush.msra.mxu0 %v3800
  %3917 = vmatpush.msra.mxu0 %v3799
  %3918 = vmatpush.msra.mxu0 %v3798
  %3919 = vmatpush.msra.mxu0 %v3797
  %3920 = vmatpush.msra.mxu0 %v3796
  %3921 = vmatpush.msra.mxu0 %v3795
  %3922 = vmatpush.msra.mxu0 %v3794
  %3923 = vmatpush.msra.mxu0 %v3793
  %3924 = vmatpush.msra.mxu0 %v3792
  %3925 = vmatpush.msra.mxu0 %v3791
  %3926 = vmatpush.msra.mxu0 %v3790
  %3927 = vmatpush.msra.mxu0 %v3789
  %3928 = vmatpush.msra.mxu0 %v3788
  %3929 = vmatpush.msra.mxu0 %v3787
  %3930 = vmatpush.msra.mxu0 %v3786
  %3931 = vmatmul.f32.gmra.mxu0 %v3778
  %v3932 = vpop.f32.mrf.mxu0
  %v3933 = vadd.f32 %v3914, %v3932
  %3934 = vdwg.mxu0
  %3935 = vmatpush.msra.mxu0 %v3817
  %3936 = vmatpush.msra.mxu0 %v3816
  %3937 = vmatpush.msra.mxu0 %v3815
  %3938 = vmatpush.msra.mxu0 %v3814
  %3939 = vmatpush.msra.mxu0 %v3813
  %3940 = vmatpush.msra.mxu0 %v3812
  %3941 = vmatpush.msra.mxu0 %v3811
  %3942 = vmatpush.msra.mxu0 %v3810
  %3943 = vmatpush.msra.mxu0 %v3809
  %3944 = vmatpush.msra.mxu0 %v3808
  %3945 = vmatpush.msra.mxu0 %v3807
  %3946 = vmatpush.msra.mxu0 %v3806
  %3947 = vmatpush.msra.mxu0 %v3805
  %3948 = vmatpush.msra.mxu0 %v3804
  %3949 = vmatpush.msra.mxu0 %v3803
  %3950 = vmatpush.msra.mxu0 %v3802
  %3951 = vmatmul.f32.gmra.mxu0 %v3779
  %v3952 = vpop.f32.mrf.mxu0
  %v3953 = vadd.f32 %v3933, %v3952
  %3954 = vdwg.mxu0
  %3955 = vmatpush.msra.mxu0 %v3833
  %3956 = vmatpush.msra.mxu0 %v3832
  %3957 = vmatpush.msra.mxu0 %v3831
  %3958 = vmatpush.msra.mxu0 %v3830
  %3959 = vmatpush.msra.mxu0 %v3829
  %3960 = vmatpush.msra.mxu0 %v3828
  %3961 = vmatpush.msra.mxu0 %v3827
  %3962 = vmatpush.msra.mxu0 %v3826
  %3963 = vmatpush.msra.mxu0 %v3825
  %3964 = vmatpush.msra.mxu0 %v3824
  %3965 = vmatpush.msra.mxu0 %v3823
  %3966 = vmatpush.msra.mxu0 %v3822
  %3967 = vmatpush.msra.mxu0 %v3821
  %3968 = vmatpush.msra.mxu0 %v3820
  %3969 = vmatpush.msra.mxu0 %v3819
  %3970 = vmatpush.msra.mxu0 %v3818
  %3971 = vmatmul.f32.gmra.mxu0 %v3780
  %v3972 = vpop.f32.mrf.mxu0
  %v3973 = vadd.f32 %v3953, %v3972
  %3974 = vdwg.mxu0
  %3975 = vmatpush.msra.mxu0 %v3849
  %3976 = vmatpush.msra.mxu0 %v3848
  %3977 = vmatpush.msra.mxu0 %v3847
  %3978 = vmatpush.msra.mxu0 %v3846
  %3979 = vmatpush.msra.mxu0 %v3845
  %3980 = vmatpush.msra.mxu0 %v3844
  %3981 = vmatpush.msra.mxu0 %v3843
  %3982 = vmatpush.msra.mxu0 %v3842
  %3983 = vmatpush.msra.mxu0 %v3841
  %3984 = vmatpush.msra.mxu0 %v3840
  %3985 = vmatpush.msra.mxu0 %v3839
  %3986 = vmatpush.msra.mxu0 %v3838
  %3987 = vmatpush.msra.mxu0 %v3837
  %3988 = vmatpush.msra.mxu0 %v3836
  %3989 = vmatpush.msra.mxu0 %v3835
  %3990 = vmatpush.msra.mxu0 %v3834
  %3991 = vmatmul.f32.gmra.mxu0 %v3781
  %v3992 = vpop.f32.mrf.mxu0
  %v3993 = vadd.f32 %v3973, %v3992
  %3994 = vdwg.mxu0
  %3995 = vmatpush.msra.mxu0 %v3865
  %3996 = vmatpush.msra.mxu0 %v3864
  %3997 = vmatpush.msra.mxu0 %v3863
  %3998 = vmatpush.msra.mxu0 %v3862
  %3999 = vmatpush.msra.mxu0 %v3861
  %4000 = vmatpush.msra.mxu0 %v3860
  %4001 = vmatpush.msra.mxu0 %v3859
  %4002 = vmatpush.msra.mxu0 %v3858
  %4003 = vmatpush.msra.mxu0 %v3857
  %4004 = vmatpush.msra.mxu0 %v3856
  %4005 = vmatpush.msra.mxu0 %v3855
  %4006 = vmatpush.msra.mxu0 %v3854
  %4007 = vmatpush.msra.mxu0 %v3853
  %4008 = vmatpush.msra.mxu0 %v3852
  %4009 = vmatpush.msra.mxu0 %v3851
  %4010 = vmatpush.msra.mxu0 %v3850
  %4011 = vmatmul.f32.gmra.mxu0 %v3782
  %v4012 = vpop.f32.mrf.mxu0
  %v4013 = vadd.f32 %v3993, %v4012
  %4014 = vdwg.mxu0
  %4015 = vmatpush.msra.mxu0 %v3881
  %4016 = vmatpush.msra.mxu0 %v3880
  %4017 = vmatpush.msra.mxu0 %v3879
  %4018 = vmatpush.msra.mxu0 %v3878
  %4019 = vmatpush.msra.mxu0 %v3877
  %4020 = vmatpush.msra.mxu0 %v3876
  %4021 = vmatpush.msra.mxu0 %v3875
  %4022 = vmatpush.msra.mxu0 %v3874
  %4023 = vmatpush.msra.mxu0 %v3873
  %4024 = vmatpush.msra.mxu0 %v3872
  %4025 = vmatpush.msra.mxu0 %v3871
  %4026 = vmatpush.msra.mxu0 %v3870
  %4027 = vmatpush.msra.mxu0 %v3869
  %4028 = vmatpush.msra.mxu0 %v3868
  %4029 = vmatpush.msra.mxu0 %v3867
  %4030 = vmatpush.msra.mxu0 %v3866
  %4031 = vmatmul.f32.gmra.mxu0 %v3783
  %v4032 = vpop.f32.mrf.mxu0
  %v4033 = vadd.f32 %v4013, %v4032
  %4034 = vdwg.mxu0
  %4035 = vmatpush.msra.mxu0 %v3897
  %4036 = vmatpush.msra.mxu0 %v3896
  %4037 = vmatpush.msra.mxu0 %v3895
  %4038 = vmatpush.msra.mxu0 %v3894
  %4039 = vmatpush.msra.mxu0 %v3893
  %4040 = vmatpush.msra.mxu0 %v3892
  %4041 = vmatpush.msra.mxu0 %v3891
  %4042 = vmatpush.msra.mxu0 %v3890
  %4043 = vmatpush.msra.mxu0 %v3889
  %4044 = vmatpush.msra.mxu0 %v3888
  %4045 = vmatpush.msra.mxu0 %v3887
  %4046 = vmatpush.msra.mxu0 %v3886
  %4047 = vmatpush.msra.mxu0 %v3885
  %4048 = vmatpush.msra.mxu0 %v3884
  %4049 = vmatpush.msra.mxu0 %v3883
  %4050 = vmatpush.msra.mxu0 %v3882
  %4051 = vmatmul.f32.gmra.mxu0 %v3784
  %v4052 = vpop.f32.mrf.mxu0
  %v4053 = vadd.f32 %v4033, %v4052
  %4054 = vdwg.mxu0
  %4055 = vmatpush.msra.mxu0 %v3913
  %4056 = vmatpush.msra.mxu0 %v3912
  %4057 = vmatpush.msra.mxu0 %v3911
  %4058 = vmatpush.msra.mxu0 %v3910
  %4059 = vmatpush.msra.mxu0 %v3909
  %4060 = vmatpush.msra.mxu0 %v3908
  %4061 = vmatpush.msra.mxu0 %v3907
  %4062 = vmatpush.msra.mxu0 %v3906
  %4063 = vmatpush.msra.mxu0 %v3905
  %4064 = vmatpush.msra.mxu0 %v3904
  %4065 = vmatpush.msra.mxu0 %v3903
  %4066 = vmatpush.msra.mxu0 %v3902
  %4067 = vmatpush.msra.mxu0 %v3901
  %4068 = vmatpush.msra.mxu0 %v3900
  %4069 = vmatpush.msra.mxu0 %v3899
  %4070 = vmatpush.msra.mxu0 %v3898
  %4071 = vmatmul.f32.gmra.mxu0 %v3785
  %v4072 = vpop.f32.mrf.mxu0
  %v4073 = vadd.f32 %v4053, %v4072
  %4074 = vdwg.mxu0
  %v4075 = vxor.u32 %v4073, 2147483648
  %v4076 = vmul.f32 %v4075, 1.442695
  %v4077 = vpow.pop %v4076
  %v4078 = vadd.f32 %v4077, 1.0
  %v4079 = vrcp.pop %v4078
  %v4080 = vmul.f32 %v4078, %v4079
  %v4081 = vsub.f32 1.0, %v4080
  %v4082 = vmul.f32 %v4079, %v4081
  %v4083 = vadd.f32 %v4079, %v4082
  %vm4084 = vweird.f32 %v4078
  %vm4085 = vweird.f32 %v4079
  %vm4086 = vmor %vm4084, %vm4085
  %v4087 = vsel %vm4086, %v4079, %v4083
  %v4088 = vand.u32 2147483647, %v4078
  %vm4089 = vcmp.eq.f32.partialorder %v4088, 8.507059e+37
  %v4090 = vand.u32 %v4078, 2147483648
  %v4091 = vor.u32 1.1754944e-38, %v4090
  %v4092 = vsel %vm4089, %v4091, %v4087
  %v4093 = vmul.f32 1.0, %v4092
  %vm4094 = vcmask 0
  %4095 = vst.msk [vmem:[%s27] sm:$0x1] %vm4094, %v4093
  %v4096 = vrot.slane %v3346, 3
  %4097 = vst [vmem:[#allocation1] ss:$2 sm:$0xff] %v3347
  %s4098 = scalar_lea.vmem [#allocation1], 16
  %4099 = vst [vmem:[%s4098] ss:$2 sm:$0xff] %v3348
  %s4100 = scalar_lea.vmem [#allocation1], 32
  %4101 = vst [vmem:[%s4100] ss:$2 sm:$0xff] %v3349
  %s4102 = scalar_lea.vmem [#allocation1], 48
  %4103 = vst [vmem:[%s4102] ss:$2 sm:$0xff] %v3350
  %v4104 = vld.sshfl [vmem:[#allocation1] sm:$0xff pattern:$0x75316420]
  %v4105 = vld.sshfl [vmem:[#allocation1 + $0x8] sm:$0xff pattern:$0x75316420]
  %v4106 = vld.sshfl [vmem:[#allocation1 + $0x10] sm:$0xff pattern:$0x75316420]
  %v4107 = vld.sshfl [vmem:[#allocation1 + $0x18] sm:$0xff pattern:$0x75316420]
  %v4108 = vld.sshfl [vmem:[#allocation1 + $0x20] sm:$0xff pattern:$0x75316420]
  %v4109 = vld.sshfl [vmem:[#allocation1 + $0x28] sm:$0xff pattern:$0x75316420]
  %v4110 = vld.sshfl [vmem:[#allocation1 + $0x30] sm:$0xff pattern:$0x75316420]
  %v4111 = vld.sshfl [vmem:[#allocation1 + $0x38] sm:$0xff pattern:$0x75316420]
  %v4112 = vrot.slane %v4104, 2
  %v4113 = vrot.slane %v4105, 2
  %v4114 = vrot.slane %v4106, 2
  %v4115 = vrot.slane %v4107, 2
  %v4116 = vrot.slane %v4108, 2
  %v4117 = vrot.slane %v4109, 2
  %v4118 = vrot.slane %v4110, 2
  %v4119 = vrot.slane %v4111, 2
  %v4120 = vsel %vm3380, %v4096, 0
  %v4122 = vsel %vm2414, %v4112, 0
  %v4124 = vsel %vm2414, %v4113, 0
  %v4126 = vsel %vm2414, %v4114, 0
  %v4128 = vsel %vm2414, %v4115, 0
  %v4130 = vsel %vm2414, %v4116, 0
  %v4132 = vsel %vm2414, %v4117, 0
  %v4134 = vsel %vm2414, %v4118, 0
  %v4136 = vsel %vm2414, %v4119, 0
  %4138 = vmatpush.msra.mxu0 0.0
  %4139 = vmatpush.msra.mxu0 0.0
  %4140 = vmatpush.msra.mxu0 0.0
  %4141 = vmatpush.msra.mxu0 0.0
  %4142 = vmatpush.msra.mxu0 0.0
  %4143 = vmatpush.msra.mxu0 0.0
  %4144 = vmatpush.msra.mxu0 0.0
  %4145 = vmatpush.msra.mxu0 0.0
  %4146 = vmatpush.msra.mxu0 0.0
  %4147 = vmatpush.msra.mxu0 0.0
  %4148 = vmatpush.msra.mxu0 0.0
  %4149 = vmatpush.msra.mxu0 0.0
  %4150 = vmatpush.msra.mxu0 0.0
  %4151 = vmatpush.msra.mxu0 0.0
  %4152 = vmatpush.msra.mxu0 0.0
  %4153 = vmatpush.msra.mxu0 %v4122
  %4154 = vmatmul.f32.gmra.mxu0 %v4120
  %v4155 = vpop.f32.mrf.mxu0
  %v4156 = vadd.f32 0.0, %v4155
  %4157 = vdwg.mxu0
  %4158 = vmatpush.msra.mxu0 0.0
  %4159 = vmatpush.msra.mxu0 0.0
  %4160 = vmatpush.msra.mxu0 0.0
  %4161 = vmatpush.msra.mxu0 0.0
  %4162 = vmatpush.msra.mxu0 0.0
  %4163 = vmatpush.msra.mxu0 0.0
  %4164 = vmatpush.msra.mxu0 0.0
  %4165 = vmatpush.msra.mxu0 0.0
  %4166 = vmatpush.msra.mxu0 0.0
  %4167 = vmatpush.msra.mxu0 0.0
  %4168 = vmatpush.msra.mxu0 0.0
  %4169 = vmatpush.msra.mxu0 0.0
  %4170 = vmatpush.msra.mxu0 0.0
  %4171 = vmatpush.msra.mxu0 0.0
  %4172 = vmatpush.msra.mxu0 0.0
  %4173 = vmatpush.msra.mxu0 %v4124
  %4174 = vmatmul.f32.gmra.mxu0 %v4120
  %v4175 = vpop.f32.mrf.mxu0
  %v4176 = vadd.f32 0.0, %v4175
  %4177 = vdwg.mxu0
  %4178 = vmatpush.msra.mxu0 0.0
  %4179 = vmatpush.msra.mxu0 0.0
  %4180 = vmatpush.msra.mxu0 0.0
  %4181 = vmatpush.msra.mxu0 0.0
  %4182 = vmatpush.msra.mxu0 0.0
  %4183 = vmatpush.msra.mxu0 0.0
  %4184 = vmatpush.msra.mxu0 0.0
  %4185 = vmatpush.msra.mxu0 0.0
  %4186 = vmatpush.msra.mxu0 0.0
  %4187 = vmatpush.msra.mxu0 0.0
  %4188 = vmatpush.msra.mxu0 0.0
  %4189 = vmatpush.msra.mxu0 0.0
  %4190 = vmatpush.msra.mxu0 0.0
  %4191 = vmatpush.msra.mxu0 0.0
  %4192 = vmatpush.msra.mxu0 0.0
  %4193 = vmatpush.msra.mxu0 %v4126
  %4194 = vmatmul.f32.gmra.mxu0 %v4120
  %v4195 = vpop.f32.mrf.mxu0
  %v4196 = vadd.f32 0.0, %v4195
  %4197 = vdwg.mxu0
  %4198 = vmatpush.msra.mxu0 0.0
  %4199 = vmatpush.msra.mxu0 0.0
  %4200 = vmatpush.msra.mxu0 0.0
  %4201 = vmatpush.msra.mxu0 0.0
  %4202 = vmatpush.msra.mxu0 0.0
  %4203 = vmatpush.msra.mxu0 0.0
  %4204 = vmatpush.msra.mxu0 0.0
  %4205 = vmatpush.msra.mxu0 0.0
  %4206 = vmatpush.msra.mxu0 0.0
  %4207 = vmatpush.msra.mxu0 0.0
  %4208 = vmatpush.msra.mxu0 0.0
  %4209 = vmatpush.msra.mxu0 0.0
  %4210 = vmatpush.msra.mxu0 0.0
  %4211 = vmatpush.msra.mxu0 0.0
  %4212 = vmatpush.msra.mxu0 0.0
  %4213 = vmatpush.msra.mxu0 %v4128
  %4214 = vmatmul.f32.gmra.mxu0 %v4120
  %v4215 = vpop.f32.mrf.mxu0
  %v4216 = vadd.f32 0.0, %v4215
  %4217 = vdwg.mxu0
  %4218 = vmatpush.msra.mxu0 0.0
  %4219 = vmatpush.msra.mxu0 0.0
  %4220 = vmatpush.msra.mxu0 0.0
  %4221 = vmatpush.msra.mxu0 0.0
  %4222 = vmatpush.msra.mxu0 0.0
  %4223 = vmatpush.msra.mxu0 0.0
  %4224 = vmatpush.msra.mxu0 0.0
  %4225 = vmatpush.msra.mxu0 0.0
  %4226 = vmatpush.msra.mxu0 0.0
  %4227 = vmatpush.msra.mxu0 0.0
  %4228 = vmatpush.msra.mxu0 0.0
  %4229 = vmatpush.msra.mxu0 0.0
  %4230 = vmatpush.msra.mxu0 0.0
  %4231 = vmatpush.msra.mxu0 0.0
  %4232 = vmatpush.msra.mxu0 0.0
  %4233 = vmatpush.msra.mxu0 %v4130
  %4234 = vmatmul.f32.gmra.mxu0 %v4120
  %v4235 = vpop.f32.mrf.mxu0
  %v4236 = vadd.f32 0.0, %v4235
  %4237 = vdwg.mxu0
  %4238 = vmatpush.msra.mxu0 0.0
  %4239 = vmatpush.msra.mxu0 0.0
  %4240 = vmatpush.msra.mxu0 0.0
  %4241 = vmatpush.msra.mxu0 0.0
  %4242 = vmatpush.msra.mxu0 0.0
  %4243 = vmatpush.msra.mxu0 0.0
  %4244 = vmatpush.msra.mxu0 0.0
  %4245 = vmatpush.msra.mxu0 0.0
  %4246 = vmatpush.msra.mxu0 0.0
  %4247 = vmatpush.msra.mxu0 0.0
  %4248 = vmatpush.msra.mxu0 0.0
  %4249 = vmatpush.msra.mxu0 0.0
  %4250 = vmatpush.msra.mxu0 0.0
  %4251 = vmatpush.msra.mxu0 0.0
  %4252 = vmatpush.msra.mxu0 0.0
  %4253 = vmatpush.msra.mxu0 %v4132
  %4254 = vmatmul.f32.gmra.mxu0 %v4120
  %v4255 = vpop.f32.mrf.mxu0
  %v4256 = vadd.f32 0.0, %v4255
  %4257 = vdwg.mxu0
  %4258 = vmatpush.msra.mxu0 0.0
  %4259 = vmatpush.msra.mxu0 0.0
  %4260 = vmatpush.msra.mxu0 0.0
  %4261 = vmatpush.msra.mxu0 0.0
  %4262 = vmatpush.msra.mxu0 0.0
  %4263 = vmatpush.msra.mxu0 0.0
  %4264 = vmatpush.msra.mxu0 0.0
  %4265 = vmatpush.msra.mxu0 0.0
  %4266 = vmatpush.msra.mxu0 0.0
  %4267 = vmatpush.msra.mxu0 0.0
  %4268 = vmatpush.msra.mxu0 0.0
  %4269 = vmatpush.msra.mxu0 0.0
  %4270 = vmatpush.msra.mxu0 0.0
  %4271 = vmatpush.msra.mxu0 0.0
  %4272 = vmatpush.msra.mxu0 0.0
  %4273 = vmatpush.msra.mxu0 %v4134
  %4274 = vmatmul.f32.gmra.mxu0 %v4120
  %v4275 = vpop.f32.mrf.mxu0
  %v4276 = vadd.f32 0.0, %v4275
  %4277 = vdwg.mxu0
  %4278 = vmatpush.msra.mxu0 0.0
  %4279 = vmatpush.msra.mxu0 0.0
  %4280 = vmatpush.msra.mxu0 0.0
  %4281 = vmatpush.msra.mxu0 0.0
  %4282 = vmatpush.msra.mxu0 0.0
  %4283 = vmatpush.msra.mxu0 0.0
  %4284 = vmatpush.msra.mxu0 0.0
  %4285 = vmatpush.msra.mxu0 0.0
  %4286 = vmatpush.msra.mxu0 0.0
  %4287 = vmatpush.msra.mxu0 0.0
  %4288 = vmatpush.msra.mxu0 0.0
  %4289 = vmatpush.msra.mxu0 0.0
  %4290 = vmatpush.msra.mxu0 0.0
  %4291 = vmatpush.msra.mxu0 0.0
  %4292 = vmatpush.msra.mxu0 0.0
  %4293 = vmatpush.msra.mxu0 %v4136
  %4294 = vmatmul.f32.gmra.mxu0 %v4120
  %v4295 = vpop.f32.mrf.mxu0
  %v4296 = vadd.f32 0.0, %v4295
  %4297 = vdwg.mxu0
  %v4298 = vrot.slane %v3346, 2
  %4299 = vst [vmem:[#allocation1] ss:$2 sm:$0xff] %v3347
  %s4300 = scalar_lea.vmem [#allocation1], 16
  %4301 = vst [vmem:[%s4300] ss:$2 sm:$0xff] %v3348
  %s4302 = scalar_lea.vmem [#allocation1], 32
  %4303 = vst [vmem:[%s4302] ss:$2 sm:$0xff] %v3349
  %s4304 = scalar_lea.vmem [#allocation1], 48
  %4305 = vst [vmem:[%s4304] ss:$2 sm:$0xff] %v3350
  %v4306 = vld.sshfl [vmem:[#allocation1] sm:$0xff pattern:$0x75316420]
  %v4307 = vld.sshfl [vmem:[#allocation1 + $0x8] sm:$0xff pattern:$0x75316420]
  %v4308 = vld.sshfl [vmem:[#allocation1 + $0x10] sm:$0xff pattern:$0x75316420]
  %v4309 = vld.sshfl [vmem:[#allocation1 + $0x18] sm:$0xff pattern:$0x75316420]
  %v4310 = vld.sshfl [vmem:[#allocation1 + $0x20] sm:$0xff pattern:$0x75316420]
  %v4311 = vld.sshfl [vmem:[#allocation1 + $0x28] sm:$0xff pattern:$0x75316420]
  %v4312 = vld.sshfl [vmem:[#allocation1 + $0x30] sm:$0xff pattern:$0x75316420]
  %v4313 = vld.sshfl [vmem:[#allocation1 + $0x38] sm:$0xff pattern:$0x75316420]
  %v4314 = vsel %vm3380, %v4298, 0
  %v4316 = vsel %vm2414, %v4306, 0
  %v4318 = vsel %vm2414, %v4307, 0
  %v4320 = vsel %vm2414, %v4308, 0
  %v4322 = vsel %vm2414, %v4309, 0
  %v4324 = vsel %vm2414, %v4310, 0
  %v4326 = vsel %vm2414, %v4311, 0
  %v4328 = vsel %vm2414, %v4312, 0
  %v4330 = vsel %vm2414, %v4313, 0
  %4332 = vmatpush.msra.mxu0 0.0
  %4333 = vmatpush.msra.mxu0 0.0
  %4334 = vmatpush.msra.mxu0 0.0
  %4335 = vmatpush.msra.mxu0 0.0
  %4336 = vmatpush.msra.mxu0 0.0
  %4337 = vmatpush.msra.mxu0 0.0
  %4338 = vmatpush.msra.mxu0 0.0
  %4339 = vmatpush.msra.mxu0 0.0
  %4340 = vmatpush.msra.mxu0 0.0
  %4341 = vmatpush.msra.mxu0 0.0
  %4342 = vmatpush.msra.mxu0 0.0
  %4343 = vmatpush.msra.mxu0 0.0
  %4344 = vmatpush.msra.mxu0 0.0
  %4345 = vmatpush.msra.mxu0 0.0
  %4346 = vmatpush.msra.mxu0 0.0
  %4347 = vmatpush.msra.mxu0 %v4316
  %4348 = vmatmul.f32.gmra.mxu0 %v4314
  %v4349 = vpop.f32.mrf.mxu0
  %v4350 = vadd.f32 %v4156, %v4349
  %4351 = vdwg.mxu0
  %4352 = vmatpush.msra.mxu0 0.0
  %4353 = vmatpush.msra.mxu0 0.0
  %4354 = vmatpush.msra.mxu0 0.0
  %4355 = vmatpush.msra.mxu0 0.0
  %4356 = vmatpush.msra.mxu0 0.0
  %4357 = vmatpush.msra.mxu0 0.0
  %4358 = vmatpush.msra.mxu0 0.0
  %4359 = vmatpush.msra.mxu0 0.0
  %4360 = vmatpush.msra.mxu0 0.0
  %4361 = vmatpush.msra.mxu0 0.0
  %4362 = vmatpush.msra.mxu0 0.0
  %4363 = vmatpush.msra.mxu0 0.0
  %4364 = vmatpush.msra.mxu0 0.0
  %4365 = vmatpush.msra.mxu0 0.0
  %4366 = vmatpush.msra.mxu0 0.0
  %4367 = vmatpush.msra.mxu0 %v4318
  %4368 = vmatmul.f32.gmra.mxu0 %v4314
  %v4369 = vpop.f32.mrf.mxu0
  %v4370 = vadd.f32 %v4176, %v4369
  %4371 = vdwg.mxu0
  %4372 = vmatpush.msra.mxu0 0.0
  %4373 = vmatpush.msra.mxu0 0.0
  %4374 = vmatpush.msra.mxu0 0.0
  %4375 = vmatpush.msra.mxu0 0.0
  %4376 = vmatpush.msra.mxu0 0.0
  %4377 = vmatpush.msra.mxu0 0.0
  %4378 = vmatpush.msra.mxu0 0.0
  %4379 = vmatpush.msra.mxu0 0.0
  %4380 = vmatpush.msra.mxu0 0.0
  %4381 = vmatpush.msra.mxu0 0.0
  %4382 = vmatpush.msra.mxu0 0.0
  %4383 = vmatpush.msra.mxu0 0.0
  %4384 = vmatpush.msra.mxu0 0.0
  %4385 = vmatpush.msra.mxu0 0.0
  %4386 = vmatpush.msra.mxu0 0.0
  %4387 = vmatpush.msra.mxu0 %v4320
  %4388 = vmatmul.f32.gmra.mxu0 %v4314
  %v4389 = vpop.f32.mrf.mxu0
  %v4390 = vadd.f32 %v4196, %v4389
  %4391 = vdwg.mxu0
  %4392 = vmatpush.msra.mxu0 0.0
  %4393 = vmatpush.msra.mxu0 0.0
  %4394 = vmatpush.msra.mxu0 0.0
  %4395 = vmatpush.msra.mxu0 0.0
  %4396 = vmatpush.msra.mxu0 0.0
  %4397 = vmatpush.msra.mxu0 0.0
  %4398 = vmatpush.msra.mxu0 0.0
  %4399 = vmatpush.msra.mxu0 0.0
  %4400 = vmatpush.msra.mxu0 0.0
  %4401 = vmatpush.msra.mxu0 0.0
  %4402 = vmatpush.msra.mxu0 0.0
  %4403 = vmatpush.msra.mxu0 0.0
  %4404 = vmatpush.msra.mxu0 0.0
  %4405 = vmatpush.msra.mxu0 0.0
  %4406 = vmatpush.msra.mxu0 0.0
  %4407 = vmatpush.msra.mxu0 %v4322
  %4408 = vmatmul.f32.gmra.mxu0 %v4314
  %v4409 = vpop.f32.mrf.mxu0
  %v4410 = vadd.f32 %v4216, %v4409
  %4411 = vdwg.mxu0
  %4412 = vmatpush.msra.mxu0 0.0
  %4413 = vmatpush.msra.mxu0 0.0
  %4414 = vmatpush.msra.mxu0 0.0
  %4415 = vmatpush.msra.mxu0 0.0
  %4416 = vmatpush.msra.mxu0 0.0
  %4417 = vmatpush.msra.mxu0 0.0
  %4418 = vmatpush.msra.mxu0 0.0
  %4419 = vmatpush.msra.mxu0 0.0
  %4420 = vmatpush.msra.mxu0 0.0
  %4421 = vmatpush.msra.mxu0 0.0
  %4422 = vmatpush.msra.mxu0 0.0
  %4423 = vmatpush.msra.mxu0 0.0
  %4424 = vmatpush.msra.mxu0 0.0
  %4425 = vmatpush.msra.mxu0 0.0
  %4426 = vmatpush.msra.mxu0 0.0
  %4427 = vmatpush.msra.mxu0 %v4324
  %4428 = vmatmul.f32.gmra.mxu0 %v4314
  %v4429 = vpop.f32.mrf.mxu0
  %v4430 = vadd.f32 %v4236, %v4429
  %4431 = vdwg.mxu0
  %4432 = vmatpush.msra.mxu0 0.0
  %4433 = vmatpush.msra.mxu0 0.0
  %4434 = vmatpush.msra.mxu0 0.0
  %4435 = vmatpush.msra.mxu0 0.0
  %4436 = vmatpush.msra.mxu0 0.0
  %4437 = vmatpush.msra.mxu0 0.0
  %4438 = vmatpush.msra.mxu0 0.0
  %4439 = vmatpush.msra.mxu0 0.0
  %4440 = vmatpush.msra.mxu0 0.0
  %4441 = vmatpush.msra.mxu0 0.0
  %4442 = vmatpush.msra.mxu0 0.0
  %4443 = vmatpush.msra.mxu0 0.0
  %4444 = vmatpush.msra.mxu0 0.0
  %4445 = vmatpush.msra.mxu0 0.0
  %4446 = vmatpush.msra.mxu0 0.0
  %4447 = vmatpush.msra.mxu0 %v4326
  %4448 = vmatmul.f32.gmra.mxu0 %v4314
  %v4449 = vpop.f32.mrf.mxu0
  %v4450 = vadd.f32 %v4256, %v4449
  %4451 = vdwg.mxu0
  %4452 = vmatpush.msra.mxu0 0.0
  %4453 = vmatpush.msra.mxu0 0.0
  %4454 = vmatpush.msra.mxu0 0.0
  %4455 = vmatpush.msra.mxu0 0.0
  %4456 = vmatpush.msra.mxu0 0.0
  %4457 = vmatpush.msra.mxu0 0.0
  %4458 = vmatpush.msra.mxu0 0.0
  %4459 = vmatpush.msra.mxu0 0.0
  %4460 = vmatpush.msra.mxu0 0.0
  %4461 = vmatpush.msra.mxu0 0.0
  %4462 = vmatpush.msra.mxu0 0.0
  %4463 = vmatpush.msra.mxu0 0.0
  %4464 = vmatpush.msra.mxu0 0.0
  %4465 = vmatpush.msra.mxu0 0.0
  %4466 = vmatpush.msra.mxu0 0.0
  %4467 = vmatpush.msra.mxu0 %v4328
  %4468 = vmatmul.f32.gmra.mxu0 %v4314
  %v4469 = vpop.f32.mrf.mxu0
  %v4470 = vadd.f32 %v4276, %v4469
  %4471 = vdwg.mxu0
  %4472 = vmatpush.msra.mxu0 0.0
  %4473 = vmatpush.msra.mxu0 0.0
  %4474 = vmatpush.msra.mxu0 0.0
  %4475 = vmatpush.msra.mxu0 0.0
  %4476 = vmatpush.msra.mxu0 0.0
  %4477 = vmatpush.msra.mxu0 0.0
  %4478 = vmatpush.msra.mxu0 0.0
  %4479 = vmatpush.msra.mxu0 0.0
  %4480 = vmatpush.msra.mxu0 0.0
  %4481 = vmatpush.msra.mxu0 0.0
  %4482 = vmatpush.msra.mxu0 0.0
  %4483 = vmatpush.msra.mxu0 0.0
  %4484 = vmatpush.msra.mxu0 0.0
  %4485 = vmatpush.msra.mxu0 0.0
  %4486 = vmatpush.msra.mxu0 0.0
  %4487 = vmatpush.msra.mxu0 %v4330
  %4488 = vmatmul.f32.gmra.mxu0 %v4314
  %v4489 = vpop.f32.mrf.mxu0
  %v4490 = vadd.f32 %v4296, %v4489
  %4491 = vdwg.mxu0
  %v4492 = vld [vmem:[%s24] sm:$0xff]
  %v4494 = vperm.slane %v4492, 0
  %v4495 = vperm.slane %v4492, 1
  %v4496 = vperm.slane %v4492, 2
  %v4497 = vperm.slane %v4492, 3
  %v4498 = vperm.slane %v4492, 4
  %v4499 = vperm.slane %v4492, 5
  %v4500 = vperm.slane %v4492, 6
  %v4501 = vperm.slane %v4492, 7
  %v4510 = vadd.f32 %v4350, %v4494
  %v4511 = vadd.f32 %v4370, %v4495
  %v4512 = vadd.f32 %v4390, %v4496
  %v4513 = vadd.f32 %v4410, %v4497
  %v4514 = vadd.f32 %v4430, %v4498
  %v4515 = vadd.f32 %v4450, %v4499
  %v4516 = vadd.f32 %v4470, %v4500
  %v4517 = vadd.f32 %v4490, %v4501
  %v4518 = vtanh.pop %v4510
  %v4519 = vtanh.pop %v4511
  %v4520 = vtanh.pop %v4512
  %v4521 = vtanh.pop %v4513
  %v4522 = vtanh.pop %v4514
  %v4523 = vtanh.pop %v4515
  %v4524 = vtanh.pop %v4516
  %v4525 = vtanh.pop %v4517
  %v4526 = vld [vmem:[%s25] sm:$0xff]
  %v4527 = vld [vmem:[%s25 + $0x8] sm:$0xff]
  %v4528 = vld [vmem:[%s25 + $0x10] sm:$0xff]
  %v4529 = vld [vmem:[%s25 + $0x18] sm:$0xff]
  %v4530 = vld [vmem:[%s25 + $0x20] sm:$0xff]
  %v4531 = vld [vmem:[%s25 + $0x28] sm:$0xff]
  %v4532 = vld [vmem:[%s25 + $0x30] sm:$0xff]
  %v4533 = vld [vmem:[%s25 + $0x38] sm:$0xff]
  %v4534 = vld [vmem:[%s25 + $0x40] sm:$0xff]
  %v4535 = vld [vmem:[%s25 + $0x48] sm:$0xff]
  %v4536 = vld [vmem:[%s25 + $0x50] sm:$0xff]
  %v4537 = vld [vmem:[%s25 + $0x58] sm:$0xff]
  %v4538 = vld [vmem:[%s25 + $0x60] sm:$0xff]
  %v4539 = vld [vmem:[%s25 + $0x68] sm:$0xff]
  %v4540 = vld [vmem:[%s25 + $0x70] sm:$0xff]
  %v4541 = vld [vmem:[%s25 + $0x78] sm:$0xff]
  %v4542 = vld [vmem:[%s25 + $0x80] sm:$0xff]
  %v4543 = vld [vmem:[%s25 + $0x88] sm:$0xff]
  %v4544 = vld [vmem:[%s25 + $0x90] sm:$0xff]
  %v4545 = vld [vmem:[%s25 + $0x98] sm:$0xff]
  %v4546 = vld [vmem:[%s25 + $0xa0] sm:$0xff]
  %v4547 = vld [vmem:[%s25 + $0xa8] sm:$0xff]
  %v4548 = vld [vmem:[%s25 + $0xb0] sm:$0xff]
  %v4549 = vld [vmem:[%s25 + $0xb8] sm:$0xff]
  %v4550 = vld [vmem:[%s25 + $0xc0] sm:$0xff]
  %v4551 = vld [vmem:[%s25 + $0xc8] sm:$0xff]
  %v4552 = vld [vmem:[%s25 + $0xd0] sm:$0xff]
  %v4553 = vld [vmem:[%s25 + $0xd8] sm:$0xff]
  %v4554 = vld [vmem:[%s25 + $0xe0] sm:$0xff]
  %v4555 = vld [vmem:[%s25 + $0xe8] sm:$0xff]
  %v4556 = vld [vmem:[%s25 + $0xf0] sm:$0xff]
  %v4557 = vld [vmem:[%s25 + $0xf8] sm:$0xff]
  %v4558 = vld [vmem:[%s25 + $0x100] sm:$0xff]
  %v4559 = vld [vmem:[%s25 + $0x108] sm:$0xff]
  %v4560 = vld [vmem:[%s25 + $0x110] sm:$0xff]
  %v4561 = vld [vmem:[%s25 + $0x118] sm:$0xff]
  %v4562 = vld [vmem:[%s25 + $0x120] sm:$0xff]
  %v4563 = vld [vmem:[%s25 + $0x128] sm:$0xff]
  %v4564 = vld [vmem:[%s25 + $0x130] sm:$0xff]
  %v4565 = vld [vmem:[%s25 + $0x138] sm:$0xff]
  %v4566 = vld [vmem:[%s25 + $0x140] sm:$0xff]
  %v4567 = vld [vmem:[%s25 + $0x148] sm:$0xff]
  %v4568 = vld [vmem:[%s25 + $0x150] sm:$0xff]
  %v4569 = vld [vmem:[%s25 + $0x158] sm:$0xff]
  %v4570 = vld [vmem:[%s25 + $0x160] sm:$0xff]
  %v4571 = vld [vmem:[%s25 + $0x168] sm:$0xff]
  %v4572 = vld [vmem:[%s25 + $0x170] sm:$0xff]
  %v4573 = vld [vmem:[%s25 + $0x178] sm:$0xff]
  %v4574 = vld [vmem:[%s25 + $0x180] sm:$0xff]
  %v4575 = vld [vmem:[%s25 + $0x188] sm:$0xff]
  %v4576 = vld [vmem:[%s25 + $0x190] sm:$0xff]
  %v4577 = vld [vmem:[%s25 + $0x198] sm:$0xff]
  %v4578 = vld [vmem:[%s25 + $0x1a0] sm:$0xff]
  %v4579 = vld [vmem:[%s25 + $0x1a8] sm:$0xff]
  %v4580 = vld [vmem:[%s25 + $0x1b0] sm:$0xff]
  %v4581 = vld [vmem:[%s25 + $0x1b8] sm:$0xff]
  %v4582 = vld [vmem:[%s25 + $0x1c0] sm:$0xff]
  %v4583 = vld [vmem:[%s25 + $0x1c8] sm:$0xff]
  %v4584 = vld [vmem:[%s25 + $0x1d0] sm:$0xff]
  %v4585 = vld [vmem:[%s25 + $0x1d8] sm:$0xff]
  %v4586 = vld [vmem:[%s25 + $0x1e0] sm:$0xff]
  %v4587 = vld [vmem:[%s25 + $0x1e8] sm:$0xff]
  %v4588 = vld [vmem:[%s25 + $0x1f0] sm:$0xff]
  %v4589 = vld [vmem:[%s25 + $0x1f8] sm:$0xff]
  %v4590 = vld [vmem:[%s25 + $0x200] sm:$0xff]
  %v4591 = vld [vmem:[%s25 + $0x208] sm:$0xff]
  %v4592 = vld [vmem:[%s25 + $0x210] sm:$0xff]
  %v4593 = vld [vmem:[%s25 + $0x218] sm:$0xff]
  %v4594 = vld [vmem:[%s25 + $0x220] sm:$0xff]
  %v4595 = vld [vmem:[%s25 + $0x228] sm:$0xff]
  %v4596 = vld [vmem:[%s25 + $0x230] sm:$0xff]
  %v4597 = vld [vmem:[%s25 + $0x238] sm:$0xff]
  %v4598 = vld [vmem:[%s25 + $0x240] sm:$0xff]
  %v4599 = vld [vmem:[%s25 + $0x248] sm:$0xff]
  %v4600 = vld [vmem:[%s25 + $0x250] sm:$0xff]
  %v4601 = vld [vmem:[%s25 + $0x258] sm:$0xff]
  %v4602 = vld [vmem:[%s25 + $0x260] sm:$0xff]
  %v4603 = vld [vmem:[%s25 + $0x268] sm:$0xff]
  %v4604 = vld [vmem:[%s25 + $0x270] sm:$0xff]
  %v4605 = vld [vmem:[%s25 + $0x278] sm:$0xff]
  %v4606 = vld [vmem:[%s25 + $0x280] sm:$0xff]
  %v4607 = vld [vmem:[%s25 + $0x288] sm:$0xff]
  %v4608 = vld [vmem:[%s25 + $0x290] sm:$0xff]
  %v4609 = vld [vmem:[%s25 + $0x298] sm:$0xff]
  %v4610 = vld [vmem:[%s25 + $0x2a0] sm:$0xff]
  %v4611 = vld [vmem:[%s25 + $0x2a8] sm:$0xff]
  %v4612 = vld [vmem:[%s25 + $0x2b0] sm:$0xff]
  %v4613 = vld [vmem:[%s25 + $0x2b8] sm:$0xff]
  %v4614 = vld [vmem:[%s25 + $0x2c0] sm:$0xff]
  %v4615 = vld [vmem:[%s25 + $0x2c8] sm:$0xff]
  %v4616 = vld [vmem:[%s25 + $0x2d0] sm:$0xff]
  %v4617 = vld [vmem:[%s25 + $0x2d8] sm:$0xff]
  %v4618 = vld [vmem:[%s25 + $0x2e0] sm:$0xff]
  %v4619 = vld [vmem:[%s25 + $0x2e8] sm:$0xff]
  %v4620 = vld [vmem:[%s25 + $0x2f0] sm:$0xff]
  %v4621 = vld [vmem:[%s25 + $0x2f8] sm:$0xff]
  %v4622 = vld [vmem:[%s25 + $0x300] sm:$0xff]
  %v4623 = vld [vmem:[%s25 + $0x308] sm:$0xff]
  %v4624 = vld [vmem:[%s25 + $0x310] sm:$0xff]
  %v4625 = vld [vmem:[%s25 + $0x318] sm:$0xff]
  %v4626 = vld [vmem:[%s25 + $0x320] sm:$0xff]
  %v4627 = vld [vmem:[%s25 + $0x328] sm:$0xff]
  %v4628 = vld [vmem:[%s25 + $0x330] sm:$0xff]
  %v4629 = vld [vmem:[%s25 + $0x338] sm:$0xff]
  %v4630 = vld [vmem:[%s25 + $0x340] sm:$0xff]
  %v4631 = vld [vmem:[%s25 + $0x348] sm:$0xff]
  %v4632 = vld [vmem:[%s25 + $0x350] sm:$0xff]
  %v4633 = vld [vmem:[%s25 + $0x358] sm:$0xff]
  %v4634 = vld [vmem:[%s25 + $0x360] sm:$0xff]
  %v4635 = vld [vmem:[%s25 + $0x368] sm:$0xff]
  %v4636 = vld [vmem:[%s25 + $0x370] sm:$0xff]
  %v4637 = vld [vmem:[%s25 + $0x378] sm:$0xff]
  %v4638 = vld [vmem:[%s25 + $0x380] sm:$0xff]
  %v4639 = vld [vmem:[%s25 + $0x388] sm:$0xff]
  %v4640 = vld [vmem:[%s25 + $0x390] sm:$0xff]
  %v4641 = vld [vmem:[%s25 + $0x398] sm:$0xff]
  %v4642 = vld [vmem:[%s25 + $0x3a0] sm:$0xff]
  %v4643 = vld [vmem:[%s25 + $0x3a8] sm:$0xff]
  %v4644 = vld [vmem:[%s25 + $0x3b0] sm:$0xff]
  %v4645 = vld [vmem:[%s25 + $0x3b8] sm:$0xff]
  %v4646 = vld [vmem:[%s25 + $0x3c0] sm:$0xff]
  %v4647 = vld [vmem:[%s25 + $0x3c8] sm:$0xff]
  %v4648 = vld [vmem:[%s25 + $0x3d0] sm:$0xff]
  %v4649 = vld [vmem:[%s25 + $0x3d8] sm:$0xff]
  %v4650 = vld [vmem:[%s25 + $0x3e0] sm:$0xff]
  %v4651 = vld [vmem:[%s25 + $0x3e8] sm:$0xff]
  %v4652 = vld [vmem:[%s25 + $0x3f0] sm:$0xff]
  %v4653 = vld [vmem:[%s25 + $0x3f8] sm:$0xff]
  %v4654 = vld [vmem:[#allocation2] sm:$0x1]
  %4655 = vmatpush.msra.mxu0 %v4541
  %4656 = vmatpush.msra.mxu0 %v4540
  %4657 = vmatpush.msra.mxu0 %v4539
  %4658 = vmatpush.msra.mxu0 %v4538
  %4659 = vmatpush.msra.mxu0 %v4537
  %4660 = vmatpush.msra.mxu0 %v4536
  %4661 = vmatpush.msra.mxu0 %v4535
  %4662 = vmatpush.msra.mxu0 %v4534
  %4663 = vmatpush.msra.mxu0 %v4533
  %4664 = vmatpush.msra.mxu0 %v4532
  %4665 = vmatpush.msra.mxu0 %v4531
  %4666 = vmatpush.msra.mxu0 %v4530
  %4667 = vmatpush.msra.mxu0 %v4529
  %4668 = vmatpush.msra.mxu0 %v4528
  %4669 = vmatpush.msra.mxu0 %v4527
  %4670 = vmatpush.msra.mxu0 %v4526
  %4671 = vmatmul.f32.gmra.mxu0 %v4518
  %v4672 = vpop.f32.mrf.mxu0
  %v4673 = vadd.f32 %v4654, %v4672
  %4674 = vdwg.mxu0
  %4675 = vmatpush.msra.mxu0 %v4557
  %4676 = vmatpush.msra.mxu0 %v4556
  %4677 = vmatpush.msra.mxu0 %v4555
  %4678 = vmatpush.msra.mxu0 %v4554
  %4679 = vmatpush.msra.mxu0 %v4553
  %4680 = vmatpush.msra.mxu0 %v4552
  %4681 = vmatpush.msra.mxu0 %v4551
  %4682 = vmatpush.msra.mxu0 %v4550
  %4683 = vmatpush.msra.mxu0 %v4549
  %4684 = vmatpush.msra.mxu0 %v4548
  %4685 = vmatpush.msra.mxu0 %v4547
  %4686 = vmatpush.msra.mxu0 %v4546
  %4687 = vmatpush.msra.mxu0 %v4545
  %4688 = vmatpush.msra.mxu0 %v4544
  %4689 = vmatpush.msra.mxu0 %v4543
  %4690 = vmatpush.msra.mxu0 %v4542
  %4691 = vmatmul.f32.gmra.mxu0 %v4519
  %v4692 = vpop.f32.mrf.mxu0
  %v4693 = vadd.f32 %v4673, %v4692
  %4694 = vdwg.mxu0
  %4695 = vmatpush.msra.mxu0 %v4573
  %4696 = vmatpush.msra.mxu0 %v4572
  %4697 = vmatpush.msra.mxu0 %v4571
  %4698 = vmatpush.msra.mxu0 %v4570
  %4699 = vmatpush.msra.mxu0 %v4569
  %4700 = vmatpush.msra.mxu0 %v4568
  %4701 = vmatpush.msra.mxu0 %v4567
  %4702 = vmatpush.msra.mxu0 %v4566
  %4703 = vmatpush.msra.mxu0 %v4565
  %4704 = vmatpush.msra.mxu0 %v4564
  %4705 = vmatpush.msra.mxu0 %v4563
  %4706 = vmatpush.msra.mxu0 %v4562
  %4707 = vmatpush.msra.mxu0 %v4561
  %4708 = vmatpush.msra.mxu0 %v4560
  %4709 = vmatpush.msra.mxu0 %v4559
  %4710 = vmatpush.msra.mxu0 %v4558
  %4711 = vmatmul.f32.gmra.mxu0 %v4520
  %v4712 = vpop.f32.mrf.mxu0
  %v4713 = vadd.f32 %v4693, %v4712
  %4714 = vdwg.mxu0
  %4715 = vmatpush.msra.mxu0 %v4589
  %4716 = vmatpush.msra.mxu0 %v4588
  %4717 = vmatpush.msra.mxu0 %v4587
  %4718 = vmatpush.msra.mxu0 %v4586
  %4719 = vmatpush.msra.mxu0 %v4585
  %4720 = vmatpush.msra.mxu0 %v4584
  %4721 = vmatpush.msra.mxu0 %v4583
  %4722 = vmatpush.msra.mxu0 %v4582
  %4723 = vmatpush.msra.mxu0 %v4581
  %4724 = vmatpush.msra.mxu0 %v4580
  %4725 = vmatpush.msra.mxu0 %v4579
  %4726 = vmatpush.msra.mxu0 %v4578
  %4727 = vmatpush.msra.mxu0 %v4577
  %4728 = vmatpush.msra.mxu0 %v4576
  %4729 = vmatpush.msra.mxu0 %v4575
  %4730 = vmatpush.msra.mxu0 %v4574
  %4731 = vmatmul.f32.gmra.mxu0 %v4521
  %v4732 = vpop.f32.mrf.mxu0
  %v4733 = vadd.f32 %v4713, %v4732
  %4734 = vdwg.mxu0
  %4735 = vmatpush.msra.mxu0 %v4605
  %4736 = vmatpush.msra.mxu0 %v4604
  %4737 = vmatpush.msra.mxu0 %v4603
  %4738 = vmatpush.msra.mxu0 %v4602
  %4739 = vmatpush.msra.mxu0 %v4601
  %4740 = vmatpush.msra.mxu0 %v4600
  %4741 = vmatpush.msra.mxu0 %v4599
  %4742 = vmatpush.msra.mxu0 %v4598
  %4743 = vmatpush.msra.mxu0 %v4597
  %4744 = vmatpush.msra.mxu0 %v4596
  %4745 = vmatpush.msra.mxu0 %v4595
  %4746 = vmatpush.msra.mxu0 %v4594
  %4747 = vmatpush.msra.mxu0 %v4593
  %4748 = vmatpush.msra.mxu0 %v4592
  %4749 = vmatpush.msra.mxu0 %v4591
  %4750 = vmatpush.msra.mxu0 %v4590
  %4751 = vmatmul.f32.gmra.mxu0 %v4522
  %v4752 = vpop.f32.mrf.mxu0
  %v4753 = vadd.f32 %v4733, %v4752
  %4754 = vdwg.mxu0
  %4755 = vmatpush.msra.mxu0 %v4621
  %4756 = vmatpush.msra.mxu0 %v4620
  %4757 = vmatpush.msra.mxu0 %v4619
  %4758 = vmatpush.msra.mxu0 %v4618
  %4759 = vmatpush.msra.mxu0 %v4617
  %4760 = vmatpush.msra.mxu0 %v4616
  %4761 = vmatpush.msra.mxu0 %v4615
  %4762 = vmatpush.msra.mxu0 %v4614
  %4763 = vmatpush.msra.mxu0 %v4613
  %4764 = vmatpush.msra.mxu0 %v4612
  %4765 = vmatpush.msra.mxu0 %v4611
  %4766 = vmatpush.msra.mxu0 %v4610
  %4767 = vmatpush.msra.mxu0 %v4609
  %4768 = vmatpush.msra.mxu0 %v4608
  %4769 = vmatpush.msra.mxu0 %v4607
  %4770 = vmatpush.msra.mxu0 %v4606
  %4771 = vmatmul.f32.gmra.mxu0 %v4523
  %v4772 = vpop.f32.mrf.mxu0
  %v4773 = vadd.f32 %v4753, %v4772
  %4774 = vdwg.mxu0
  %4775 = vmatpush.msra.mxu0 %v4637
  %4776 = vmatpush.msra.mxu0 %v4636
  %4777 = vmatpush.msra.mxu0 %v4635
  %4778 = vmatpush.msra.mxu0 %v4634
  %4779 = vmatpush.msra.mxu0 %v4633
  %4780 = vmatpush.msra.mxu0 %v4632
  %4781 = vmatpush.msra.mxu0 %v4631
  %4782 = vmatpush.msra.mxu0 %v4630
  %4783 = vmatpush.msra.mxu0 %v4629
  %4784 = vmatpush.msra.mxu0 %v4628
  %4785 = vmatpush.msra.mxu0 %v4627
  %4786 = vmatpush.msra.mxu0 %v4626
  %4787 = vmatpush.msra.mxu0 %v4625
  %4788 = vmatpush.msra.mxu0 %v4624
  %4789 = vmatpush.msra.mxu0 %v4623
  %4790 = vmatpush.msra.mxu0 %v4622
  %4791 = vmatmul.f32.gmra.mxu0 %v4524
  %v4792 = vpop.f32.mrf.mxu0
  %v4793 = vadd.f32 %v4773, %v4792
  %4794 = vdwg.mxu0
  %4795 = vmatpush.msra.mxu0 %v4653
  %4796 = vmatpush.msra.mxu0 %v4652
  %4797 = vmatpush.msra.mxu0 %v4651
  %4798 = vmatpush.msra.mxu0 %v4650
  %4799 = vmatpush.msra.mxu0 %v4649
  %4800 = vmatpush.msra.mxu0 %v4648
  %4801 = vmatpush.msra.mxu0 %v4647
  %4802 = vmatpush.msra.mxu0 %v4646
  %4803 = vmatpush.msra.mxu0 %v4645
  %4804 = vmatpush.msra.mxu0 %v4644
  %4805 = vmatpush.msra.mxu0 %v4643
  %4806 = vmatpush.msra.mxu0 %v4642
  %4807 = vmatpush.msra.mxu0 %v4641
  %4808 = vmatpush.msra.mxu0 %v4640
  %4809 = vmatpush.msra.mxu0 %v4639
  %4810 = vmatpush.msra.mxu0 %v4638
  %4811 = vmatmul.f32.gmra.mxu0 %v4525
  %v4812 = vpop.f32.mrf.mxu0
  %v4813 = vadd.f32 %v4793, %v4812
  %4814 = vdwg.mxu0
  %v4815 = vxor.u32 %v4813, 2147483648
  %v4816 = vmul.f32 %v4815, 1.442695
  %v4817 = vpow.pop %v4816
  %v4818 = vadd.f32 %v4817, 1.0
  %v4819 = vrcp.pop %v4818
  %v4820 = vmul.f32 %v4818, %v4819
  %v4821 = vsub.f32 1.0, %v4820
  %v4822 = vmul.f32 %v4819, %v4821
  %v4823 = vadd.f32 %v4819, %v4822
  %vm4824 = vweird.f32 %v4818
  %vm4825 = vweird.f32 %v4819
  %vm4826 = vmor %vm4824, %vm4825
  %v4827 = vsel %vm4826, %v4819, %v4823
  %v4828 = vand.u32 2147483647, %v4818
  %vm4829 = vcmp.eq.f32.partialorder %v4828, 8.507059e+37
  %v4830 = vand.u32 %v4818, 2147483648
  %v4831 = vor.u32 1.1754944e-38, %v4830
  %v4832 = vsel %vm4829, %v4831, %v4827
  %v4833 = vmul.f32 1.0, %v4832
  %4834 = vst.msk [vmem:[%s27 + $0x1] sm:$0x1] %vm4094, %v4833
  // Predicated region
  $region110: #{discriminator_forward.1} parent=0 // pred_check
    _
  $region111: #{discriminator_forward.1} parent=0 // pred_check_branch
    %4836 = sbr.rel (0) target = $region113
  $region112: #{discriminator_forward.1} parent=0 // pred_region
    _
  $region113: #{discriminator_forward.1} parent=0 // pred_fallthru
    _
  // Predicated region
  $region114: #{discriminator_forward.1} parent=0 // pred_check
    _
  $region115: #{discriminator_forward.1} parent=0 // pred_check_branch
    %4838 = sbr.rel (0) target = $region117
  $region116: #{discriminator_forward.1} parent=0 // pred_region
    _
  $region117: #{discriminator_forward.1} parent=0 // pred_fallthru
    _

</llo_original>
